<compile_context>
chip_gen: v7x
topology: tpu7x:2x2x1
jax: 0.10.0
libtpu: 0.0.40
codegen_flags: <defaults>
</compile_context>

<pallas_src>
import functools
import math

import jax
import jax.numpy as jnp
from jax.experimental import pallas as pl
from jax.experimental.pallas import tpu as pltpu


_VMEM = pl.BlockSpec(memory_space=pltpu.MemorySpace.VMEM)
_LOGIT_PAD = 128   # lane-dense classifier output width


# ----------------------------- in-kernel helpers ----------------------------

def _ln(x, g, b, eps):
    mu = jnp.mean(x, axis=-1, keepdims=True)
    xc = x - mu
    var = jnp.mean(xc * xc, axis=-1, keepdims=True)
    return xc * jax.lax.rsqrt(var + eps) * g + b


def _gelu(x):
    # TODO(synk): HF BERT uses exact erf-GELU; tanh approximation used here
    # for guaranteed Mosaic lowering (numerically very close).
    return 0.5 * x * (1.0 + jnp.tanh(0.7978845608028654 * (x + 0.044715 * x * x * x)))


# ------------------------------- fused kernel --------------------------------

def _bert_forward_kernel(*refs, num_layers, batch, seq, num_heads, head_dim,
                         hidden, inter, eps):
    """Whole BERT forward: embedding-LN -> N encoder layers -> pooler ->
    classifier, fully VMEM resident, single invocation."""
    n_in = 2 + 5 * num_layers + 3
    x_ref, mask_ref = refs[0], refs[1]
    layer_refs = refs[2:2 + 5 * num_layers]
    wp_ref, wc_ref, hv_ref = refs[2 + 5 * num_layers:n_in]
    o_ref = refs[n_in]          # (B, 128) padded logits
    ctx_ref = refs[n_in + 1]    # (B*S, H) f32 scratch for attention context

    hv = hv_ref[...]            # packed: emb_ln_g | emb_ln_b | bp | bc(padded)
    mask3 = mask_ref[...]       # (B, S, S) additive attention mask, f32

    # --- embedding LayerNorm ---
    x = _ln(x_ref[...], hv[0:1, :hidden], hv[1:2, :hidden], eps)

    hid = num_heads * head_dim

    for li in range(num_layers):
        wqkv_ref, wo_ref, w1_ref, w2_ref, vec_ref = layer_refs[5 * li:5 * li + 5]
        vec = vec_ref[...]      # packed per-layer bias / LayerNorm vectors
        bqkv = vec[0:1, :3 * hid]
        bo = vec[1:2, :hidden]
        ln1_g, ln1_b = vec[2:3, :hidden], vec[3:4, :hidden]
        b1 = vec[4:5, :inter]
        b2 = vec[5:6, :hidden]
        ln2_g, ln2_b = vec[6:7, :hidden], vec[7:8, :hidden]

        # --- fused QKV projection: one wide bf16 matmul, f32 accumulate ---
        # (attention scale 1/sqrt(head_dim) folded into the Q columns/bias)
        qkv = jnp.dot(x.astype(jnp.bfloat16), wqkv_ref[...],
                      preferred_element_type=jnp.float32) + bqkv

        # --- batched multi-head attention (einsum over batch, bf16 MXU) ---
        q = qkv[:, :hid].reshape(batch, seq, hid).astype(jnp.bfloat16)
        k = qkv[:, hid:2 * hid].reshape(batch, seq, hid).astype(jnp.bfloat16)
        v = qkv[:, 2 * hid:].reshape(batch, seq, hid).astype(jnp.bfloat16)
        for hi in range(num_heads):
            c0 = hi * head_dim
            qh = q[:, :, c0:c0 + head_dim]                  # (B, S, hd)
            kh = k[:, :, c0:c0 + head_dim]
            vh = v[:, :, c0:c0 + head_dim]
            s = jnp.einsum('bqd,bkd->bqk', qh, kh,
                           preferred_element_type=jnp.float32)   # (B, S, S)
            s = s + mask3
            s = s - jnp.max(s, axis=-1, keepdims=True)
            p = jnp.exp(s)
            p = p * pl.reciprocal(jnp.sum(p, axis=-1, keepdims=True), approx=True)
            ctx_h = jnp.einsum('bqk,bkd->bqd', p.astype(jnp.bfloat16), vh,
                               preferred_element_type=jnp.float32)
            ctx_ref[:, c0:c0 + head_dim] = ctx_h.reshape(batch * seq, head_dim)

        # --- attention output projection + residual + LayerNorm ---
        attn = jnp.dot(ctx_ref[...].astype(jnp.bfloat16), wo_ref[...],
                       preferred_element_type=jnp.float32) + bo
        x1 = _ln(attn + x, ln1_g, ln1_b, eps)

        # --- FFN (GELU) + residual + LayerNorm ---
        ffh = _gelu(jnp.dot(x1.astype(jnp.bfloat16), w1_ref[...],
                            preferred_element_type=jnp.float32) + b1)
        ffn = jnp.dot(ffh.astype(jnp.bfloat16), w2_ref[...],
                      preferred_element_type=jnp.float32) + b2
        x = _ln(ffn + x1, ln2_g, ln2_b, eps)

    # --- pooler (tanh on [CLS]) + classifier; lane-dense padded logits ---
    cls = x.reshape(batch, seq, hidden)[:, 0:1, :].reshape(batch, hidden)
    pooled = jnp.tanh(jnp.dot(cls.astype(jnp.bfloat16), wp_ref[...],
                              preferred_element_type=jnp.float32)
                      + hv[2:3, :hidden])
    o_ref[...] = (jnp.dot(pooled.astype(jnp.bfloat16), wc_ref[...],
                          preferred_element_type=jnp.float32)
                  + hv[3:4, :o_ref.shape[-1]])


def _fused_forward(x, mask3, prep, cfg):
    """Single pallas_call for the whole BERT forward."""
    b, s = mask3.shape[0], mask3.shape[1]
    args = [x, mask3]
    for lw in prep["layers"]:
        args += [lw["wqkv"], lw["wo"], lw["w1"], lw["w2"], lw["vec"]]
    args += [prep["wp"], prep["wc"], prep["head_vec"]]

    kernel = functools.partial(
        _bert_forward_kernel,
        num_layers=len(prep["layers"]), batch=b, seq=s,
        num_heads=cfg["num_heads"], head_dim=cfg["head_dim"],
        hidden=cfg["hidden"], inter=cfg["intermediate"], eps=1e-12)

    return pl.pallas_call(
        kernel,
        out_shape=jax.ShapeDtypeStruct((b, _LOGIT_PAD), jnp.float32),
        in_specs=[_VMEM] * len(args),
        out_specs=_VMEM,
        scratch_shapes=[pltpu.VMEM((b * s, cfg["hidden"]), jnp.float32)],
    )(*args)


# ------------------------------ model definition -----------------------------

CFG = dict(
    vocab_size=100,
    hidden=128,
    num_layers=2,
    num_heads=4,
    head_dim=32,
    intermediate=256,
    max_pos=16,
    type_vocab=2,
    num_labels=2,
)


def init_params(key, cfg):
    h, inter = cfg["hidden"], cfg["intermediate"]
    std = 0.02
    params = {}
    keys = iter(jax.random.split(key, 64))

    def w(shape):
        return jax.random.normal(next(keys), shape, jnp.float32) * std

    params["word_emb"] = w((cfg["vocab_size"], h))
    params["pos_emb"] = w((cfg["max_pos"], h))
    params["type_emb"] = w((cfg["type_vocab"], h))
    params["emb_ln_g"] = jnp.ones((h,), jnp.float32)
    params["emb_ln_b"] = jnp.zeros((h,), jnp.float32)

    layers = []
    for _ in range(cfg["num_layers"]):
        layers.append(dict(
            wq=w((h, h)), bq=jnp.zeros((h,), jnp.float32),
            wk=w((h, h)), bk=jnp.zeros((h,), jnp.float32),
            wv=w((h, h)), bv=jnp.zeros((h,), jnp.float32),
            wo=w((h, h)), bo=jnp.zeros((h,), jnp.float32),
            ln1_g=jnp.ones((h,), jnp.float32), ln1_b=jnp.zeros((h,), jnp.float32),
            w1=w((h, inter)), b1=jnp.zeros((inter,), jnp.float32),
            w2=w((inter, h)), b2=jnp.zeros((h,), jnp.float32),
            ln2_g=jnp.ones((h,), jnp.float32), ln2_b=jnp.zeros((h,), jnp.float32),
        ))
    params["layers"] = layers

    params["wp"] = w((h, h))
    params["bp"] = jnp.zeros((h,), jnp.float32)
    params["wc"] = w((h, cfg["num_labels"]))
    params["bc"] = jnp.zeros((cfg["num_labels"],), jnp.float32)
    return params


def prepare_params(params, cfg):
    """Fuse Q|K|V, fold attention scale into Q, cast matmul weights to bf16,
    pack the per-layer bias/LN vectors into one array each, pad the classifier
    to a 128-lane output."""
    h, inter, nl = cfg["hidden"], cfg["intermediate"], cfg["num_labels"]
    scale = 1.0 / math.sqrt(cfg["head_dim"])
    vec_w = max(3 * h, inter)

    layers = []
    for lp in params["layers"]:
        wqkv = jnp.concatenate([lp["wq"] * scale, lp["wk"], lp["wv"]], axis=1)
        bqkv = jnp.concatenate([lp["bq"] * scale, lp["bk"], lp["bv"]], axis=0)
        vec = jnp.zeros((8, vec_w), jnp.float32)
        vec = vec.at[0, :3 * h].set(bqkv)
        vec = vec.at[1, :h].set(lp["bo"])
        vec = vec.at[2, :h].set(lp["ln1_g"])
        vec = vec.at[3, :h].set(lp["ln1_b"])
        vec = vec.at[4, :inter].set(lp["b1"])
        vec = vec.at[5, :h].set(lp["b2"])
        vec = vec.at[6, :h].set(lp["ln2_g"])
        vec = vec.at[7, :h].set(lp["ln2_b"])
        layers.append(dict(
            wqkv=wqkv.astype(jnp.bfloat16),
            wo=lp["wo"].astype(jnp.bfloat16),
            w1=lp["w1"].astype(jnp.bfloat16),
            w2=lp["w2"].astype(jnp.bfloat16),
            vec=vec,
        ))

    hv_w = max(h, _LOGIT_PAD)
    hv = jnp.zeros((4, hv_w), jnp.float32)
    hv = hv.at[0, :h].set(params["emb_ln_g"])
    hv = hv.at[1, :h].set(params["emb_ln_b"])
    hv = hv.at[2, :h].set(params["bp"])
    hv = hv.at[3, :nl].set(params["bc"])

    wc_pad = jnp.zeros((h, _LOGIT_PAD), jnp.float32).at[:, :nl].set(params["wc"])

    return dict(
        word_emb=params["word_emb"],
        pos_emb=params["pos_emb"],
        type_emb=params["type_emb"],
        layers=layers,
        wp=params["wp"].astype(jnp.bfloat16),
        wc=wc_pad.astype(jnp.bfloat16),
        head_vec=hv,
    )


def bert_forward(prep, input_ids, attention_mask, labels, cfg=CFG):
    b, s = input_ids.shape
    h = cfg["hidden"]

    # --- embeddings (gather is plain-JAX glue; everything else is the kernel) ---
    pos_ids = jnp.arange(s)
    emb = (prep["word_emb"][input_ids]
           + prep["pos_emb"][pos_ids][None, :, :]
           + prep["type_emb"][0][None, None, :])
    x = emb.reshape(b * s, h).astype(jnp.float32)

    # additive attention mask, HF style (1 - mask) * -10000, broadcast to (B,S,S)
    ext = (1.0 - attention_mask.astype(jnp.float32)) * -10000.0
    mask3 = jnp.broadcast_to(ext[:, None, :], (b, s, s))

    # --- single fused pallas_call for the whole encoder + head ---
    logits_pad = _fused_forward(x, mask3, prep, cfg)
    logits = logits_pad[:, :cfg["num_labels"]]

    # --- cross-entropy loss (tiny (B, 2) reduction -- plain-JAX glue) ---
    logp = jax.nn.log_softmax(logits, axis=-1)
    loss = -jnp.mean(jnp.take_along_axis(logp, labels[:, None], axis=1))
    return loss, logits


# ----------------------------------- main ------------------------------------

if __name__ == "__main__":
    key = jax.random.PRNGKey(0)
    pkey, ikey, mkey, lkey = jax.random.split(key, 4)

    params = init_params(pkey, CFG)
    prep = prepare_params(params, CFG)

    B, S = 2, 8
    input_ids = jax.random.randint(ikey, (B, S), 0, CFG["vocab_size"], dtype=jnp.int32)
    attention_mask = jnp.ones((B, S), dtype=jnp.int32).at[1, 6:].set(0)  # pad tail of seq 1
    labels = jax.random.randint(lkey, (B,), 0, CFG["num_labels"], dtype=jnp.int32)

    fwd = jax.jit(functools.partial(bert_forward, cfg=CFG))
    loss, logits = fwd(prep, input_ids, attention_mask, labels)
    jax.block_until_ready((loss, logits))

    assert logits.shape == (B, CFG["num_labels"])
    assert loss.shape == ()
    assert bool(jnp.isfinite(loss))
    print("KERNEL_OK")
</pallas_src>

<mosaic_0001>
module attributes {stable_mosaic.version = 11 : i64} {
  func.func @_bert_forward_kernel(%arg0: memref<16x128xf32, #tpu.memory_space<vmem>>, %arg1: memref<2x8x8xf32, #tpu.memory_space<vmem>>, %arg2: memref<128x384xbf16, #tpu.memory_space<vmem>>, %arg3: memref<128x128xbf16, #tpu.memory_space<vmem>>, %arg4: memref<128x256xbf16, #tpu.memory_space<vmem>>, %arg5: memref<256x128xbf16, #tpu.memory_space<vmem>>, %arg6: memref<8x384xf32, #tpu.memory_space<vmem>>, %arg7: memref<128x384xbf16, #tpu.memory_space<vmem>>, %arg8: memref<128x128xbf16, #tpu.memory_space<vmem>>, %arg9: memref<128x256xbf16, #tpu.memory_space<vmem>>, %arg10: memref<256x128xbf16, #tpu.memory_space<vmem>>, %arg11: memref<8x384xf32, #tpu.memory_space<vmem>>, %arg12: memref<128x128xbf16, #tpu.memory_space<vmem>>, %arg13: memref<128x128xbf16, #tpu.memory_space<vmem>>, %arg14: memref<4x128xf32, #tpu.memory_space<vmem>>, %arg15: memref<2x128xf32, #tpu.memory_space<vmem>>, %arg16: memref<16x128xf32, #tpu.memory_space<vmem>>) attributes {dimension_semantics = [], scalar_prefetch = 0 : i64, scratch_operands = 1 : i64, tpu.core_type = #tpu.core_type<tc>} {
    %c0 = arith.constant 0 : index
    %c0_0 = arith.constant 0 : index
    %0 = vector.load %arg14[%c0, %c0_0] : memref<4x128xf32, #tpu.memory_space<vmem>>, vector<4x128xf32>
    %c0_1 = arith.constant 0 : index
    %c0_2 = arith.constant 0 : index
    %c0_3 = arith.constant 0 : index
    %1 = vector.load %arg1[%c0_1, %c0_2, %c0_3] : memref<2x8x8xf32, #tpu.memory_space<vmem>>, vector<2x8x8xf32>
    %c0_4 = arith.constant 0 : index
    %c0_5 = arith.constant 0 : index
    %2 = vector.load %arg0[%c0_4, %c0_5] : memref<16x128xf32, #tpu.memory_space<vmem>>, vector<16x128xf32>
    %3 = vector.extract_strided_slice %0 {offsets = [0, 0], sizes = [1, 128], strides = [1, 1]} : vector<4x128xf32> to vector<1x128xf32>
    %4 = vector.extract_strided_slice %0 {offsets = [1, 0], sizes = [1, 128], strides = [1, 1]} : vector<4x128xf32> to vector<1x128xf32>
    %cst = arith.constant dense<0.000000e+00> : vector<16xf32>
    %5 = vector.multi_reduction <add>, %2, %cst [1] : vector<16x128xf32> to vector<16xf32>
    %6 = vector.shape_cast %5 : vector<16xf32> to vector<16x1xf32>
    %cst_6 = arith.constant 1.280000e+02 : f32
    %7 = vector.broadcast %cst_6 : f32 to vector<16x1xf32>
    %8 = arith.divf %6, %7 : vector<16x1xf32>
    %9 = vector.broadcast %8 : vector<16x1xf32> to vector<16x128xf32>
    %10 = arith.subf %2, %9 : vector<16x128xf32>
    %11 = arith.mulf %10, %10 : vector<16x128xf32>
    %cst_7 = arith.constant dense<0.000000e+00> : vector<16xf32>
    %12 = vector.multi_reduction <add>, %11, %cst_7 [1] : vector<16x128xf32> to vector<16xf32>
    %13 = vector.shape_cast %12 : vector<16xf32> to vector<16x1xf32>
    %cst_8 = arith.constant 1.280000e+02 : f32
    %14 = vector.broadcast %cst_8 : f32 to vector<16x1xf32>
    %15 = arith.divf %13, %14 : vector<16x1xf32>
    %cst_9 = arith.constant 9.99999996E-13 : f32
    %16 = vector.broadcast %cst_9 : f32 to vector<16x1xf32>
    %17 = arith.addf %15, %16 : vector<16x1xf32>
    %18 = math.rsqrt %17 : vector<16x1xf32>
    %19 = vector.broadcast %18 : vector<16x1xf32> to vector<16x128xf32>
    %20 = arith.mulf %10, %19 : vector<16x128xf32>
    %21 = vector.broadcast %3 : vector<1x128xf32> to vector<16x128xf32>
    %22 = arith.mulf %20, %21 : vector<16x128xf32>
    %23 = vector.broadcast %4 : vector<1x128xf32> to vector<16x128xf32>
    %24 = arith.addf %22, %23 : vector<16x128xf32>
    %c0_10 = arith.constant 0 : index
    %c0_11 = arith.constant 0 : index
    %25 = vector.load %arg6[%c0_10, %c0_11] : memref<8x384xf32, #tpu.memory_space<vmem>>, vector<8x384xf32>
    %26 = vector.extract_strided_slice %25 {offsets = [0, 0], sizes = [1, 384], strides = [1, 1]} : vector<8x384xf32> to vector<1x384xf32>
    %27 = vector.extract_strided_slice %25 {offsets = [1, 0], sizes = [1, 128], strides = [1, 1]} : vector<8x384xf32> to vector<1x128xf32>
    %28 = vector.extract_strided_slice %25 {offsets = [2, 0], sizes = [1, 128], strides = [1, 1]} : vector<8x384xf32> to vector<1x128xf32>
    %29 = vector.extract_strided_slice %25 {offsets = [3, 0], sizes = [1, 128], strides = [1, 1]} : vector<8x384xf32> to vector<1x128xf32>
    %30 = vector.extract_strided_slice %25 {offsets = [4, 0], sizes = [1, 256], strides = [1, 1]} : vector<8x384xf32> to vector<1x256xf32>
    %31 = vector.extract_strided_slice %25 {offsets = [5, 0], sizes = [1, 128], strides = [1, 1]} : vector<8x384xf32> to vector<1x128xf32>
    %32 = vector.extract_strided_slice %25 {offsets = [6, 0], sizes = [1, 128], strides = [1, 1]} : vector<8x384xf32> to vector<1x128xf32>
    %33 = vector.extract_strided_slice %25 {offsets = [7, 0], sizes = [1, 128], strides = [1, 1]} : vector<8x384xf32> to vector<1x128xf32>
    %34 = arith.truncf %24 : vector<16x128xf32> to vector<16x128xbf16>
    %c0_12 = arith.constant 0 : index
    %c0_13 = arith.constant 0 : index
    %35 = vector.load %arg2[%c0_12, %c0_13] : memref<128x384xbf16, #tpu.memory_space<vmem>>, vector<128x384xbf16>
    %cst_14 = arith.constant dense<0.000000e+00> : vector<16x384xf32>
    %36 = tpu.matmul %34, %35, %cst_14 {dimension_numbers = #tpu.dot_dimension_numbers<[1], [0], [0], [1], [0, 0, 1, 1], [], []>} : vector<16x128xbf16>, vector<128x384xbf16>, vector<16x384xf32> -> vector<16x384xf32>
    %37 = vector.broadcast %26 : vector<1x384xf32> to vector<16x384xf32>
    %38 = arith.addf %36, %37 : vector<16x384xf32>
    %39 = vector.extract_strided_slice %38 {offsets = [0, 0], sizes = [16, 128], strides = [1, 1]} : vector<16x384xf32> to vector<16x128xf32>
    %40 = vector.shape_cast %39 : vector<16x128xf32> to vector<2x8x128xf32>
    %41 = arith.truncf %40 : vector<2x8x128xf32> to vector<2x8x128xbf16>
    %42 = vector.extract_strided_slice %38 {offsets = [0, 128], sizes = [16, 128], strides = [1, 1]} : vector<16x384xf32> to vector<16x128xf32>
    %43 = vector.shape_cast %42 : vector<16x128xf32> to vector<2x8x128xf32>
    %44 = arith.truncf %43 : vector<2x8x128xf32> to vector<2x8x128xbf16>
    %45 = vector.extract_strided_slice %38 {offsets = [0, 256], sizes = [16, 128], strides = [1, 1]} : vector<16x384xf32> to vector<16x128xf32>
    %46 = vector.shape_cast %45 : vector<16x128xf32> to vector<2x8x128xf32>
    %47 = arith.truncf %46 : vector<2x8x128xf32> to vector<2x8x128xbf16>
    %48 = vector.extract_strided_slice %41 {offsets = [0, 0, 0], sizes = [2, 8, 32], strides = [1, 1, 1]} : vector<2x8x128xbf16> to vector<2x8x32xbf16>
    %49 = vector.extract_strided_slice %44 {offsets = [0, 0, 0], sizes = [2, 8, 32], strides = [1, 1, 1]} : vector<2x8x128xbf16> to vector<2x8x32xbf16>
    %50 = vector.extract_strided_slice %47 {offsets = [0, 0, 0], sizes = [2, 8, 32], strides = [1, 1, 1]} : vector<2x8x128xbf16> to vector<2x8x32xbf16>
    "tpu.trace_start"() <{level = 10 : i32, message = "bqd,bkd->bqk"}> : () -> ()
    %cst_15 = arith.constant dense<0.000000e+00> : vector<2x8x8xf32>
    %51 = tpu.matmul %48, %49, %cst_15 {dimension_numbers = #tpu.dot_dimension_numbers<[2], [2], [1], [1], [0, 0, 0, 1, 1, 1], [0], [0]>} : vector<2x8x32xbf16>, vector<2x8x32xbf16>, vector<2x8x8xf32> -> vector<2x8x8xf32>
    "tpu.trace_stop"() : () -> ()
    %52 = arith.addf %51, %1 : vector<2x8x8xf32>
    %cst_16 = arith.constant dense<0xFF800000> : vector<2x8xf32>
    %53 = vector.multi_reduction <maximumf>, %52, %cst_16 [2] : vector<2x8x8xf32> to vector<2x8xf32>
    %54 = vector.shape_cast %53 : vector<2x8xf32> to vector<2x8x1xf32>
    %55 = vector.broadcast %54 : vector<2x8x1xf32> to vector<2x8x8xf32>
    %56 = arith.subf %52, %55 : vector<2x8x8xf32>
    %57 = math.exp %56 : vector<2x8x8xf32>
    %cst_17 = arith.constant dense<0.000000e+00> : vector<2x8xf32>
    %58 = vector.multi_reduction <add>, %57, %cst_17 [2] : vector<2x8x8xf32> to vector<2x8xf32>
    %59 = vector.shape_cast %58 : vector<2x8xf32> to vector<2x8x1xf32>
    %60 = tpu.reciprocal %59 {approx = true} : vector<2x8x1xf32> -> vector<2x8x1xf32>
    %61 = vector.broadcast %60 : vector<2x8x1xf32> to vector<2x8x8xf32>
    %62 = arith.mulf %57, %61 : vector<2x8x8xf32>
    %63 = arith.truncf %62 : vector<2x8x8xf32> to vector<2x8x8xbf16>
    "tpu.trace_start"() <{level = 10 : i32, message = "bqk,bkd->bqd"}> : () -> ()
    %cst_18 = arith.constant dense<0.000000e+00> : vector<2x8x32xf32>
    %64 = tpu.matmul %63, %50, %cst_18 {dimension_numbers = #tpu.dot_dimension_numbers<[2], [1], [1], [2], [0, 0, 0, 1, 1, 2], [0], [0]>} : vector<2x8x8xbf16>, vector<2x8x32xbf16>, vector<2x8x32xf32> -> vector<2x8x32xf32>
    "tpu.trace_stop"() : () -> ()
    %65 = vector.shape_cast %64 : vector<2x8x32xf32> to vector<16x32xf32>
    %c0_19 = arith.constant 0 : index
    %c0_20 = arith.constant 0 : index
    %66 = vector.load %arg16[%c0_19, %c0_20] : memref<16x128xf32, #tpu.memory_space<vmem>>, vector<16x32xf32>
    tpu.vector_store %arg16[%c0_19, %c0_20], %65 {strides = array<i32>} : memref<16x128xf32, #tpu.memory_space<vmem>>, vector<16x32xf32>,
    %67 = vector.extract_strided_slice %41 {offsets = [0, 0, 32], sizes = [2, 8, 32], strides = [1, 1, 1]} : vector<2x8x128xbf16> to vector<2x8x32xbf16>
    %68 = vector.extract_strided_slice %44 {offsets = [0, 0, 32], sizes = [2, 8, 32], strides = [1, 1, 1]} : vector<2x8x128xbf16> to vector<2x8x32xbf16>
    %69 = vector.extract_strided_slice %47 {offsets = [0, 0, 32], sizes = [2, 8, 32], strides = [1, 1, 1]} : vector<2x8x128xbf16> to vector<2x8x32xbf16>
    "tpu.trace_start"() <{level = 10 : i32, message = "bqd,bkd->bqk"}> : () -> ()
    %cst_21 = arith.constant dense<0.000000e+00> : vector<2x8x8xf32>
    %70 = tpu.matmul %67, %68, %cst_21 {dimension_numbers = #tpu.dot_dimension_numbers<[2], [2], [1], [1], [0, 0, 0, 1, 1, 1], [0], [0]>} : vector<2x8x32xbf16>, vector<2x8x32xbf16>, vector<2x8x8xf32> -> vector<2x8x8xf32>
    "tpu.trace_stop"() : () -> ()
    %71 = arith.addf %70, %1 : vector<2x8x8xf32>
    %cst_22 = arith.constant dense<0xFF800000> : vector<2x8xf32>
    %72 = vector.multi_reduction <maximumf>, %71, %cst_22 [2] : vector<2x8x8xf32> to vector<2x8xf32>
    %73 = vector.shape_cast %72 : vector<2x8xf32> to vector<2x8x1xf32>
    %74 = vector.broadcast %73 : vector<2x8x1xf32> to vector<2x8x8xf32>
    %75 = arith.subf %71, %74 : vector<2x8x8xf32>
    %76 = math.exp %75 : vector<2x8x8xf32>
    %cst_23 = arith.constant dense<0.000000e+00> : vector<2x8xf32>
    %77 = vector.multi_reduction <add>, %76, %cst_23 [2] : vector<2x8x8xf32> to vector<2x8xf32>
    %78 = vector.shape_cast %77 : vector<2x8xf32> to vector<2x8x1xf32>
    %79 = tpu.reciprocal %78 {approx = true} : vector<2x8x1xf32> -> vector<2x8x1xf32>
    %80 = vector.broadcast %79 : vector<2x8x1xf32> to vector<2x8x8xf32>
    %81 = arith.mulf %76, %80 : vector<2x8x8xf32>
    %82 = arith.truncf %81 : vector<2x8x8xf32> to vector<2x8x8xbf16>
    "tpu.trace_start"() <{level = 10 : i32, message = "bqk,bkd->bqd"}> : () -> ()
    %cst_24 = arith.constant dense<0.000000e+00> : vector<2x8x32xf32>
    %83 = tpu.matmul %82, %69, %cst_24 {dimension_numbers = #tpu.dot_dimension_numbers<[2], [1], [1], [2], [0, 0, 0, 1, 1, 2], [0], [0]>} : vector<2x8x8xbf16>, vector<2x8x32xbf16>, vector<2x8x32xf32> -> vector<2x8x32xf32>
    "tpu.trace_stop"() : () -> ()
    %84 = vector.shape_cast %83 : vector<2x8x32xf32> to vector<16x32xf32>
    %c0_25 = arith.constant 0 : index
    %c32 = arith.constant 32 : index
    %85 = vector.load %arg16[%c0_25, %c32] : memref<16x128xf32, #tpu.memory_space<vmem>>, vector<16x32xf32>
    tpu.vector_store %arg16[%c0_25, %c32], %84 {strides = array<i32>} : memref<16x128xf32, #tpu.memory_space<vmem>>, vector<16x32xf32>,
    %86 = vector.extract_strided_slice %41 {offsets = [0, 0, 64], sizes = [2, 8, 32], strides = [1, 1, 1]} : vector<2x8x128xbf16> to vector<2x8x32xbf16>
    %87 = vector.extract_strided_slice %44 {offsets = [0, 0, 64], sizes = [2, 8, 32], strides = [1, 1, 1]} : vector<2x8x128xbf16> to vector<2x8x32xbf16>
    %88 = vector.extract_strided_slice %47 {offsets = [0, 0, 64], sizes = [2, 8, 32], strides = [1, 1, 1]} : vector<2x8x128xbf16> to vector<2x8x32xbf16>
    "tpu.trace_start"() <{level = 10 : i32, message = "bqd,bkd->bqk"}> : () -> ()
    %cst_26 = arith.constant dense<0.000000e+00> : vector<2x8x8xf32>
    %89 = tpu.matmul %86, %87, %cst_26 {dimension_numbers = #tpu.dot_dimension_numbers<[2], [2], [1], [1], [0, 0, 0, 1, 1, 1], [0], [0]>} : vector<2x8x32xbf16>, vector<2x8x32xbf16>, vector<2x8x8xf32> -> vector<2x8x8xf32>
    "tpu.trace_stop"() : () -> ()
    %90 = arith.addf %89, %1 : vector<2x8x8xf32>
    %cst_27 = arith.constant dense<0xFF800000> : vector<2x8xf32>
    %91 = vector.multi_reduction <maximumf>, %90, %cst_27 [2] : vector<2x8x8xf32> to vector<2x8xf32>
    %92 = vector.shape_cast %91 : vector<2x8xf32> to vector<2x8x1xf32>
    %93 = vector.broadcast %92 : vector<2x8x1xf32> to vector<2x8x8xf32>
    %94 = arith.subf %90, %93 : vector<2x8x8xf32>
    %95 = math.exp %94 : vector<2x8x8xf32>
    %cst_28 = arith.constant dense<0.000000e+00> : vector<2x8xf32>
    %96 = vector.multi_reduction <add>, %95, %cst_28 [2] : vector<2x8x8xf32> to vector<2x8xf32>
    %97 = vector.shape_cast %96 : vector<2x8xf32> to vector<2x8x1xf32>
    %98 = tpu.reciprocal %97 {approx = true} : vector<2x8x1xf32> -> vector<2x8x1xf32>
    %99 = vector.broadcast %98 : vector<2x8x1xf32> to vector<2x8x8xf32>
    %100 = arith.mulf %95, %99 : vector<2x8x8xf32>
    %101 = arith.truncf %100 : vector<2x8x8xf32> to vector<2x8x8xbf16>
    "tpu.trace_start"() <{level = 10 : i32, message = "bqk,bkd->bqd"}> : () -> ()
    %cst_29 = arith.constant dense<0.000000e+00> : vector<2x8x32xf32>
    %102 = tpu.matmul %101, %88, %cst_29 {dimension_numbers = #tpu.dot_dimension_numbers<[2], [1], [1], [2], [0, 0, 0, 1, 1, 2], [0], [0]>} : vector<2x8x8xbf16>, vector<2x8x32xbf16>, vector<2x8x32xf32> -> vector<2x8x32xf32>
    "tpu.trace_stop"() : () -> ()
    %103 = vector.shape_cast %102 : vector<2x8x32xf32> to vector<16x32xf32>
    %c0_30 = arith.constant 0 : index
    %c64 = arith.constant 64 : index
    %104 = vector.load %arg16[%c0_30, %c64] : memref<16x128xf32, #tpu.memory_space<vmem>>, vector<16x32xf32>
    tpu.vector_store %arg16[%c0_30, %c64], %103 {strides = array<i32>} : memref<16x128xf32, #tpu.memory_space<vmem>>, vector<16x32xf32>,
    %105 = vector.extract_strided_slice %41 {offsets = [0, 0, 96], sizes = [2, 8, 32], strides = [1, 1, 1]} : vector<2x8x128xbf16> to vector<2x8x32xbf16>
    %106 = vector.extract_strided_slice %44 {offsets = [0, 0, 96], sizes = [2, 8, 32], strides = [1, 1, 1]} : vector<2x8x128xbf16> to vector<2x8x32xbf16>
    %107 = vector.extract_strided_slice %47 {offsets = [0, 0, 96], sizes = [2, 8, 32], strides = [1, 1, 1]} : vector<2x8x128xbf16> to vector<2x8x32xbf16>
    "tpu.trace_start"() <{level = 10 : i32, message = "bqd,bkd->bqk"}> : () -> ()
    %cst_31 = arith.constant dense<0.000000e+00> : vector<2x8x8xf32>
    %108 = tpu.matmul %105, %106, %cst_31 {dimension_numbers = #tpu.dot_dimension_numbers<[2], [2], [1], [1], [0, 0, 0, 1, 1, 1], [0], [0]>} : vector<2x8x32xbf16>, vector<2x8x32xbf16>, vector<2x8x8xf32> -> vector<2x8x8xf32>
    "tpu.trace_stop"() : () -> ()
    %109 = arith.addf %108, %1 : vector<2x8x8xf32>
    %cst_32 = arith.constant dense<0xFF800000> : vector<2x8xf32>
    %110 = vector.multi_reduction <maximumf>, %109, %cst_32 [2] : vector<2x8x8xf32> to vector<2x8xf32>
    %111 = vector.shape_cast %110 : vector<2x8xf32> to vector<2x8x1xf32>
    %112 = vector.broadcast %111 : vector<2x8x1xf32> to vector<2x8x8xf32>
    %113 = arith.subf %109, %112 : vector<2x8x8xf32>
    %114 = math.exp %113 : vector<2x8x8xf32>
    %cst_33 = arith.constant dense<0.000000e+00> : vector<2x8xf32>
    %115 = vector.multi_reduction <add>, %114, %cst_33 [2] : vector<2x8x8xf32> to vector<2x8xf32>
    %116 = vector.shape_cast %115 : vector<2x8xf32> to vector<2x8x1xf32>
    %117 = tpu.reciprocal %116 {approx = true} : vector<2x8x1xf32> -> vector<2x8x1xf32>
    %118 = vector.broadcast %117 : vector<2x8x1xf32> to vector<2x8x8xf32>
    %119 = arith.mulf %114, %118 : vector<2x8x8xf32>
    %120 = arith.truncf %119 : vector<2x8x8xf32> to vector<2x8x8xbf16>
    "tpu.trace_start"() <{level = 10 : i32, message = "bqk,bkd->bqd"}> : () -> ()
    %cst_34 = arith.constant dense<0.000000e+00> : vector<2x8x32xf32>
    %121 = tpu.matmul %120, %107, %cst_34 {dimension_numbers = #tpu.dot_dimension_numbers<[2], [1], [1], [2], [0, 0, 0, 1, 1, 2], [0], [0]>} : vector<2x8x8xbf16>, vector<2x8x32xbf16>, vector<2x8x32xf32> -> vector<2x8x32xf32>
    "tpu.trace_stop"() : () -> ()
    %122 = vector.shape_cast %121 : vector<2x8x32xf32> to vector<16x32xf32>
    %c0_35 = arith.constant 0 : index
    %c96 = arith.constant 96 : index
    %123 = vector.load %arg16[%c0_35, %c96] : memref<16x128xf32, #tpu.memory_space<vmem>>, vector<16x32xf32>
    tpu.vector_store %arg16[%c0_35, %c96], %122 {strides = array<i32>} : memref<16x128xf32, #tpu.memory_space<vmem>>, vector<16x32xf32>,
    %c0_36 = arith.constant 0 : index
    %c0_37 = arith.constant 0 : index
    %124 = vector.load %arg16[%c0_36, %c0_37] : memref<16x128xf32, #tpu.memory_space<vmem>>, vector<16x128xf32>
    %125 = arith.truncf %124 : vector<16x128xf32> to vector<16x128xbf16>
    %c0_38 = arith.constant 0 : index
    %c0_39 = arith.constant 0 : index
    %126 = vector.load %arg3[%c0_38, %c0_39] : memref<128x128xbf16, #tpu.memory_space<vmem>>, vector<128x128xbf16>
    %cst_40 = arith.constant dense<0.000000e+00> : vector<16x128xf32>
    %127 = tpu.matmul %125, %126, %cst_40 {dimension_numbers = #tpu.dot_dimension_numbers<[1], [0], [0], [1], [0, 0, 1, 1], [], []>} : vector<16x128xbf16>, vector<128x128xbf16>, vector<16x128xf32> -> vector<16x128xf32>
    %128 = vector.broadcast %27 : vector<1x128xf32> to vector<16x128xf32>
    %129 = arith.addf %127, %128 : vector<16x128xf32>
    %130 = arith.addf %129, %24 : vector<16x128xf32>
    %cst_41 = arith.constant dense<0.000000e+00> : vector<16xf32>
    %131 = vector.multi_reduction <add>, %130, %cst_41 [1] : vector<16x128xf32> to vector<16xf32>
    %132 = vector.shape_cast %131 : vector<16xf32> to vector<16x1xf32>
    %cst_42 = arith.constant 1.280000e+02 : f32
    %133 = vector.broadcast %cst_42 : f32 to vector<16x1xf32>
    %134 = arith.divf %132, %133 : vector<16x1xf32>
    %135 = vector.broadcast %134 : vector<16x1xf32> to vector<16x128xf32>
    %136 = arith.subf %130, %135 : vector<16x128xf32>
    %137 = arith.mulf %136, %136 : vector<16x128xf32>
    %cst_43 = arith.constant dense<0.000000e+00> : vector<16xf32>
    %138 = vector.multi_reduction <add>, %137, %cst_43 [1] : vector<16x128xf32> to vector<16xf32>
    %139 = vector.shape_cast %138 : vector<16xf32> to vector<16x1xf32>
    %cst_44 = arith.constant 1.280000e+02 : f32
    %140 = vector.broadcast %cst_44 : f32 to vector<16x1xf32>
    %141 = arith.divf %139, %140 : vector<16x1xf32>
    %cst_45 = arith.constant 9.99999996E-13 : f32
    %142 = vector.broadcast %cst_45 : f32 to vector<16x1xf32>
    %143 = arith.addf %141, %142 : vector<16x1xf32>
    %144 = math.rsqrt %143 : vector<16x1xf32>
    %145 = vector.broadcast %144 : vector<16x1xf32> to vector<16x128xf32>
    %146 = arith.mulf %136, %145 : vector<16x128xf32>
    %147 = vector.broadcast %28 : vector<1x128xf32> to vector<16x128xf32>
    %148 = arith.mulf %146, %147 : vector<16x128xf32>
    %149 = vector.broadcast %29 : vector<1x128xf32> to vector<16x128xf32>
    %150 = arith.addf %148, %149 : vector<16x128xf32>
    %151 = arith.truncf %150 : vector<16x128xf32> to vector<16x128xbf16>
    %c0_46 = arith.constant 0 : index
    %c0_47 = arith.constant 0 : index
    %152 = vector.load %arg4[%c0_46, %c0_47] : memref<128x256xbf16, #tpu.memory_space<vmem>>, vector<128x256xbf16>
    %cst_48 = arith.constant dense<0.000000e+00> : vector<16x256xf32>
    %153 = tpu.matmul %151, %152, %cst_48 {dimension_numbers = #tpu.dot_dimension_numbers<[1], [0], [0], [1], [0, 0, 1, 1], [], []>} : vector<16x128xbf16>, vector<128x256xbf16>, vector<16x256xf32> -> vector<16x256xf32>
    %154 = vector.broadcast %30 : vector<1x256xf32> to vector<16x256xf32>
    %155 = arith.addf %153, %154 : vector<16x256xf32>
    %cst_49 = arith.constant 5.000000e-01 : f32
    %156 = vector.broadcast %cst_49 : f32 to vector<16x256xf32>
    %157 = arith.mulf %156, %155 : vector<16x256xf32>
    %cst_50 = arith.constant 4.471500e-02 : f32
    %158 = vector.broadcast %cst_50 : f32 to vector<16x256xf32>
    %159 = arith.mulf %158, %155 : vector<16x256xf32>
    %160 = arith.mulf %159, %155 : vector<16x256xf32>
    %161 = arith.mulf %160, %155 : vector<16x256xf32>
    %162 = arith.addf %155, %161 : vector<16x256xf32>
    %cst_51 = arith.constant 0.797884583 : f32
    %163 = vector.broadcast %cst_51 : f32 to vector<16x256xf32>
    %164 = arith.mulf %163, %162 : vector<16x256xf32>
    %165 = math.tanh %164 : vector<16x256xf32>
    %cst_52 = arith.constant 1.000000e+00 : f32
    %166 = vector.broadcast %cst_52 : f32 to vector<16x256xf32>
    %167 = arith.addf %166, %165 : vector<16x256xf32>
    %168 = arith.mulf %157, %167 : vector<16x256xf32>
    %169 = arith.truncf %168 : vector<16x256xf32> to vector<16x256xbf16>
    %c0_53 = arith.constant 0 : index
    %c0_54 = arith.constant 0 : index
    %170 = vector.load %arg5[%c0_53, %c0_54] : memref<256x128xbf16, #tpu.memory_space<vmem>>, vector<256x128xbf16>
    %cst_55 = arith.constant dense<0.000000e+00> : vector<16x128xf32>
    %171 = tpu.matmul %169, %170, %cst_55 {dimension_numbers = #tpu.dot_dimension_numbers<[1], [0], [0], [1], [0, 0, 1, 1], [], []>} : vector<16x256xbf16>, vector<256x128xbf16>, vector<16x128xf32> -> vector<16x128xf32>
    %172 = vector.broadcast %31 : vector<1x128xf32> to vector<16x128xf32>
    %173 = arith.addf %171, %172 : vector<16x128xf32>
    %174 = arith.addf %173, %150 : vector<16x128xf32>
    %cst_56 = arith.constant dense<0.000000e+00> : vector<16xf32>
    %175 = vector.multi_reduction <add>, %174, %cst_56 [1] : vector<16x128xf32> to vector<16xf32>
    %176 = vector.shape_cast %175 : vector<16xf32> to vector<16x1xf32>
    %cst_57 = arith.constant 1.280000e+02 : f32
    %177 = vector.broadcast %cst_57 : f32 to vector<16x1xf32>
    %178 = arith.divf %176, %177 : vector<16x1xf32>
    %179 = vector.broadcast %178 : vector<16x1xf32> to vector<16x128xf32>
    %180 = arith.subf %174, %179 : vector<16x128xf32>
    %181 = arith.mulf %180, %180 : vector<16x128xf32>
    %cst_58 = arith.constant dense<0.000000e+00> : vector<16xf32>
    %182 = vector.multi_reduction <add>, %181, %cst_58 [1] : vector<16x128xf32> to vector<16xf32>
    %183 = vector.shape_cast %182 : vector<16xf32> to vector<16x1xf32>
    %cst_59 = arith.constant 1.280000e+02 : f32
    %184 = vector.broadcast %cst_59 : f32 to vector<16x1xf32>
    %185 = arith.divf %183, %184 : vector<16x1xf32>
    %cst_60 = arith.constant 9.99999996E-13 : f32
    %186 = vector.broadcast %cst_60 : f32 to vector<16x1xf32>
    %187 = arith.addf %185, %186 : vector<16x1xf32>
    %188 = math.rsqrt %187 : vector<16x1xf32>
    %189 = vector.broadcast %188 : vector<16x1xf32> to vector<16x128xf32>
    %190 = arith.mulf %180, %189 : vector<16x128xf32>
    %191 = vector.broadcast %32 : vector<1x128xf32> to vector<16x128xf32>
    %192 = arith.mulf %190, %191 : vector<16x128xf32>
    %193 = vector.broadcast %33 : vector<1x128xf32> to vector<16x128xf32>
    %194 = arith.addf %192, %193 : vector<16x128xf32>
    %c0_61 = arith.constant 0 : index
    %c0_62 = arith.constant 0 : index
    %195 = vector.load %arg11[%c0_61, %c0_62] : memref<8x384xf32, #tpu.memory_space<vmem>>, vector<8x384xf32>
    %196 = vector.extract_strided_slice %195 {offsets = [0, 0], sizes = [1, 384], strides = [1, 1]} : vector<8x384xf32> to vector<1x384xf32>
    %197 = vector.extract_strided_slice %195 {offsets = [1, 0], sizes = [1, 128], strides = [1, 1]} : vector<8x384xf32> to vector<1x128xf32>
    %198 = vector.extract_strided_slice %195 {offsets = [2, 0], sizes = [1, 128], strides = [1, 1]} : vector<8x384xf32> to vector<1x128xf32>
    %199 = vector.extract_strided_slice %195 {offsets = [3, 0], sizes = [1, 128], strides = [1, 1]} : vector<8x384xf32> to vector<1x128xf32>
    %200 = vector.extract_strided_slice %195 {offsets = [4, 0], sizes = [1, 256], strides = [1, 1]} : vector<8x384xf32> to vector<1x256xf32>
    %201 = vector.extract_strided_slice %195 {offsets = [5, 0], sizes = [1, 128], strides = [1, 1]} : vector<8x384xf32> to vector<1x128xf32>
    %202 = vector.extract_strided_slice %195 {offsets = [6, 0], sizes = [1, 128], strides = [1, 1]} : vector<8x384xf32> to vector<1x128xf32>
    %203 = vector.extract_strided_slice %195 {offsets = [7, 0], sizes = [1, 128], strides = [1, 1]} : vector<8x384xf32> to vector<1x128xf32>
    %204 = arith.truncf %194 : vector<16x128xf32> to vector<16x128xbf16>
    %c0_63 = arith.constant 0 : index
    %c0_64 = arith.constant 0 : index
    %205 = vector.load %arg7[%c0_63, %c0_64] : memref<128x384xbf16, #tpu.memory_space<vmem>>, vector<128x384xbf16>
    %cst_65 = arith.constant dense<0.000000e+00> : vector<16x384xf32>
    %206 = tpu.matmul %204, %205, %cst_65 {dimension_numbers = #tpu.dot_dimension_numbers<[1], [0], [0], [1], [0, 0, 1, 1], [], []>} : vector<16x128xbf16>, vector<128x384xbf16>, vector<16x384xf32> -> vector<16x384xf32>
    %207 = vector.broadcast %196 : vector<1x384xf32> to vector<16x384xf32>
    %208 = arith.addf %206, %207 : vector<16x384xf32>
    %209 = vector.extract_strided_slice %208 {offsets = [0, 0], sizes = [16, 128], strides = [1, 1]} : vector<16x384xf32> to vector<16x128xf32>
    %210 = vector.shape_cast %209 : vector<16x128xf32> to vector<2x8x128xf32>
    %211 = arith.truncf %210 : vector<2x8x128xf32> to vector<2x8x128xbf16>
    %212 = vector.extract_strided_slice %208 {offsets = [0, 128], sizes = [16, 128], strides = [1, 1]} : vector<16x384xf32> to vector<16x128xf32>
    %213 = vector.shape_cast %212 : vector<16x128xf32> to vector<2x8x128xf32>
    %214 = arith.truncf %213 : vector<2x8x128xf32> to vector<2x8x128xbf16>
    %215 = vector.extract_strided_slice %208 {offsets = [0, 256], sizes = [16, 128], strides = [1, 1]} : vector<16x384xf32> to vector<16x128xf32>
    %216 = vector.shape_cast %215 : vector<16x128xf32> to vector<2x8x128xf32>
    %217 = arith.truncf %216 : vector<2x8x128xf32> to vector<2x8x128xbf16>
    %218 = vector.extract_strided_slice %211 {offsets = [0, 0, 0], sizes = [2, 8, 32], strides = [1, 1, 1]} : vector<2x8x128xbf16> to vector<2x8x32xbf16>
    %219 = vector.extract_strided_slice %214 {offsets = [0, 0, 0], sizes = [2, 8, 32], strides = [1, 1, 1]} : vector<2x8x128xbf16> to vector<2x8x32xbf16>
    %220 = vector.extract_strided_slice %217 {offsets = [0, 0, 0], sizes = [2, 8, 32], strides = [1, 1, 1]} : vector<2x8x128xbf16> to vector<2x8x32xbf16>
    "tpu.trace_start"() <{level = 10 : i32, message = "bqd,bkd->bqk"}> : () -> ()
    %cst_66 = arith.constant dense<0.000000e+00> : vector<2x8x8xf32>
    %221 = tpu.matmul %218, %219, %cst_66 {dimension_numbers = #tpu.dot_dimension_numbers<[2], [2], [1], [1], [0, 0, 0, 1, 1, 1], [0], [0]>} : vector<2x8x32xbf16>, vector<2x8x32xbf16>, vector<2x8x8xf32> -> vector<2x8x8xf32>
    "tpu.trace_stop"() : () -> ()
    %222 = arith.addf %221, %1 : vector<2x8x8xf32>
    %cst_67 = arith.constant dense<0xFF800000> : vector<2x8xf32>
    %223 = vector.multi_reduction <maximumf>, %222, %cst_67 [2] : vector<2x8x8xf32> to vector<2x8xf32>
    %224 = vector.shape_cast %223 : vector<2x8xf32> to vector<2x8x1xf32>
    %225 = vector.broadcast %224 : vector<2x8x1xf32> to vector<2x8x8xf32>
    %226 = arith.subf %222, %225 : vector<2x8x8xf32>
    %227 = math.exp %226 : vector<2x8x8xf32>
    %cst_68 = arith.constant dense<0.000000e+00> : vector<2x8xf32>
    %228 = vector.multi_reduction <add>, %227, %cst_68 [2] : vector<2x8x8xf32> to vector<2x8xf32>
    %229 = vector.shape_cast %228 : vector<2x8xf32> to vector<2x8x1xf32>
    %230 = tpu.reciprocal %229 {approx = true} : vector<2x8x1xf32> -> vector<2x8x1xf32>
    %231 = vector.broadcast %230 : vector<2x8x1xf32> to vector<2x8x8xf32>
    %232 = arith.mulf %227, %231 : vector<2x8x8xf32>
    %233 = arith.truncf %232 : vector<2x8x8xf32> to vector<2x8x8xbf16>
    "tpu.trace_start"() <{level = 10 : i32, message = "bqk,bkd->bqd"}> : () -> ()
    %cst_69 = arith.constant dense<0.000000e+00> : vector<2x8x32xf32>
    %234 = tpu.matmul %233, %220, %cst_69 {dimension_numbers = #tpu.dot_dimension_numbers<[2], [1], [1], [2], [0, 0, 0, 1, 1, 2], [0], [0]>} : vector<2x8x8xbf16>, vector<2x8x32xbf16>, vector<2x8x32xf32> -> vector<2x8x32xf32>
    "tpu.trace_stop"() : () -> ()
    %235 = vector.shape_cast %234 : vector<2x8x32xf32> to vector<16x32xf32>
    %c0_70 = arith.constant 0 : index
    %c0_71 = arith.constant 0 : index
    %236 = vector.load %arg16[%c0_70, %c0_71] : memref<16x128xf32, #tpu.memory_space<vmem>>, vector<16x32xf32>
    tpu.vector_store %arg16[%c0_70, %c0_71], %235 {strides = array<i32>} : memref<16x128xf32, #tpu.memory_space<vmem>>, vector<16x32xf32>,
    %237 = vector.extract_strided_slice %211 {offsets = [0, 0, 32], sizes = [2, 8, 32], strides = [1, 1, 1]} : vector<2x8x128xbf16> to vector<2x8x32xbf16>
    %238 = vector.extract_strided_slice %214 {offsets = [0, 0, 32], sizes = [2, 8, 32], strides = [1, 1, 1]} : vector<2x8x128xbf16> to vector<2x8x32xbf16>
    %239 = vector.extract_strided_slice %217 {offsets = [0, 0, 32], sizes = [2, 8, 32], strides = [1, 1, 1]} : vector<2x8x128xbf16> to vector<2x8x32xbf16>
    "tpu.trace_start"() <{level = 10 : i32, message = "bqd,bkd->bqk"}> : () -> ()
    %cst_72 = arith.constant dense<0.000000e+00> : vector<2x8x8xf32>
    %240 = tpu.matmul %237, %238, %cst_72 {dimension_numbers = #tpu.dot_dimension_numbers<[2], [2], [1], [1], [0, 0, 0, 1, 1, 1], [0], [0]>} : vector<2x8x32xbf16>, vector<2x8x32xbf16>, vector<2x8x8xf32> -> vector<2x8x8xf32>
    "tpu.trace_stop"() : () -> ()
    %241 = arith.addf %240, %1 : vector<2x8x8xf32>
    %cst_73 = arith.constant dense<0xFF800000> : vector<2x8xf32>
    %242 = vector.multi_reduction <maximumf>, %241, %cst_73 [2] : vector<2x8x8xf32> to vector<2x8xf32>
    %243 = vector.shape_cast %242 : vector<2x8xf32> to vector<2x8x1xf32>
    %244 = vector.broadcast %243 : vector<2x8x1xf32> to vector<2x8x8xf32>
    %245 = arith.subf %241, %244 : vector<2x8x8xf32>
    %246 = math.exp %245 : vector<2x8x8xf32>
    %cst_74 = arith.constant dense<0.000000e+00> : vector<2x8xf32>
    %247 = vector.multi_reduction <add>, %246, %cst_74 [2] : vector<2x8x8xf32> to vector<2x8xf32>
    %248 = vector.shape_cast %247 : vector<2x8xf32> to vector<2x8x1xf32>
    %249 = tpu.reciprocal %248 {approx = true} : vector<2x8x1xf32> -> vector<2x8x1xf32>
    %250 = vector.broadcast %249 : vector<2x8x1xf32> to vector<2x8x8xf32>
    %251 = arith.mulf %246, %250 : vector<2x8x8xf32>
    %252 = arith.truncf %251 : vector<2x8x8xf32> to vector<2x8x8xbf16>
    "tpu.trace_start"() <{level = 10 : i32, message = "bqk,bkd->bqd"}> : () -> ()
    %cst_75 = arith.constant dense<0.000000e+00> : vector<2x8x32xf32>
    %253 = tpu.matmul %252, %239, %cst_75 {dimension_numbers = #tpu.dot_dimension_numbers<[2], [1], [1], [2], [0, 0, 0, 1, 1, 2], [0], [0]>} : vector<2x8x8xbf16>, vector<2x8x32xbf16>, vector<2x8x32xf32> -> vector<2x8x32xf32>
    "tpu.trace_stop"() : () -> ()
    %254 = vector.shape_cast %253 : vector<2x8x32xf32> to vector<16x32xf32>
    %c0_76 = arith.constant 0 : index
    %c32_77 = arith.constant 32 : index
    %255 = vector.load %arg16[%c0_76, %c32_77] : memref<16x128xf32, #tpu.memory_space<vmem>>, vector<16x32xf32>
    tpu.vector_store %arg16[%c0_76, %c32_77], %254 {strides = array<i32>} : memref<16x128xf32, #tpu.memory_space<vmem>>, vector<16x32xf32>,
    %256 = vector.extract_strided_slice %211 {offsets = [0, 0, 64], sizes = [2, 8, 32], strides = [1, 1, 1]} : vector<2x8x128xbf16> to vector<2x8x32xbf16>
    %257 = vector.extract_strided_slice %214 {offsets = [0, 0, 64], sizes = [2, 8, 32], strides = [1, 1, 1]} : vector<2x8x128xbf16> to vector<2x8x32xbf16>
    %258 = vector.extract_strided_slice %217 {offsets = [0, 0, 64], sizes = [2, 8, 32], strides = [1, 1, 1]} : vector<2x8x128xbf16> to vector<2x8x32xbf16>
    "tpu.trace_start"() <{level = 10 : i32, message = "bqd,bkd->bqk"}> : () -> ()
    %cst_78 = arith.constant dense<0.000000e+00> : vector<2x8x8xf32>
    %259 = tpu.matmul %256, %257, %cst_78 {dimension_numbers = #tpu.dot_dimension_numbers<[2], [2], [1], [1], [0, 0, 0, 1, 1, 1], [0], [0]>} : vector<2x8x32xbf16>, vector<2x8x32xbf16>, vector<2x8x8xf32> -> vector<2x8x8xf32>
    "tpu.trace_stop"() : () -> ()
    %260 = arith.addf %259, %1 : vector<2x8x8xf32>
    %cst_79 = arith.constant dense<0xFF800000> : vector<2x8xf32>
    %261 = vector.multi_reduction <maximumf>, %260, %cst_79 [2] : vector<2x8x8xf32> to vector<2x8xf32>
    %262 = vector.shape_cast %261 : vector<2x8xf32> to vector<2x8x1xf32>
    %263 = vector.broadcast %262 : vector<2x8x1xf32> to vector<2x8x8xf32>
    %264 = arith.subf %260, %263 : vector<2x8x8xf32>
    %265 = math.exp %264 : vector<2x8x8xf32>
    %cst_80 = arith.constant dense<0.000000e+00> : vector<2x8xf32>
    %266 = vector.multi_reduction <add>, %265, %cst_80 [2] : vector<2x8x8xf32> to vector<2x8xf32>
    %267 = vector.shape_cast %266 : vector<2x8xf32> to vector<2x8x1xf32>
    %268 = tpu.reciprocal %267 {approx = true} : vector<2x8x1xf32> -> vector<2x8x1xf32>
    %269 = vector.broadcast %268 : vector<2x8x1xf32> to vector<2x8x8xf32>
    %270 = arith.mulf %265, %269 : vector<2x8x8xf32>
    %271 = arith.truncf %270 : vector<2x8x8xf32> to vector<2x8x8xbf16>
    "tpu.trace_start"() <{level = 10 : i32, message = "bqk,bkd->bqd"}> : () -> ()
    %cst_81 = arith.constant dense<0.000000e+00> : vector<2x8x32xf32>
    %272 = tpu.matmul %271, %258, %cst_81 {dimension_numbers = #tpu.dot_dimension_numbers<[2], [1], [1], [2], [0, 0, 0, 1, 1, 2], [0], [0]>} : vector<2x8x8xbf16>, vector<2x8x32xbf16>, vector<2x8x32xf32> -> vector<2x8x32xf32>
    "tpu.trace_stop"() : () -> ()
    %273 = vector.shape_cast %272 : vector<2x8x32xf32> to vector<16x32xf32>
    %c0_82 = arith.constant 0 : index
    %c64_83 = arith.constant 64 : index
    %274 = vector.load %arg16[%c0_82, %c64_83] : memref<16x128xf32, #tpu.memory_space<vmem>>, vector<16x32xf32>
    tpu.vector_store %arg16[%c0_82, %c64_83], %273 {strides = array<i32>} : memref<16x128xf32, #tpu.memory_space<vmem>>, vector<16x32xf32>,
    %275 = vector.extract_strided_slice %211 {offsets = [0, 0, 96], sizes = [2, 8, 32], strides = [1, 1, 1]} : vector<2x8x128xbf16> to vector<2x8x32xbf16>
    %276 = vector.extract_strided_slice %214 {offsets = [0, 0, 96], sizes = [2, 8, 32], strides = [1, 1, 1]} : vector<2x8x128xbf16> to vector<2x8x32xbf16>
    %277 = vector.extract_strided_slice %217 {offsets = [0, 0, 96], sizes = [2, 8, 32], strides = [1, 1, 1]} : vector<2x8x128xbf16> to vector<2x8x32xbf16>
    "tpu.trace_start"() <{level = 10 : i32, message = "bqd,bkd->bqk"}> : () -> ()
    %cst_84 = arith.constant dense<0.000000e+00> : vector<2x8x8xf32>
    %278 = tpu.matmul %275, %276, %cst_84 {dimension_numbers = #tpu.dot_dimension_numbers<[2], [2], [1], [1], [0, 0, 0, 1, 1, 1], [0], [0]>} : vector<2x8x32xbf16>, vector<2x8x32xbf16>, vector<2x8x8xf32> -> vector<2x8x8xf32>
    "tpu.trace_stop"() : () -> ()
    %279 = arith.addf %278, %1 : vector<2x8x8xf32>
    %cst_85 = arith.constant dense<0xFF800000> : vector<2x8xf32>
    %280 = vector.multi_reduction <maximumf>, %279, %cst_85 [2] : vector<2x8x8xf32> to vector<2x8xf32>
    %281 = vector.shape_cast %280 : vector<2x8xf32> to vector<2x8x1xf32>
    %282 = vector.broadcast %281 : vector<2x8x1xf32> to vector<2x8x8xf32>
    %283 = arith.subf %279, %282 : vector<2x8x8xf32>
    %284 = math.exp %283 : vector<2x8x8xf32>
    %cst_86 = arith.constant dense<0.000000e+00> : vector<2x8xf32>
    %285 = vector.multi_reduction <add>, %284, %cst_86 [2] : vector<2x8x8xf32> to vector<2x8xf32>
    %286 = vector.shape_cast %285 : vector<2x8xf32> to vector<2x8x1xf32>
    %287 = tpu.reciprocal %286 {approx = true} : vector<2x8x1xf32> -> vector<2x8x1xf32>
    %288 = vector.broadcast %287 : vector<2x8x1xf32> to vector<2x8x8xf32>
    %289 = arith.mulf %284, %288 : vector<2x8x8xf32>
    %290 = arith.truncf %289 : vector<2x8x8xf32> to vector<2x8x8xbf16>
    "tpu.trace_start"() <{level = 10 : i32, message = "bqk,bkd->bqd"}> : () -> ()
    %cst_87 = arith.constant dense<0.000000e+00> : vector<2x8x32xf32>
    %291 = tpu.matmul %290, %277, %cst_87 {dimension_numbers = #tpu.dot_dimension_numbers<[2], [1], [1], [2], [0, 0, 0, 1, 1, 2], [0], [0]>} : vector<2x8x8xbf16>, vector<2x8x32xbf16>, vector<2x8x32xf32> -> vector<2x8x32xf32>
    "tpu.trace_stop"() : () -> ()
    %292 = vector.shape_cast %291 : vector<2x8x32xf32> to vector<16x32xf32>
    %c0_88 = arith.constant 0 : index
    %c96_89 = arith.constant 96 : index
    %293 = vector.load %arg16[%c0_88, %c96_89] : memref<16x128xf32, #tpu.memory_space<vmem>>, vector<16x32xf32>
    tpu.vector_store %arg16[%c0_88, %c96_89], %292 {strides = array<i32>} : memref<16x128xf32, #tpu.memory_space<vmem>>, vector<16x32xf32>,
    %c0_90 = arith.constant 0 : index
    %c0_91 = arith.constant 0 : index
    %294 = vector.load %arg16[%c0_90, %c0_91] : memref<16x128xf32, #tpu.memory_space<vmem>>, vector<16x128xf32>
    %295 = arith.truncf %294 : vector<16x128xf32> to vector<16x128xbf16>
    %c0_92 = arith.constant 0 : index
    %c0_93 = arith.constant 0 : index
    %296 = vector.load %arg8[%c0_92, %c0_93] : memref<128x128xbf16, #tpu.memory_space<vmem>>, vector<128x128xbf16>
    %cst_94 = arith.constant dense<0.000000e+00> : vector<16x128xf32>
    %297 = tpu.matmul %295, %296, %cst_94 {dimension_numbers = #tpu.dot_dimension_numbers<[1], [0], [0], [1], [0, 0, 1, 1], [], []>} : vector<16x128xbf16>, vector<128x128xbf16>, vector<16x128xf32> -> vector<16x128xf32>
    %298 = vector.broadcast %197 : vector<1x128xf32> to vector<16x128xf32>
    %299 = arith.addf %297, %298 : vector<16x128xf32>
    %300 = arith.addf %299, %194 : vector<16x128xf32>
    %cst_95 = arith.constant dense<0.000000e+00> : vector<16xf32>
    %301 = vector.multi_reduction <add>, %300, %cst_95 [1] : vector<16x128xf32> to vector<16xf32>
    %302 = vector.shape_cast %301 : vector<16xf32> to vector<16x1xf32>
    %cst_96 = arith.constant 1.280000e+02 : f32
    %303 = vector.broadcast %cst_96 : f32 to vector<16x1xf32>
    %304 = arith.divf %302, %303 : vector<16x1xf32>
    %305 = vector.broadcast %304 : vector<16x1xf32> to vector<16x128xf32>
    %306 = arith.subf %300, %305 : vector<16x128xf32>
    %307 = arith.mulf %306, %306 : vector<16x128xf32>
    %cst_97 = arith.constant dense<0.000000e+00> : vector<16xf32>
    %308 = vector.multi_reduction <add>, %307, %cst_97 [1] : vector<16x128xf32> to vector<16xf32>
    %309 = vector.shape_cast %308 : vector<16xf32> to vector<16x1xf32>
    %cst_98 = arith.constant 1.280000e+02 : f32
    %310 = vector.broadcast %cst_98 : f32 to vector<16x1xf32>
    %311 = arith.divf %309, %310 : vector<16x1xf32>
    %cst_99 = arith.constant 9.99999996E-13 : f32
    %312 = vector.broadcast %cst_99 : f32 to vector<16x1xf32>
    %313 = arith.addf %311, %312 : vector<16x1xf32>
    %314 = math.rsqrt %313 : vector<16x1xf32>
    %315 = vector.broadcast %314 : vector<16x1xf32> to vector<16x128xf32>
    %316 = arith.mulf %306, %315 : vector<16x128xf32>
    %317 = vector.broadcast %198 : vector<1x128xf32> to vector<16x128xf32>
    %318 = arith.mulf %316, %317 : vector<16x128xf32>
    %319 = vector.broadcast %199 : vector<1x128xf32> to vector<16x128xf32>
    %320 = arith.addf %318, %319 : vector<16x128xf32>
    %321 = arith.truncf %320 : vector<16x128xf32> to vector<16x128xbf16>
    %c0_100 = arith.constant 0 : index
    %c0_101 = arith.constant 0 : index
    %322 = vector.load %arg9[%c0_100, %c0_101] : memref<128x256xbf16, #tpu.memory_space<vmem>>, vector<128x256xbf16>
    %cst_102 = arith.constant dense<0.000000e+00> : vector<16x256xf32>
    %323 = tpu.matmul %321, %322, %cst_102 {dimension_numbers = #tpu.dot_dimension_numbers<[1], [0], [0], [1], [0, 0, 1, 1], [], []>} : vector<16x128xbf16>, vector<128x256xbf16>, vector<16x256xf32> -> vector<16x256xf32>
    %324 = vector.broadcast %200 : vector<1x256xf32> to vector<16x256xf32>
    %325 = arith.addf %323, %324 : vector<16x256xf32>
    %cst_103 = arith.constant 5.000000e-01 : f32
    %326 = vector.broadcast %cst_103 : f32 to vector<16x256xf32>
    %327 = arith.mulf %326, %325 : vector<16x256xf32>
    %cst_104 = arith.constant 4.471500e-02 : f32
    %328 = vector.broadcast %cst_104 : f32 to vector<16x256xf32>
    %329 = arith.mulf %328, %325 : vector<16x256xf32>
    %330 = arith.mulf %329, %325 : vector<16x256xf32>
    %331 = arith.mulf %330, %325 : vector<16x256xf32>
    %332 = arith.addf %325, %331 : vector<16x256xf32>
    %cst_105 = arith.constant 0.797884583 : f32
    %333 = vector.broadcast %cst_105 : f32 to vector<16x256xf32>
    %334 = arith.mulf %333, %332 : vector<16x256xf32>
    %335 = math.tanh %334 : vector<16x256xf32>
    %cst_106 = arith.constant 1.000000e+00 : f32
    %336 = vector.broadcast %cst_106 : f32 to vector<16x256xf32>
    %337 = arith.addf %336, %335 : vector<16x256xf32>
    %338 = arith.mulf %327, %337 : vector<16x256xf32>
    %339 = arith.truncf %338 : vector<16x256xf32> to vector<16x256xbf16>
    %c0_107 = arith.constant 0 : index
    %c0_108 = arith.constant 0 : index
    %340 = vector.load %arg10[%c0_107, %c0_108] : memref<256x128xbf16, #tpu.memory_space<vmem>>, vector<256x128xbf16>
    %cst_109 = arith.constant dense<0.000000e+00> : vector<16x128xf32>
    %341 = tpu.matmul %339, %340, %cst_109 {dimension_numbers = #tpu.dot_dimension_numbers<[1], [0], [0], [1], [0, 0, 1, 1], [], []>} : vector<16x256xbf16>, vector<256x128xbf16>, vector<16x128xf32> -> vector<16x128xf32>
    %342 = vector.broadcast %201 : vector<1x128xf32> to vector<16x128xf32>
    %343 = arith.addf %341, %342 : vector<16x128xf32>
    %344 = arith.addf %343, %320 : vector<16x128xf32>
    %cst_110 = arith.constant dense<0.000000e+00> : vector<16xf32>
    %345 = vector.multi_reduction <add>, %344, %cst_110 [1] : vector<16x128xf32> to vector<16xf32>
    %346 = vector.shape_cast %345 : vector<16xf32> to vector<16x1xf32>
    %cst_111 = arith.constant 1.280000e+02 : f32
    %347 = vector.broadcast %cst_111 : f32 to vector<16x1xf32>
    %348 = arith.divf %346, %347 : vector<16x1xf32>
    %349 = vector.broadcast %348 : vector<16x1xf32> to vector<16x128xf32>
    %350 = arith.subf %344, %349 : vector<16x128xf32>
    %351 = arith.mulf %350, %350 : vector<16x128xf32>
    %cst_112 = arith.constant dense<0.000000e+00> : vector<16xf32>
    %352 = vector.multi_reduction <add>, %351, %cst_112 [1] : vector<16x128xf32> to vector<16xf32>
    %353 = vector.shape_cast %352 : vector<16xf32> to vector<16x1xf32>
    %cst_113 = arith.constant 1.280000e+02 : f32
    %354 = vector.broadcast %cst_113 : f32 to vector<16x1xf32>
    %355 = arith.divf %353, %354 : vector<16x1xf32>
    %cst_114 = arith.constant 9.99999996E-13 : f32
    %356 = vector.broadcast %cst_114 : f32 to vector<16x1xf32>
    %357 = arith.addf %355, %356 : vector<16x1xf32>
    %358 = math.rsqrt %357 : vector<16x1xf32>
    %359 = vector.broadcast %358 : vector<16x1xf32> to vector<16x128xf32>
    %360 = arith.mulf %350, %359 : vector<16x128xf32>
    %361 = vector.broadcast %202 : vector<1x128xf32> to vector<16x128xf32>
    %362 = arith.mulf %360, %361 : vector<16x128xf32>
    %363 = vector.broadcast %203 : vector<1x128xf32> to vector<16x128xf32>
    %364 = arith.addf %362, %363 : vector<16x128xf32>
    %365 = vector.shape_cast %364 : vector<16x128xf32> to vector<2x8x128xf32>
    %366 = vector.extract_strided_slice %365 {offsets = [0, 0, 0], sizes = [2, 1, 128], strides = [1, 1, 1]} : vector<2x8x128xf32> to vector<2x1x128xf32>
    %367 = vector.shape_cast %366 : vector<2x1x128xf32> to vector<2x128xf32>
    %368 = arith.truncf %367 : vector<2x128xf32> to vector<2x128xbf16>
    %c0_115 = arith.constant 0 : index
    %c0_116 = arith.constant 0 : index
    %369 = vector.load %arg12[%c0_115, %c0_116] : memref<128x128xbf16, #tpu.memory_space<vmem>>, vector<128x128xbf16>
    %cst_117 = arith.constant dense<0.000000e+00> : vector<2x128xf32>
    %370 = tpu.matmul %368, %369, %cst_117 {dimension_numbers = #tpu.dot_dimension_numbers<[1], [0], [0], [1], [0, 0, 1, 1], [], []>} : vector<2x128xbf16>, vector<128x128xbf16>, vector<2x128xf32> -> vector<2x128xf32>
    %371 = vector.extract_strided_slice %0 {offsets = [2, 0], sizes = [1, 128], strides = [1, 1]} : vector<4x128xf32> to vector<1x128xf32>
    %372 = vector.broadcast %371 : vector<1x128xf32> to vector<2x128xf32>
    %373 = arith.addf %370, %372 : vector<2x128xf32>
    %374 = math.tanh %373 : vector<2x128xf32>
    %375 = arith.truncf %374 : vector<2x128xf32> to vector<2x128xbf16>
    %c0_118 = arith.constant 0 : index
    %c0_119 = arith.constant 0 : index
    %376 = vector.load %arg13[%c0_118, %c0_119] : memref<128x128xbf16, #tpu.memory_space<vmem>>, vector<128x128xbf16>
    %cst_120 = arith.constant dense<0.000000e+00> : vector<2x128xf32>
    %377 = tpu.matmul %375, %376, %cst_120 {dimension_numbers = #tpu.dot_dimension_numbers<[1], [0], [0], [1], [0, 0, 1, 1], [], []>} : vector<2x128xbf16>, vector<128x128xbf16>, vector<2x128xf32> -> vector<2x128xf32>
    %378 = vector.extract_strided_slice %0 {offsets = [3, 0], sizes = [1, 128], strides = [1, 1]} : vector<4x128xf32> to vector<1x128xf32>
    %379 = vector.broadcast %378 : vector<1x128xf32> to vector<2x128xf32>
    %380 = arith.addf %377, %379 : vector<2x128xf32>
    %c0_121 = arith.constant 0 : index
    %c0_122 = arith.constant 0 : index
    %381 = vector.load %arg15[%c0_121, %c0_122] : memref<2x128xf32, #tpu.memory_space<vmem>>, vector<2x128xf32>
    tpu.vector_store %arg15[%c0_121, %c0_122], %380 {strides = array<i32>} : memref<2x128xf32, #tpu.memory_space<vmem>>, vector<2x128xf32>,
    return
  }
}

</mosaic_0001>

<llo_original>
// kernel: bert_forward.1
$region0: #{bert_forward.1}
  #allocation0 [shape = 'u32[]', space=smem, size = 0x4, offset = 0x4, fixed_abs, tag = 'smem constant byte address 0x4 - core index']
  #allocation1 [shape = 'u32[144,128]{1,0:T(1,128)}', space=vmem, size = 0x12000, scoped, tag = 'internal scratch']
  #allocation2 [shape = 'f32[16,128]{1,0:T(8,128)}', space=vmem, size = 0x2000, scoped, tag = 'scratch operand']
  %s0 = inlined_call_operand.vmem [shape: f32[16,128], index: 0, kind: input, shape index: {}]
  %s1 = inlined_call_operand.vmem [shape: f32[2,8,8], index: 1, kind: input, shape index: {}]
  %s2 = inlined_call_operand.vmem [shape: bf16[128,384], index: 2, kind: input, shape index: {}]
  %s3 = inlined_call_operand.hbm [shape: bf16[128,128], index: 3, kind: input, shape index: {}]
  %s4 = inlined_call_operand.vmem [shape: bf16[128,256], index: 4, kind: input, shape index: {}]
  %s5 = inlined_call_operand.hbm [shape: bf16[256,128], index: 5, kind: input, shape index: {}]
  %s6 = inlined_call_operand.vmem [shape: f32[8,384], index: 6, kind: input, shape index: {}]
  %s7 = inlined_call_operand.hbm [shape: bf16[128,384], index: 7, kind: input, shape index: {}]
  %s8 = inlined_call_operand.hbm [shape: bf16[128,128], index: 8, kind: input, shape index: {}]
  %s9 = inlined_call_operand.hbm [shape: bf16[128,256], index: 9, kind: input, shape index: {}]
  %s10 = inlined_call_operand.hbm [shape: bf16[256,128], index: 10, kind: input, shape index: {}]
  %s11 = inlined_call_operand.hbm [shape: f32[8,384], index: 11, kind: input, shape index: {}]
  %s12 = inlined_call_operand.hbm [shape: bf16[128,128], index: 12, kind: input, shape index: {}]
  %s13 = inlined_call_operand.hbm [shape: bf16[128,128], index: 13, kind: input, shape index: {}]
  %s14 = inlined_call_operand.vmem [shape: f32[4,128], index: 14, kind: input, shape index: {}]
  %s15 = inlined_call_operand.vmem [shape: f32[2,128], index: 15, kind: output, shape index: {}]
  %s16 = sld [smem:[#allocation0]]
  $region106: #{bert_forward.1} parent=0
    _
  %s18 = ssub.s32 1, %s16
  %s19 = scalar_select 0, %s18, %s16
  $region1: #{bert_forward.1} parent=0
    #allocation3 [shape = 'u8[32768]{0}', space=vmem, size = 0x8000, scoped, tag = 'input window, operand 3, single buffered']
    #allocation4 [shape = 's32[1]{0}', space=sflag, size = 0x4, scoped, tag = 'scoped memory for bert_forward.1']
    #allocation5 [shape = 'u8[65536]{0}', space=vmem, size = 0x10000, scoped, tag = 'input window, operand 5, single buffered']
    #allocation6 [shape = 's32[1]{0}', space=sflag, size = 0x4, scoped, tag = 'scoped memory for bert_forward.1']
    #allocation7 [shape = 'u8[98304]{0}', space=vmem, size = 0x18000, scoped, tag = 'input window, operand 7, single buffered']
    #allocation8 [shape = 'u8[32768]{0}', space=vmem, size = 0x8000, scoped, tag = 'input window, operand 8, single buffered']
    #allocation9 [shape = 's32[1]{0}', space=sflag, size = 0x4, scoped, tag = 'scoped memory for bert_forward.1']
    #allocation10 [shape = 'u8[65536]{0}', space=vmem, size = 0x10000, scoped, tag = 'input window, operand 9, single buffered']
    #allocation11 [shape = 'u8[65536]{0}', space=vmem, size = 0x10000, scoped, tag = 'input window, operand 10, single buffered']
    #allocation12 [shape = 's32[1]{0}', space=sflag, size = 0x4, scoped, tag = 'scoped memory for bert_forward.1']
    #allocation13 [shape = 'u8[12288]{0}', space=vmem, size = 0x3000, scoped, tag = 'input window, operand 11, single buffered']
    #allocation14 [shape = 'u8[32768]{0}', space=vmem, size = 0x8000, scoped, tag = 'input window, operand 12, single buffered']
    #allocation15 [shape = 's32[1]{0}', space=sflag, size = 0x4, scoped, tag = 'scoped memory for bert_forward.1']
    #allocation16 [shape = 'u8[32768]{0}', space=vmem, size = 0x8000, scoped, tag = 'input window, operand 13, single buffered']
    %20 = vsyncpa [#allocation4], 0
    %21 = vsyncpa [#allocation6], 0
    %22 = vsyncpa [#allocation9], 0
    %23 = vsyncpa [#allocation12], 0
    %24 = vsyncpa [#allocation15], 0
    // Predicated region
    $region2: #{bert_forward.1} parent=1 // pred_check
      _
    $region3: #{bert_forward.1} parent=1 // pred_check_branch
      %26 = sbr.rel (0) target = $region5
    $region4: #{bert_forward.1} parent=1 // pred_region
      _
    $region5: #{bert_forward.1} parent=1 // pred_fallthru
      _
    // Predicated region
    $region6: #{bert_forward.1} parent=1 // pred_check
      _
    $region7: #{bert_forward.1} parent=1 // pred_check_branch
      %28 = sbr.rel (0) target = $region9
    $region8: #{bert_forward.1} parent=1 // pred_region
      _
    $region9: #{bert_forward.1} parent=1 // pred_fallthru
      _
    // Predicated region
    $region10: #{bert_forward.1} parent=1 // pred_check
      _
    $region11: #{bert_forward.1} parent=1 // pred_check_branch
      %30 = sbr.rel (0) target = $region13
    $region12: #{bert_forward.1} parent=1 // pred_region
      _
    $region13: #{bert_forward.1} parent=1 // pred_fallthru
      _
    // Predicated region
    $region14: #{bert_forward.1} parent=1 // pred_check
      _
    $region15: #{bert_forward.1} parent=1 // pred_check_branch
      %32 = sbr.rel (0) target = $region17
    $region16: #{bert_forward.1} parent=1 // pred_region
      %s34 = ssub.s32 1024, 1024
      %35 = vsyncadd [#allocation4], %s34
      %s36 = sshll.u32 [#allocation3], 4
      %s37 = int_to_ptr.vmem [resolvable:$true] %s36
      %42 = dma.hbm_to_vmem [thread:$0]  %s3, 1024, %s37, [#allocation4], 64, 64, 4
    $region17: #{bert_forward.1} parent=1 // pred_fallthru
      _
    // Predicated region
    $region18: #{bert_forward.1} parent=1 // pred_check
      _
    $region19: #{bert_forward.1} parent=1 // pred_check_branch
      %44 = sbr.rel (0) target = $region21
    $region20: #{bert_forward.1} parent=1 // pred_region
      _
    $region21: #{bert_forward.1} parent=1 // pred_fallthru
      _
    // Predicated region
    $region22: #{bert_forward.1} parent=1 // pred_check
      _
    $region23: #{bert_forward.1} parent=1 // pred_check_branch
      %46 = sbr.rel (0) target = $region25
    $region24: #{bert_forward.1} parent=1 // pred_region
      %s48 = ssub.s32 2048, 2048
      %49 = vsyncadd [#allocation6], %s48
      %s50 = sshll.u32 [#allocation5], 4
      %s51 = int_to_ptr.vmem [resolvable:$true] %s50
      %56 = dma.hbm_to_vmem [thread:$0]  %s5, 2048, %s51, [#allocation6], 64, 64, 4
    $region25: #{bert_forward.1} parent=1 // pred_fallthru
      _
    // Predicated region
    $region26: #{bert_forward.1} parent=1 // pred_check
      _
    $region27: #{bert_forward.1} parent=1 // pred_check_branch
      %58 = sbr.rel (0) target = $region29
    $region28: #{bert_forward.1} parent=1 // pred_region
      _
    $region29: #{bert_forward.1} parent=1 // pred_fallthru
      _
    // Predicated region
    $region30: #{bert_forward.1} parent=1 // pred_check
      _
    $region31: #{bert_forward.1} parent=1 // pred_check_branch
      %60 = sbr.rel (0) target = $region33
    $region32: #{bert_forward.1} parent=1 // pred_region
      %s62 = ssub.s32 3072, 3072
      %63 = vsyncadd [#allocation6], %s62
      %s64 = sshll.u32 [#allocation7], 4
      %s65 = int_to_ptr.vmem [resolvable:$true] %s64
      %70 = dma.hbm_to_vmem [thread:$0]  %s7, 3072, %s65, [#allocation6], 192, 192, 12
    $region33: #{bert_forward.1} parent=1 // pred_fallthru
      _
    // Predicated region
    $region34: #{bert_forward.1} parent=1 // pred_check
      _
    $region35: #{bert_forward.1} parent=1 // pred_check_branch
      %72 = sbr.rel (0) target = $region37
    $region36: #{bert_forward.1} parent=1 // pred_region
      %s74 = ssub.s32 1024, 1024
      %75 = vsyncadd [#allocation9], %s74
      %s76 = sshll.u32 [#allocation8], 4
      %s77 = int_to_ptr.vmem [resolvable:$true] %s76
      %82 = dma.hbm_to_vmem [thread:$0]  %s8, 1024, %s77, [#allocation9], 64, 64, 4
    $region37: #{bert_forward.1} parent=1 // pred_fallthru
      _
    // Predicated region
    $region38: #{bert_forward.1} parent=1 // pred_check
      _
    $region39: #{bert_forward.1} parent=1 // pred_check_branch
      %84 = sbr.rel (0) target = $region41
    $region40: #{bert_forward.1} parent=1 // pred_region
      %s86 = ssub.s32 2048, 2048
      %87 = vsyncadd [#allocation9], %s86
      %s88 = sshll.u32 [#allocation10], 4
      %s89 = int_to_ptr.vmem [resolvable:$true] %s88
      %94 = dma.hbm_to_vmem [thread:$0]  %s9, 2048, %s89, [#allocation9], 128, 128, 8
    $region41: #{bert_forward.1} parent=1 // pred_fallthru
      _
    // Predicated region
    $region42: #{bert_forward.1} parent=1 // pred_check
      _
    $region43: #{bert_forward.1} parent=1 // pred_check_branch
      %96 = sbr.rel (0) target = $region45
    $region44: #{bert_forward.1} parent=1 // pred_region
      %s98 = ssub.s32 2048, 2048
      %99 = vsyncadd [#allocation12], %s98
      %s100 = sshll.u32 [#allocation11], 4
      %s101 = int_to_ptr.vmem [resolvable:$true] %s100
      %106 = dma.hbm_to_vmem [thread:$0]  %s10, 2048, %s101, [#allocation12], 64, 64, 4
    $region45: #{bert_forward.1} parent=1 // pred_fallthru
      _
    // Predicated region
    $region46: #{bert_forward.1} parent=1 // pred_check
      _
    $region47: #{bert_forward.1} parent=1 // pred_check_branch
      %108 = sbr.rel (0) target = $region49
    $region48: #{bert_forward.1} parent=1 // pred_region
      %s110 = ssub.s32 384, 384
      %111 = vsyncadd [#allocation12], %s110
      %s113 = sshll.u32 [#allocation13], 4
      %s114 = int_to_ptr.vmem [resolvable:$true] %s113
      %116 = dma.hbm_to_vmem [thread:$0]  %s11, 384, %s114, [#allocation12]
    $region49: #{bert_forward.1} parent=1 // pred_fallthru
      _
    // Predicated region
    $region50: #{bert_forward.1} parent=1 // pred_check
      _
    $region51: #{bert_forward.1} parent=1 // pred_check_branch
      %118 = sbr.rel (0) target = $region53
    $region52: #{bert_forward.1} parent=1 // pred_region
      %s120 = ssub.s32 1024, 1024
      %121 = vsyncadd [#allocation15], %s120
      %s122 = sshll.u32 [#allocation14], 4
      %s123 = int_to_ptr.vmem [resolvable:$true] %s122
      %128 = dma.hbm_to_vmem [thread:$0]  %s12, 1024, %s123, [#allocation15], 64, 64, 4
    $region53: #{bert_forward.1} parent=1 // pred_fallthru
      _
    // Predicated region
    $region54: #{bert_forward.1} parent=1 // pred_check
      _
    $region55: #{bert_forward.1} parent=1 // pred_check_branch
      %130 = sbr.rel (0) target = $region57
    $region56: #{bert_forward.1} parent=1 // pred_region
      %s132 = ssub.s32 1024, 1024
      %133 = vsyncadd [#allocation15], %s132
      %s134 = sshll.u32 [#allocation16], 4
      %s135 = int_to_ptr.vmem [resolvable:$true] %s134
      %140 = dma.hbm_to_vmem [thread:$0]  %s13, 1024, %s135, [#allocation15], 64, 64, 4
    $region57: #{bert_forward.1} parent=1 // pred_fallthru
      _
    // Predicated region
    $region58: #{bert_forward.1} parent=1 // pred_check
      _
    $region59: #{bert_forward.1} parent=1 // pred_check_branch
      %142 = sbr.rel (0) target = $region61
    $region60: #{bert_forward.1} parent=1 // pred_region
      _
    $region61: #{bert_forward.1} parent=1 // pred_fallthru
      _
    // Predicated region
    $region62: #{bert_forward.1} parent=1 // pred_check
      _
    $region63: #{bert_forward.1} parent=1 // pred_check_branch
      %144 = sbr.rel (0) target = $region65
    $region64: #{bert_forward.1} parent=1 // pred_region
      %145 = dma.done [#allocation4], 1024
    $region65: #{bert_forward.1} parent=1 // pred_fallthru
      _
    // Predicated region
    $region66: #{bert_forward.1} parent=1 // pred_check
      _
    $region67: #{bert_forward.1} parent=1 // pred_check_branch
      %147 = sbr.rel (0) target = $region69
    $region68: #{bert_forward.1} parent=1 // pred_region
      %148 = dma.done [#allocation6], 2048
    $region69: #{bert_forward.1} parent=1 // pred_fallthru
      _
    // Predicated region
    $region70: #{bert_forward.1} parent=1 // pred_check
      _
    $region71: #{bert_forward.1} parent=1 // pred_check_branch
      %150 = sbr.rel (0) target = $region73
    $region72: #{bert_forward.1} parent=1 // pred_region
      %151 = dma.done [#allocation6], 3072
    $region73: #{bert_forward.1} parent=1 // pred_fallthru
      _
    // Predicated region
    $region74: #{bert_forward.1} parent=1 // pred_check
      _
    $region75: #{bert_forward.1} parent=1 // pred_check_branch
      %153 = sbr.rel (0) target = $region77
    $region76: #{bert_forward.1} parent=1 // pred_region
      %154 = dma.done [#allocation9], 1024
    $region77: #{bert_forward.1} parent=1 // pred_fallthru
      _
    // Predicated region
    $region78: #{bert_forward.1} parent=1 // pred_check
      _
    $region79: #{bert_forward.1} parent=1 // pred_check_branch
      %156 = sbr.rel (0) target = $region81
    $region80: #{bert_forward.1} parent=1 // pred_region
      %157 = dma.done [#allocation9], 2048
    $region81: #{bert_forward.1} parent=1 // pred_fallthru
      _
    // Predicated region
    $region82: #{bert_forward.1} parent=1 // pred_check
      _
    $region83: #{bert_forward.1} parent=1 // pred_check_branch
      %159 = sbr.rel (0) target = $region85
    $region84: #{bert_forward.1} parent=1 // pred_region
      %160 = dma.done [#allocation12], 2048
    $region85: #{bert_forward.1} parent=1 // pred_fallthru
      _
    // Predicated region
    $region86: #{bert_forward.1} parent=1 // pred_check
      _
    $region87: #{bert_forward.1} parent=1 // pred_check_branch
      %162 = sbr.rel (0) target = $region89
    $region88: #{bert_forward.1} parent=1 // pred_region
      %163 = dma.done [#allocation12], 384
    $region89: #{bert_forward.1} parent=1 // pred_fallthru
      _
    // Predicated region
    $region90: #{bert_forward.1} parent=1 // pred_check
      _
    $region91: #{bert_forward.1} parent=1 // pred_check_branch
      %165 = sbr.rel (0) target = $region93
    $region92: #{bert_forward.1} parent=1 // pred_region
      %166 = dma.done [#allocation15], 1024
    $region93: #{bert_forward.1} parent=1 // pred_fallthru
      _
    // Predicated region
    $region94: #{bert_forward.1} parent=1 // pred_check
      _
    $region95: #{bert_forward.1} parent=1 // pred_check_branch
      %168 = sbr.rel (0) target = $region97
    $region96: #{bert_forward.1} parent=1 // pred_region
      %169 = dma.done [#allocation15], 1024
    $region97: #{bert_forward.1} parent=1 // pred_fallthru
      _
    %v171 = vld [vmem:[%s14] sm:$0xf]
    %v172 = vld [vmem:[%s1] sm:$0xff]
    %v173 = vld [vmem:[%s1 + $0x8] sm:$0xff]
    %v174 = vld [vmem:[%s0] sm:$0xff]
    %v175 = vld [vmem:[%s0 + $0x8] sm:$0xff]
    %176 = vadd.xlane.f32.xlu0 %v174
    %v177 = vpop.xlane.xlu0 %176
    %178 = vadd.xlane.f32.xlu0 %v175
    %v179 = vpop.xlane.xlu0 %178
    %v180 = vrcp.pop 128.0
    %v181 = vmul.f32 %v177, %v180
    %v182 = vmul.f32 %v179, %v180
    %v183 = vsub.f32 %v174, %v181
    %v184 = vsub.f32 %v175, %v182
    %v185 = vmul.f32 %v183, %v183
    %v186 = vmul.f32 %v184, %v184
    %187 = vadd.xlane.f32.xlu0 %v185
    %v188 = vpop.xlane.xlu0 %187
    %189 = vadd.xlane.f32.xlu0 %v186
    %v190 = vpop.xlane.xlu0 %189
    %v191 = vmul.f32 %v188, %v180
    %v192 = vmul.f32 %v190, %v180
    %v193 = vadd.f32 %v191, 1e-12
    %v194 = vadd.f32 %v192, 1e-12
    %v195 = vrsqrt.pop %v193
    %v196 = vrsqrt.pop %v194
    %v197 = vmul.f32 %v183, %v195
    %v198 = vmul.f32 %v184, %v196
    %v199 = vlaneseq
    %v200 = vshrl.u32 %v199, 7
    %v201 = vsub.s32 0, %v200
    %v202 = vrot.slane %v171, %v201
    %v203 = vmul.f32 %v197, %v202
    %v204 = vmul.f32 %v198, %v202
    %v205 = vlaneseq
    %v206 = vshrl.u32 %v205, 7
    %v207 = vsub.s32 1, %v206
    %v208 = vrot.slane %v171, %v207
    %v209 = vadd.f32 %v203, %v208
    %v210 = vadd.f32 %v204, %v208
    %v211 = vld [vmem:[%s6] sm:$0xff]
    %v212 = vld [vmem:[%s6 + $0x8] sm:$0xff]
    %v213 = vld [vmem:[%s6 + $0x10] sm:$0xff]
    %v214 = vpack.c.bf16 %v210, %v209
    %v215 = vld [vmem:[%s2] sm:$0xff]
    %v216 = vld [vmem:[%s2 + $0x8] sm:$0xf]
    %v217 = vld [vmem:[%s2 + $0xc] sm:$0xff]
    %v218 = vld [vmem:[%s2 + $0x14] sm:$0xf]
    %v219 = vld [vmem:[%s2 + $0x18] sm:$0xff]
    %v220 = vld [vmem:[%s2 + $0x20] sm:$0xf]
    %v221 = vld [vmem:[%s2 + $0x24] sm:$0xff]
    %v222 = vld [vmem:[%s2 + $0x2c] sm:$0xf]
    %v223 = vld [vmem:[%s2 + $0x30] sm:$0xff]
    %v224 = vld [vmem:[%s2 + $0x38] sm:$0xf]
    %v225 = vld [vmem:[%s2 + $0x3c] sm:$0xff]
    %v226 = vld [vmem:[%s2 + $0x44] sm:$0xf]
    %v227 = vld [vmem:[%s2 + $0x48] sm:$0xff]
    %v228 = vld [vmem:[%s2 + $0x50] sm:$0xf]
    %v229 = vld [vmem:[%s2 + $0x54] sm:$0xff]
    %v230 = vld [vmem:[%s2 + $0x5c] sm:$0xf]
    %v231 = vld [vmem:[%s2 + $0x60] sm:$0xff]
    %v232 = vld [vmem:[%s2 + $0x68] sm:$0xf]
    %v233 = vld [vmem:[%s2 + $0x6c] sm:$0xff]
    %v234 = vld [vmem:[%s2 + $0x74] sm:$0xf]
    %v235 = vld [vmem:[%s2 + $0x78] sm:$0xff]
    %v236 = vld [vmem:[%s2 + $0x80] sm:$0xf]
    %v237 = vld [vmem:[%s2 + $0x84] sm:$0xff]
    %v238 = vld [vmem:[%s2 + $0x8c] sm:$0xf]
    %v239 = vld [vmem:[%s2 + $0x90] sm:$0xff]
    %v240 = vld [vmem:[%s2 + $0x98] sm:$0xf]
    %v241 = vld [vmem:[%s2 + $0x9c] sm:$0xff]
    %v242 = vld [vmem:[%s2 + $0xa4] sm:$0xf]
    %v243 = vld [vmem:[%s2 + $0xa8] sm:$0xff]
    %v244 = vld [vmem:[%s2 + $0xb0] sm:$0xf]
    %v245 = vld [vmem:[%s2 + $0xb4] sm:$0xff]
    %v246 = vld [vmem:[%s2 + $0xbc] sm:$0xf]
    %v247 = vlaneseq
    %v248 = vshrl.u32 %v247, 7
    %v249 = vsub.s32 0, %v248
    %v250 = vrot.slane %v211, %v249
    %v251 = vlaneseq
    %v252 = vshrl.u32 %v251, 7
    %v253 = vsub.s32 0, %v252
    %v254 = vrot.slane %v212, %v253
    %v255 = vlaneseq
    %v256 = vshrl.u32 %v255, 7
    %v257 = vsub.s32 0, %v256
    %v258 = vrot.slane %v213, %v257
    %v291 = vunpack.c.l.b16 %v215
    %v292 = vunpack.c.h.b16 %v215
    %v293 = vunpack.c.l.b16 %v216
    %v294 = vunpack.c.l.b16 %v217
    %v295 = vunpack.c.h.b16 %v217
    %v296 = vunpack.c.l.b16 %v218
    %v297 = vunpack.c.l.b16 %v219
    %v298 = vunpack.c.h.b16 %v219
    %v299 = vunpack.c.l.b16 %v220
    %v300 = vunpack.c.l.b16 %v221
    %v301 = vunpack.c.h.b16 %v221
    %v302 = vunpack.c.l.b16 %v222
    %v303 = vunpack.c.l.b16 %v223
    %v304 = vunpack.c.h.b16 %v223
    %v305 = vunpack.c.l.b16 %v224
    %v306 = vunpack.c.l.b16 %v225
    %v307 = vunpack.c.h.b16 %v225
    %v308 = vunpack.c.l.b16 %v226
    %v309 = vunpack.c.l.b16 %v227
    %v310 = vunpack.c.h.b16 %v227
    %v311 = vunpack.c.l.b16 %v228
    %v312 = vunpack.c.l.b16 %v229
    %v313 = vunpack.c.h.b16 %v229
    %v314 = vunpack.c.l.b16 %v230
    %v315 = vunpack.c.l.b16 %v231
    %v316 = vunpack.c.h.b16 %v231
    %v317 = vunpack.c.l.b16 %v232
    %v318 = vunpack.c.l.b16 %v233
    %v319 = vunpack.c.h.b16 %v233
    %v320 = vunpack.c.l.b16 %v234
    %v321 = vunpack.c.l.b16 %v235
    %v322 = vunpack.c.h.b16 %v235
    %v323 = vunpack.c.l.b16 %v236
    %v324 = vunpack.c.l.b16 %v237
    %v325 = vunpack.c.h.b16 %v237
    %v326 = vunpack.c.l.b16 %v238
    %v327 = vunpack.c.l.b16 %v239
    %v328 = vunpack.c.h.b16 %v239
    %v329 = vunpack.c.l.b16 %v240
    %v330 = vunpack.c.l.b16 %v241
    %v331 = vunpack.c.h.b16 %v241
    %v332 = vunpack.c.l.b16 %v242
    %v333 = vunpack.c.l.b16 %v243
    %v334 = vunpack.c.h.b16 %v243
    %v335 = vunpack.c.l.b16 %v244
    %v336 = vunpack.c.l.b16 %v245
    %v337 = vunpack.c.h.b16 %v245
    %v338 = vunpack.c.l.b16 %v246
    %v339 = vpack.c.b16 %v294, %v291
    %v340 = vpack.c.b16 %v295, %v292
    %v341 = vpack.c.b16 %v296, %v293
    %v342 = vpack.c.b16 %v300, %v297
    %v343 = vpack.c.b16 %v301, %v298
    %v344 = vpack.c.b16 %v302, %v299
    %v345 = vpack.c.b16 %v306, %v303
    %v346 = vpack.c.b16 %v307, %v304
    %v347 = vpack.c.b16 %v308, %v305
    %v348 = vpack.c.b16 %v312, %v309
    %v349 = vpack.c.b16 %v313, %v310
    %v350 = vpack.c.b16 %v314, %v311
    %v351 = vpack.c.b16 %v318, %v315
    %v352 = vpack.c.b16 %v319, %v316
    %v353 = vpack.c.b16 %v320, %v317
    %v354 = vpack.c.b16 %v324, %v321
    %v355 = vpack.c.b16 %v325, %v322
    %v356 = vpack.c.b16 %v326, %v323
    %v357 = vpack.c.b16 %v330, %v327
    %v358 = vpack.c.b16 %v331, %v328
    %v359 = vpack.c.b16 %v332, %v329
    %v360 = vpack.c.b16 %v336, %v333
    %v361 = vpack.c.b16 %v337, %v334
    %v362 = vpack.c.b16 %v338, %v335
    %387 = vmatprep.subr.bf16.mxu0 %v340
    %388 = vmatpush1.bf16.msra.mxu0 %v339
    %389 = vmatprep.subr.bf16.mxu0 %v343
    %390 = vmatpush1.bf16.msra.mxu0 %v342
    %391 = vmatprep.subr.bf16.mxu0 %v346
    %392 = vmatpush1.bf16.msra.mxu0 %v345
    %393 = vmatprep.subr.bf16.mxu0 %v349
    %394 = vmatpush1.bf16.msra.mxu0 %v348
    %395 = vmatprep.subr.bf16.mxu0 %v352
    %396 = vmatpush1.bf16.msra.mxu0 %v351
    %397 = vmatprep.subr.bf16.mxu0 %v355
    %398 = vmatpush1.bf16.msra.mxu0 %v354
    %399 = vmatprep.subr.bf16.mxu0 %v358
    %400 = vmatpush1.bf16.msra.mxu0 %v357
    %401 = vmatprep.subr.bf16.mxu0 %v361
    %402 = vmatpush1.bf16.msra.mxu0 %v360
    %403 = vmatprep.subr.bf16.mxu0 0
    %404 = vmatpush1.bf16.msra.mxu0 0
    %405 = vmatprep.subr.bf16.mxu0 0
    %406 = vmatpush1.bf16.msra.mxu0 0
    %407 = vmatprep.subr.bf16.mxu0 0
    %408 = vmatpush1.bf16.msra.mxu0 0
    %409 = vmatprep.subr.bf16.mxu0 0
    %410 = vmatpush1.bf16.msra.mxu0 0
    %411 = vmatprep.subr.bf16.mxu0 0
    %412 = vmatpush1.bf16.msra.mxu0 0
    %413 = vmatprep.subr.bf16.mxu0 0
    %414 = vmatpush1.bf16.msra.mxu0 0
    %415 = vmatprep.subr.bf16.mxu0 0
    %416 = vmatpush1.bf16.msra.mxu0 0
    %417 = vmatprep.subr.bf16.mxu0 0
    %418 = vmatpush1.bf16.msra.mxu0 0
    %419 = vmatprep.mubr.bf16.mxu0 0
    %420 = vmatmul.mubr.bf16.gmra.mrb[0].mxu0 %v214
    %v421 = vpop.f32.mrb[0].mxu0
    %v422 = vadd.f32 %v250, %v421
    %v423 = vpop.f32.mrb[0].mxu0
    %v424 = vadd.f32 %v254, %v423
    %v425 = vpop.f32.mrb[0].mxu0
    %v426 = vadd.f32 %v250, %v425
    %v427 = vpop.f32.mrb[0].mxu0
    %v428 = vadd.f32 %v254, %v427
    %429 = vdwg.mxu0
    %430 = vmatprep.subr.bf16.mxu0 0
    %431 = vmatpush1.bf16.msra.mxu0 %v341
    %432 = vmatprep.subr.bf16.mxu0 0
    %433 = vmatpush1.bf16.msra.mxu0 %v344
    %434 = vmatprep.subr.bf16.mxu0 0
    %435 = vmatpush1.bf16.msra.mxu0 %v347
    %436 = vmatprep.subr.bf16.mxu0 0
    %437 = vmatpush1.bf16.msra.mxu0 %v350
    %438 = vmatprep.subr.bf16.mxu0 0
    %439 = vmatpush1.bf16.msra.mxu0 %v353
    %440 = vmatprep.subr.bf16.mxu0 0
    %441 = vmatpush1.bf16.msra.mxu0 %v356
    %442 = vmatprep.subr.bf16.mxu0 0
    %443 = vmatpush1.bf16.msra.mxu0 %v359
    %444 = vmatprep.subr.bf16.mxu0 0
    %445 = vmatpush1.bf16.msra.mxu0 %v362
    %446 = vmatprep.subr.bf16.mxu0 0
    %447 = vmatpush1.bf16.msra.mxu0 0
    %448 = vmatprep.subr.bf16.mxu0 0
    %449 = vmatpush1.bf16.msra.mxu0 0
    %450 = vmatprep.subr.bf16.mxu0 0
    %451 = vmatpush1.bf16.msra.mxu0 0
    %452 = vmatprep.subr.bf16.mxu0 0
    %453 = vmatpush1.bf16.msra.mxu0 0
    %454 = vmatprep.subr.bf16.mxu0 0
    %455 = vmatpush1.bf16.msra.mxu0 0
    %456 = vmatprep.subr.bf16.mxu0 0
    %457 = vmatpush1.bf16.msra.mxu0 0
    %458 = vmatprep.subr.bf16.mxu0 0
    %459 = vmatpush1.bf16.msra.mxu0 0
    %460 = vmatprep.subr.bf16.mxu0 0
    %461 = vmatpush1.bf16.msra.mxu0 0
    %462 = vmatprep.mubr.bf16.mxu0 0
    %463 = vmatmul.mubr.bf16.gmra.mrb[0].mxu0 %v214
    %v464 = vpop.f32.mrb[0].mxu0
    %v465 = vadd.f32 %v258, %v464
    %v466 = vpop.f32.mrb[0].mxu0
    %v467 = vpop.f32.mrb[0].mxu0
    %v468 = vadd.f32 %v258, %v467
    %v469 = vpop.f32.mrb[0].mxu0
    %470 = vdwg.mxu0
    %v471 = vpack.c.bf16 %v422, %v422
    %v472 = vpack.c.bf16 %v426, %v426
    %v473 = vpack.c.bf16 %v424, %v424
    %v474 = vpack.c.bf16 %v428, %v428
    %v475 = vpack.c.bf16 %v465, %v465
    %v476 = vpack.c.bf16 %v468, %v468
    %vm477 = vcmask 261120
    %v479 = vsel %vm477, %v471, 0
    %v482 = vsel %vm477, %v473, 0
    %484 = vmatprep.subr.bf16.mxu0 0
    %485 = vmatpush1.bf16.xpose.msra.mxu0 %v482
    %486 = vmatprep.subr.bf16.mxu0 0
    %487 = vmatpush1.bf16.xpose.msra.mxu0 0
    %488 = vmatprep.subr.bf16.mxu0 0
    %489 = vmatpush1.bf16.xpose.msra.mxu0 0
    %490 = vmatprep.subr.bf16.mxu0 0
    %491 = vmatpush1.bf16.xpose.msra.mxu0 0
    %492 = vmatprep.subr.bf16.mxu0 0
    %493 = vmatpush1.bf16.xpose.msra.mxu0 0
    %494 = vmatprep.subr.bf16.mxu0 0
    %495 = vmatpush1.bf16.xpose.msra.mxu0 0
    %496 = vmatprep.subr.bf16.mxu0 0
    %497 = vmatpush1.bf16.xpose.msra.mxu0 0
    %498 = vmatprep.subr.bf16.mxu0 0
    %499 = vmatpush1.bf16.xpose.msra.mxu0 0
    %500 = vmatprep.subr.bf16.mxu0 0
    %501 = vmatpush1.bf16.xpose.msra.mxu0 0
    %502 = vmatprep.subr.bf16.mxu0 0
    %503 = vmatpush1.bf16.xpose.msra.mxu0 0
    %504 = vmatprep.subr.bf16.mxu0 0
    %505 = vmatpush1.bf16.xpose.msra.mxu0 0
    %506 = vmatprep.subr.bf16.mxu0 0
    %507 = vmatpush1.bf16.xpose.msra.mxu0 0
    %508 = vmatprep.subr.bf16.mxu0 0
    %509 = vmatpush1.bf16.xpose.msra.mxu0 0
    %510 = vmatprep.subr.bf16.mxu0 0
    %511 = vmatpush1.bf16.xpose.msra.mxu0 0
    %512 = vmatprep.subr.bf16.mxu0 0
    %513 = vmatpush1.bf16.xpose.msra.mxu0 0
    %514 = vmatprep.subr.bf16.mxu0 0
    %515 = vmatpush1.bf16.xpose.msra.mxu0 0
    %516 = vmatprep.mubr.bf16.mxu0 0
    %517 = vmatmul.mubr.bf16.gmra.mrb[0].mxu0 %v479
    %v518 = vpop.f32.mrb[0].mxu0
    %v519 = vadd.f32 %v172, %v518
    %v520 = vpop.f32.mrb[0].mxu0
    %v521 = vpop.f32.mrb[0].mxu0
    %v522 = vpop.f32.mrb[0].mxu0
    %523 = vdwg.mxu0
    %v525 = vsel %vm477, %v472, 0
    %v528 = vsel %vm477, %v474, 0
    %530 = vmatprep.subr.bf16.mxu0 0
    %531 = vmatpush1.bf16.xpose.msra.mxu0 %v528
    %532 = vmatprep.subr.bf16.mxu0 0
    %533 = vmatpush1.bf16.xpose.msra.mxu0 0
    %534 = vmatprep.subr.bf16.mxu0 0
    %535 = vmatpush1.bf16.xpose.msra.mxu0 0
    %536 = vmatprep.subr.bf16.mxu0 0
    %537 = vmatpush1.bf16.xpose.msra.mxu0 0
    %538 = vmatprep.subr.bf16.mxu0 0
    %539 = vmatpush1.bf16.xpose.msra.mxu0 0
    %540 = vmatprep.subr.bf16.mxu0 0
    %541 = vmatpush1.bf16.xpose.msra.mxu0 0
    %542 = vmatprep.subr.bf16.mxu0 0
    %543 = vmatpush1.bf16.xpose.msra.mxu0 0
    %544 = vmatprep.subr.bf16.mxu0 0
    %545 = vmatpush1.bf16.xpose.msra.mxu0 0
    %546 = vmatprep.subr.bf16.mxu0 0
    %547 = vmatpush1.bf16.xpose.msra.mxu0 0
    %548 = vmatprep.subr.bf16.mxu0 0
    %549 = vmatpush1.bf16.xpose.msra.mxu0 0
    %550 = vmatprep.subr.bf16.mxu0 0
    %551 = vmatpush1.bf16.xpose.msra.mxu0 0
    %552 = vmatprep.subr.bf16.mxu0 0
    %553 = vmatpush1.bf16.xpose.msra.mxu0 0
    %554 = vmatprep.subr.bf16.mxu0 0
    %555 = vmatpush1.bf16.xpose.msra.mxu0 0
    %556 = vmatprep.subr.bf16.mxu0 0
    %557 = vmatpush1.bf16.xpose.msra.mxu0 0
    %558 = vmatprep.subr.bf16.mxu0 0
    %559 = vmatpush1.bf16.xpose.msra.mxu0 0
    %560 = vmatprep.subr.bf16.mxu0 0
    %561 = vmatpush1.bf16.xpose.msra.mxu0 0
    %562 = vmatprep.mubr.bf16.mxu0 0
    %563 = vmatmul.mubr.bf16.gmra.mrb[0].mxu0 %v525
    %v564 = vpop.f32.mrb[0].mxu0
    %v565 = vadd.f32 %v173, %v564
    %v566 = vpop.f32.mrb[0].mxu0
    %v567 = vpop.f32.mrb[0].mxu0
    %v568 = vpop.f32.mrb[0].mxu0
    %569 = vdwg.mxu0
    %vm570 = vcmask 64512
    %v571 = vsel %vm570, %v519, -inf
    %572 = vmax.xlane.f32.xlu0 %v571
    %v573 = vpop.xlane.xlu0 %572
    %v574 = vsel %vm570, %v565, -inf
    %575 = vmax.xlane.f32.xlu0 %v574
    %v576 = vpop.xlane.xlu0 %575
    %v577 = vsub.f32 %v519, %v573
    %v578 = vsub.f32 %v565, %v576
    %v579 = vmul.f32 %v577, 1.442695
    %v580 = vpow.pop %v579
    %v581 = vmul.f32 %v578, 1.442695
    %v582 = vpow.pop %v581
    %v583 = vsel %vm570, %v580, 0.0
    %584 = vadd.xlane.f32.xlu0 %v583
    %v585 = vpop.xlane.xlu0 %584
    %v586 = vsel %vm570, %v582, 0.0
    %587 = vadd.xlane.f32.xlu0 %v586
    %v588 = vpop.xlane.xlu0 %587
    %v589 = vrcp.pop %v585
    %v590 = vrcp.pop %v588
    %v591 = vmul.f32 %v580, %v589
    %v592 = vmul.f32 %v582, %v590
    %v593 = vpack.c.bf16 %v591, %v591
    %v594 = vpack.c.bf16 %v592, %v592
    %v596 = vsel %vm570, %v593, 0
    %vm598 = vcmask 1043456
    %v600 = vsel %vm598, %v475, 0
    %602 = vmatprep.subr.bf16.mxu0 0
    %603 = vmatpush1.bf16.msra.mxu0 %v600
    %604 = vmatprep.subr.bf16.mxu0 0
    %605 = vmatpush1.bf16.msra.mxu0 0
    %606 = vmatprep.subr.bf16.mxu0 0
    %607 = vmatpush1.bf16.msra.mxu0 0
    %608 = vmatprep.subr.bf16.mxu0 0
    %609 = vmatpush1.bf16.msra.mxu0 0
    %610 = vmatprep.subr.bf16.mxu0 0
    %611 = vmatpush1.bf16.msra.mxu0 0
    %612 = vmatprep.subr.bf16.mxu0 0
    %613 = vmatpush1.bf16.msra.mxu0 0
    %614 = vmatprep.subr.bf16.mxu0 0
    %615 = vmatpush1.bf16.msra.mxu0 0
    %616 = vmatprep.subr.bf16.mxu0 0
    %617 = vmatpush1.bf16.msra.mxu0 0
    %618 = vmatprep.subr.bf16.mxu0 0
    %619 = vmatpush1.bf16.msra.mxu0 0
    %620 = vmatprep.subr.bf16.mxu0 0
    %621 = vmatpush1.bf16.msra.mxu0 0
    %622 = vmatprep.subr.bf16.mxu0 0
    %623 = vmatpush1.bf16.msra.mxu0 0
    %624 = vmatprep.subr.bf16.mxu0 0
    %625 = vmatpush1.bf16.msra.mxu0 0
    %626 = vmatprep.subr.bf16.mxu0 0
    %627 = vmatpush1.bf16.msra.mxu0 0
    %628 = vmatprep.subr.bf16.mxu0 0
    %629 = vmatpush1.bf16.msra.mxu0 0
    %630 = vmatprep.subr.bf16.mxu0 0
    %631 = vmatpush1.bf16.msra.mxu0 0
    %632 = vmatprep.subr.bf16.mxu0 0
    %633 = vmatpush1.bf16.msra.mxu0 0
    %634 = vmatprep.mubr.bf16.mxu0 0
    %635 = vmatmul.mubr.bf16.gmra.mrb[0].mxu0 %v596
    %v636 = vpop.f32.mrb[0].mxu0
    %v637 = vadd.f32 0.0, %v636
    %v638 = vpop.f32.mrb[0].mxu0
    %v639 = vpop.f32.mrb[0].mxu0
    %v640 = vpop.f32.mrb[0].mxu0
    %641 = vdwg.mxu0
    %v643 = vsel %vm570, %v594, 0
    %v646 = vsel %vm598, %v476, 0
    %648 = vmatprep.subr.bf16.mxu0 0
    %649 = vmatpush1.bf16.msra.mxu0 %v646
    %650 = vmatprep.subr.bf16.mxu0 0
    %651 = vmatpush1.bf16.msra.mxu0 0
    %652 = vmatprep.subr.bf16.mxu0 0
    %653 = vmatpush1.bf16.msra.mxu0 0
    %654 = vmatprep.subr.bf16.mxu0 0
    %655 = vmatpush1.bf16.msra.mxu0 0
    %656 = vmatprep.subr.bf16.mxu0 0
    %657 = vmatpush1.bf16.msra.mxu0 0
    %658 = vmatprep.subr.bf16.mxu0 0
    %659 = vmatpush1.bf16.msra.mxu0 0
    %660 = vmatprep.subr.bf16.mxu0 0
    %661 = vmatpush1.bf16.msra.mxu0 0
    %662 = vmatprep.subr.bf16.mxu0 0
    %663 = vmatpush1.bf16.msra.mxu0 0
    %664 = vmatprep.subr.bf16.mxu0 0
    %665 = vmatpush1.bf16.msra.mxu0 0
    %666 = vmatprep.subr.bf16.mxu0 0
    %667 = vmatpush1.bf16.msra.mxu0 0
    %668 = vmatprep.subr.bf16.mxu0 0
    %669 = vmatpush1.bf16.msra.mxu0 0
    %670 = vmatprep.subr.bf16.mxu0 0
    %671 = vmatpush1.bf16.msra.mxu0 0
    %672 = vmatprep.subr.bf16.mxu0 0
    %673 = vmatpush1.bf16.msra.mxu0 0
    %674 = vmatprep.subr.bf16.mxu0 0
    %675 = vmatpush1.bf16.msra.mxu0 0
    %676 = vmatprep.subr.bf16.mxu0 0
    %677 = vmatpush1.bf16.msra.mxu0 0
    %678 = vmatprep.subr.bf16.mxu0 0
    %679 = vmatpush1.bf16.msra.mxu0 0
    %680 = vmatprep.mubr.bf16.mxu0 0
    %681 = vmatmul.mubr.bf16.gmra.mrb[0].mxu0 %v643
    %v682 = vpop.f32.mrb[0].mxu0
    %v683 = vadd.f32 0.0, %v682
    %v684 = vpop.f32.mrb[0].mxu0
    %v685 = vpop.f32.mrb[0].mxu0
    %v686 = vpop.f32.mrb[0].mxu0
    %687 = vdwg.mxu0
    %688 = vst.msk [vmem:[#allocation2] sm:$0xff] %vm477, %v637
    %689 = vst.msk [vmem:[#allocation2 + $0x8] sm:$0xff] %vm477, %v683
    %691 = vrot.lane.b32.xlu0 %v471, 96
    %v692 = vpop.permute.xlu0 %691
    %694 = vrot.lane.b32.xlu0 %v473, 96
    %v695 = vpop.permute.xlu0 %694
    %v697 = vsel %vm477, %v692, 0
    %v700 = vsel %vm477, %v695, 0
    %702 = vmatprep.subr.bf16.mxu0 0
    %703 = vmatpush1.bf16.xpose.msra.mxu0 %v700
    %704 = vmatprep.subr.bf16.mxu0 0
    %705 = vmatpush1.bf16.xpose.msra.mxu0 0
    %706 = vmatprep.subr.bf16.mxu0 0
    %707 = vmatpush1.bf16.xpose.msra.mxu0 0
    %708 = vmatprep.subr.bf16.mxu0 0
    %709 = vmatpush1.bf16.xpose.msra.mxu0 0
    %710 = vmatprep.subr.bf16.mxu0 0
    %711 = vmatpush1.bf16.xpose.msra.mxu0 0
    %712 = vmatprep.subr.bf16.mxu0 0
    %713 = vmatpush1.bf16.xpose.msra.mxu0 0
    %714 = vmatprep.subr.bf16.mxu0 0
    %715 = vmatpush1.bf16.xpose.msra.mxu0 0
    %716 = vmatprep.subr.bf16.mxu0 0
    %717 = vmatpush1.bf16.xpose.msra.mxu0 0
    %718 = vmatprep.subr.bf16.mxu0 0
    %719 = vmatpush1.bf16.xpose.msra.mxu0 0
    %720 = vmatprep.subr.bf16.mxu0 0
    %721 = vmatpush1.bf16.xpose.msra.mxu0 0
    %722 = vmatprep.subr.bf16.mxu0 0
    %723 = vmatpush1.bf16.xpose.msra.mxu0 0
    %724 = vmatprep.subr.bf16.mxu0 0
    %725 = vmatpush1.bf16.xpose.msra.mxu0 0
    %726 = vmatprep.subr.bf16.mxu0 0
    %727 = vmatpush1.bf16.xpose.msra.mxu0 0
    %728 = vmatprep.subr.bf16.mxu0 0
    %729 = vmatpush1.bf16.xpose.msra.mxu0 0
    %730 = vmatprep.subr.bf16.mxu0 0
    %731 = vmatpush1.bf16.xpose.msra.mxu0 0
    %732 = vmatprep.subr.bf16.mxu0 0
    %733 = vmatpush1.bf16.xpose.msra.mxu0 0
    %734 = vmatprep.mubr.bf16.mxu0 0
    %735 = vmatmul.mubr.bf16.gmra.mrb[0].mxu0 %v697
    %v736 = vpop.f32.mrb[0].mxu0
    %v737 = vadd.f32 %v172, %v736
    %v738 = vpop.f32.mrb[0].mxu0
    %v739 = vpop.f32.mrb[0].mxu0
    %v740 = vpop.f32.mrb[0].mxu0
    %741 = vdwg.mxu0
    %743 = vrot.lane.b32.xlu0 %v472, 96
    %v744 = vpop.permute.xlu0 %743
    %746 = vrot.lane.b32.xlu0 %v474, 96
    %v747 = vpop.permute.xlu0 %746
    %v749 = vsel %vm477, %v744, 0
    %v752 = vsel %vm477, %v747, 0
    %754 = vmatprep.subr.bf16.mxu0 0
    %755 = vmatpush1.bf16.xpose.msra.mxu0 %v752
    %756 = vmatprep.subr.bf16.mxu0 0
    %757 = vmatpush1.bf16.xpose.msra.mxu0 0
    %758 = vmatprep.subr.bf16.mxu0 0
    %759 = vmatpush1.bf16.xpose.msra.mxu0 0
    %760 = vmatprep.subr.bf16.mxu0 0
    %761 = vmatpush1.bf16.xpose.msra.mxu0 0
    %762 = vmatprep.subr.bf16.mxu0 0
    %763 = vmatpush1.bf16.xpose.msra.mxu0 0
    %764 = vmatprep.subr.bf16.mxu0 0
    %765 = vmatpush1.bf16.xpose.msra.mxu0 0
    %766 = vmatprep.subr.bf16.mxu0 0
    %767 = vmatpush1.bf16.xpose.msra.mxu0 0
    %768 = vmatprep.subr.bf16.mxu0 0
    %769 = vmatpush1.bf16.xpose.msra.mxu0 0
    %770 = vmatprep.subr.bf16.mxu0 0
    %771 = vmatpush1.bf16.xpose.msra.mxu0 0
    %772 = vmatprep.subr.bf16.mxu0 0
    %773 = vmatpush1.bf16.xpose.msra.mxu0 0
    %774 = vmatprep.subr.bf16.mxu0 0
    %775 = vmatpush1.bf16.xpose.msra.mxu0 0
    %776 = vmatprep.subr.bf16.mxu0 0
    %777 = vmatpush1.bf16.xpose.msra.mxu0 0
    %778 = vmatprep.subr.bf16.mxu0 0
    %779 = vmatpush1.bf16.xpose.msra.mxu0 0
    %780 = vmatprep.subr.bf16.mxu0 0
    %781 = vmatpush1.bf16.xpose.msra.mxu0 0
    %782 = vmatprep.subr.bf16.mxu0 0
    %783 = vmatpush1.bf16.xpose.msra.mxu0 0
    %784 = vmatprep.subr.bf16.mxu0 0
    %785 = vmatpush1.bf16.xpose.msra.mxu0 0
    %786 = vmatprep.mubr.bf16.mxu0 0
    %787 = vmatmul.mubr.bf16.gmra.mrb[0].mxu0 %v749
    %v788 = vpop.f32.mrb[0].mxu0
    %v789 = vadd.f32 %v173, %v788
    %v790 = vpop.f32.mrb[0].mxu0
    %v791 = vpop.f32.mrb[0].mxu0
    %v792 = vpop.f32.mrb[0].mxu0
    %793 = vdwg.mxu0
    %v794 = vsel %vm570, %v737, -inf
    %795 = vmax.xlane.f32.xlu0 %v794
    %v796 = vpop.xlane.xlu0 %795
    %v797 = vsel %vm570, %v789, -inf
    %798 = vmax.xlane.f32.xlu0 %v797
    %v799 = vpop.xlane.xlu0 %798
    %v800 = vsub.f32 %v737, %v796
    %v801 = vsub.f32 %v789, %v799
    %v802 = vmul.f32 %v800, 1.442695
    %v803 = vpow.pop %v802
    %v804 = vmul.f32 %v801, 1.442695
    %v805 = vpow.pop %v804
    %v806 = vsel %vm570, %v803, 0.0
    %807 = vadd.xlane.f32.xlu0 %v806
    %v808 = vpop.xlane.xlu0 %807
    %v809 = vsel %vm570, %v805, 0.0
    %810 = vadd.xlane.f32.xlu0 %v809
    %v811 = vpop.xlane.xlu0 %810
    %v812 = vrcp.pop %v808
    %v813 = vrcp.pop %v811
    %v814 = vmul.f32 %v803, %v812
    %v815 = vmul.f32 %v805, %v813
    %v816 = vpack.c.bf16 %v814, %v814
    %v817 = vpack.c.bf16 %v815, %v815
    %819 = vrot.lane.b32.xlu0 %v475, 96
    %v820 = vpop.permute.xlu0 %819
    %v822 = vsel %vm570, %v816, 0
    %v825 = vsel %vm598, %v820, 0
    %827 = vmatprep.subr.bf16.mxu0 0
    %828 = vmatpush1.bf16.msra.mxu0 %v825
    %829 = vmatprep.subr.bf16.mxu0 0
    %830 = vmatpush1.bf16.msra.mxu0 0
    %831 = vmatprep.subr.bf16.mxu0 0
    %832 = vmatpush1.bf16.msra.mxu0 0
    %833 = vmatprep.subr.bf16.mxu0 0
    %834 = vmatpush1.bf16.msra.mxu0 0
    %835 = vmatprep.subr.bf16.mxu0 0
    %836 = vmatpush1.bf16.msra.mxu0 0
    %837 = vmatprep.subr.bf16.mxu0 0
    %838 = vmatpush1.bf16.msra.mxu0 0
    %839 = vmatprep.subr.bf16.mxu0 0
    %840 = vmatpush1.bf16.msra.mxu0 0
    %841 = vmatprep.subr.bf16.mxu0 0
    %842 = vmatpush1.bf16.msra.mxu0 0
    %843 = vmatprep.subr.bf16.mxu0 0
    %844 = vmatpush1.bf16.msra.mxu0 0
    %845 = vmatprep.subr.bf16.mxu0 0
    %846 = vmatpush1.bf16.msra.mxu0 0
    %847 = vmatprep.subr.bf16.mxu0 0
    %848 = vmatpush1.bf16.msra.mxu0 0
    %849 = vmatprep.subr.bf16.mxu0 0
    %850 = vmatpush1.bf16.msra.mxu0 0
    %851 = vmatprep.subr.bf16.mxu0 0
    %852 = vmatpush1.bf16.msra.mxu0 0
    %853 = vmatprep.subr.bf16.mxu0 0
    %854 = vmatpush1.bf16.msra.mxu0 0
    %855 = vmatprep.subr.bf16.mxu0 0
    %856 = vmatpush1.bf16.msra.mxu0 0
    %857 = vmatprep.subr.bf16.mxu0 0
    %858 = vmatpush1.bf16.msra.mxu0 0
    %859 = vmatprep.mubr.bf16.mxu0 0
    %860 = vmatmul.mubr.bf16.gmra.mrb[0].mxu0 %v822
    %v861 = vpop.f32.mrb[0].mxu0
    %v862 = vadd.f32 0.0, %v861
    %v863 = vpop.f32.mrb[0].mxu0
    %v864 = vpop.f32.mrb[0].mxu0
    %v865 = vpop.f32.mrb[0].mxu0
    %866 = vdwg.mxu0
    %868 = vrot.lane.b32.xlu0 %v476, 96
    %v869 = vpop.permute.xlu0 %868
    %v871 = vsel %vm570, %v817, 0
    %v874 = vsel %vm598, %v869, 0
    %876 = vmatprep.subr.bf16.mxu0 0
    %877 = vmatpush1.bf16.msra.mxu0 %v874
    %878 = vmatprep.subr.bf16.mxu0 0
    %879 = vmatpush1.bf16.msra.mxu0 0
    %880 = vmatprep.subr.bf16.mxu0 0
    %881 = vmatpush1.bf16.msra.mxu0 0
    %882 = vmatprep.subr.bf16.mxu0 0
    %883 = vmatpush1.bf16.msra.mxu0 0
    %884 = vmatprep.subr.bf16.mxu0 0
    %885 = vmatpush1.bf16.msra.mxu0 0
    %886 = vmatprep.subr.bf16.mxu0 0
    %887 = vmatpush1.bf16.msra.mxu0 0
    %888 = vmatprep.subr.bf16.mxu0 0
    %889 = vmatpush1.bf16.msra.mxu0 0
    %890 = vmatprep.subr.bf16.mxu0 0
    %891 = vmatpush1.bf16.msra.mxu0 0
    %892 = vmatprep.subr.bf16.mxu0 0
    %893 = vmatpush1.bf16.msra.mxu0 0
    %894 = vmatprep.subr.bf16.mxu0 0
    %895 = vmatpush1.bf16.msra.mxu0 0
    %896 = vmatprep.subr.bf16.mxu0 0
    %897 = vmatpush1.bf16.msra.mxu0 0
    %898 = vmatprep.subr.bf16.mxu0 0
    %899 = vmatpush1.bf16.msra.mxu0 0
    %900 = vmatprep.subr.bf16.mxu0 0
    %901 = vmatpush1.bf16.msra.mxu0 0
    %902 = vmatprep.subr.bf16.mxu0 0
    %903 = vmatpush1.bf16.msra.mxu0 0
    %904 = vmatprep.subr.bf16.mxu0 0
    %905 = vmatpush1.bf16.msra.mxu0 0
    %906 = vmatprep.subr.bf16.mxu0 0
    %907 = vmatpush1.bf16.msra.mxu0 0
    %908 = vmatprep.mubr.bf16.mxu0 0
    %909 = vmatmul.mubr.bf16.gmra.mrb[0].mxu0 %v871
    %v910 = vpop.f32.mrb[0].mxu0
    %v911 = vadd.f32 0.0, %v910
    %v912 = vpop.f32.mrb[0].mxu0
    %v913 = vpop.f32.mrb[0].mxu0
    %v914 = vpop.f32.mrb[0].mxu0
    %915 = vdwg.mxu0
    %918 = vrot.lane.b32.xlu0 %v862, 32
    %v919 = vpop.permute.xlu0 %918
    %920 = vrot.lane.b32.xlu0 %v911, 32
    %v921 = vpop.permute.xlu0 %920
    %vm924 = vcmask 523520
    %925 = vst.msk [vmem:[#allocation2] sm:$0xff] %vm924, %v919
    %926 = vst.msk [vmem:[#allocation2 + $0x8] sm:$0xff] %vm924, %v921
    %927 = vrot.lane.b32.xlu0 %v471, 64
    %v928 = vpop.permute.xlu0 %927
    %929 = vrot.lane.b32.xlu0 %v473, 64
    %v930 = vpop.permute.xlu0 %929
    %v932 = vsel %vm477, %v928, 0
    %v935 = vsel %vm477, %v930, 0
    %937 = vmatprep.subr.bf16.mxu0 0
    %938 = vmatpush1.bf16.xpose.msra.mxu0 %v935
    %939 = vmatprep.subr.bf16.mxu0 0
    %940 = vmatpush1.bf16.xpose.msra.mxu0 0
    %941 = vmatprep.subr.bf16.mxu0 0
    %942 = vmatpush1.bf16.xpose.msra.mxu0 0
    %943 = vmatprep.subr.bf16.mxu0 0
    %944 = vmatpush1.bf16.xpose.msra.mxu0 0
    %945 = vmatprep.subr.bf16.mxu0 0
    %946 = vmatpush1.bf16.xpose.msra.mxu0 0
    %947 = vmatprep.subr.bf16.mxu0 0
    %948 = vmatpush1.bf16.xpose.msra.mxu0 0
    %949 = vmatprep.subr.bf16.mxu0 0
    %950 = vmatpush1.bf16.xpose.msra.mxu0 0
    %951 = vmatprep.subr.bf16.mxu0 0
    %952 = vmatpush1.bf16.xpose.msra.mxu0 0
    %953 = vmatprep.subr.bf16.mxu0 0
    %954 = vmatpush1.bf16.xpose.msra.mxu0 0
    %955 = vmatprep.subr.bf16.mxu0 0
    %956 = vmatpush1.bf16.xpose.msra.mxu0 0
    %957 = vmatprep.subr.bf16.mxu0 0
    %958 = vmatpush1.bf16.xpose.msra.mxu0 0
    %959 = vmatprep.subr.bf16.mxu0 0
    %960 = vmatpush1.bf16.xpose.msra.mxu0 0
    %961 = vmatprep.subr.bf16.mxu0 0
    %962 = vmatpush1.bf16.xpose.msra.mxu0 0
    %963 = vmatprep.subr.bf16.mxu0 0
    %964 = vmatpush1.bf16.xpose.msra.mxu0 0
    %965 = vmatprep.subr.bf16.mxu0 0
    %966 = vmatpush1.bf16.xpose.msra.mxu0 0
    %967 = vmatprep.subr.bf16.mxu0 0
    %968 = vmatpush1.bf16.xpose.msra.mxu0 0
    %969 = vmatprep.mubr.bf16.mxu0 0
    %970 = vmatmul.mubr.bf16.gmra.mrb[0].mxu0 %v932
    %v971 = vpop.f32.mrb[0].mxu0
    %v972 = vadd.f32 %v172, %v971
    %v973 = vpop.f32.mrb[0].mxu0
    %v974 = vpop.f32.mrb[0].mxu0
    %v975 = vpop.f32.mrb[0].mxu0
    %976 = vdwg.mxu0
    %977 = vrot.lane.b32.xlu0 %v472, 64
    %v978 = vpop.permute.xlu0 %977
    %979 = vrot.lane.b32.xlu0 %v474, 64
    %v980 = vpop.permute.xlu0 %979
    %v982 = vsel %vm477, %v978, 0
    %v985 = vsel %vm477, %v980, 0
    %987 = vmatprep.subr.bf16.mxu0 0
    %988 = vmatpush1.bf16.xpose.msra.mxu0 %v985
    %989 = vmatprep.subr.bf16.mxu0 0
    %990 = vmatpush1.bf16.xpose.msra.mxu0 0
    %991 = vmatprep.subr.bf16.mxu0 0
    %992 = vmatpush1.bf16.xpose.msra.mxu0 0
    %993 = vmatprep.subr.bf16.mxu0 0
    %994 = vmatpush1.bf16.xpose.msra.mxu0 0
    %995 = vmatprep.subr.bf16.mxu0 0
    %996 = vmatpush1.bf16.xpose.msra.mxu0 0
    %997 = vmatprep.subr.bf16.mxu0 0
    %998 = vmatpush1.bf16.xpose.msra.mxu0 0
    %999 = vmatprep.subr.bf16.mxu0 0
    %1000 = vmatpush1.bf16.xpose.msra.mxu0 0
    %1001 = vmatprep.subr.bf16.mxu0 0
    %1002 = vmatpush1.bf16.xpose.msra.mxu0 0
    %1003 = vmatprep.subr.bf16.mxu0 0
    %1004 = vmatpush1.bf16.xpose.msra.mxu0 0
    %1005 = vmatprep.subr.bf16.mxu0 0
    %1006 = vmatpush1.bf16.xpose.msra.mxu0 0
    %1007 = vmatprep.subr.bf16.mxu0 0
    %1008 = vmatpush1.bf16.xpose.msra.mxu0 0
    %1009 = vmatprep.subr.bf16.mxu0 0
    %1010 = vmatpush1.bf16.xpose.msra.mxu0 0
    %1011 = vmatprep.subr.bf16.mxu0 0
    %1012 = vmatpush1.bf16.xpose.msra.mxu0 0
    %1013 = vmatprep.subr.bf16.mxu0 0
    %1014 = vmatpush1.bf16.xpose.msra.mxu0 0
    %1015 = vmatprep.subr.bf16.mxu0 0
    %1016 = vmatpush1.bf16.xpose.msra.mxu0 0
    %1017 = vmatprep.subr.bf16.mxu0 0
    %1018 = vmatpush1.bf16.xpose.msra.mxu0 0
    %1019 = vmatprep.mubr.bf16.mxu0 0
    %1020 = vmatmul.mubr.bf16.gmra.mrb[0].mxu0 %v982
    %v1021 = vpop.f32.mrb[0].mxu0
    %v1022 = vadd.f32 %v173, %v1021
    %v1023 = vpop.f32.mrb[0].mxu0
    %v1024 = vpop.f32.mrb[0].mxu0
    %v1025 = vpop.f32.mrb[0].mxu0
    %1026 = vdwg.mxu0
    %v1027 = vsel %vm570, %v972, -inf
    %1028 = vmax.xlane.f32.xlu0 %v1027
    %v1029 = vpop.xlane.xlu0 %1028
    %v1030 = vsel %vm570, %v1022, -inf
    %1031 = vmax.xlane.f32.xlu0 %v1030
    %v1032 = vpop.xlane.xlu0 %1031
    %v1033 = vsub.f32 %v972, %v1029
    %v1034 = vsub.f32 %v1022, %v1032
    %v1035 = vmul.f32 %v1033, 1.442695
    %v1036 = vpow.pop %v1035
    %v1037 = vmul.f32 %v1034, 1.442695
    %v1038 = vpow.pop %v1037
    %v1039 = vsel %vm570, %v1036, 0.0
    %1040 = vadd.xlane.f32.xlu0 %v1039
    %v1041 = vpop.xlane.xlu0 %1040
    %v1042 = vsel %vm570, %v1038, 0.0
    %1043 = vadd.xlane.f32.xlu0 %v1042
    %v1044 = vpop.xlane.xlu0 %1043
    %v1045 = vrcp.pop %v1041
    %v1046 = vrcp.pop %v1044
    %v1047 = vmul.f32 %v1036, %v1045
    %v1048 = vmul.f32 %v1038, %v1046
    %v1049 = vpack.c.bf16 %v1047, %v1047
    %v1050 = vpack.c.bf16 %v1048, %v1048
    %1051 = vrot.lane.b32.xlu0 %v475, 64
    %v1052 = vpop.permute.xlu0 %1051
    %v1054 = vsel %vm570, %v1049, 0
    %v1057 = vsel %vm598, %v1052, 0
    %1059 = vmatprep.subr.bf16.mxu0 0
    %1060 = vmatpush1.bf16.msra.mxu0 %v1057
    %1061 = vmatprep.subr.bf16.mxu0 0
    %1062 = vmatpush1.bf16.msra.mxu0 0
    %1063 = vmatprep.subr.bf16.mxu0 0
    %1064 = vmatpush1.bf16.msra.mxu0 0
    %1065 = vmatprep.subr.bf16.mxu0 0
    %1066 = vmatpush1.bf16.msra.mxu0 0
    %1067 = vmatprep.subr.bf16.mxu0 0
    %1068 = vmatpush1.bf16.msra.mxu0 0
    %1069 = vmatprep.subr.bf16.mxu0 0
    %1070 = vmatpush1.bf16.msra.mxu0 0
    %1071 = vmatprep.subr.bf16.mxu0 0
    %1072 = vmatpush1.bf16.msra.mxu0 0
    %1073 = vmatprep.subr.bf16.mxu0 0
    %1074 = vmatpush1.bf16.msra.mxu0 0
    %1075 = vmatprep.subr.bf16.mxu0 0
    %1076 = vmatpush1.bf16.msra.mxu0 0
    %1077 = vmatprep.subr.bf16.mxu0 0
    %1078 = vmatpush1.bf16.msra.mxu0 0
    %1079 = vmatprep.subr.bf16.mxu0 0
    %1080 = vmatpush1.bf16.msra.mxu0 0
    %1081 = vmatprep.subr.bf16.mxu0 0
    %1082 = vmatpush1.bf16.msra.mxu0 0
    %1083 = vmatprep.subr.bf16.mxu0 0
    %1084 = vmatpush1.bf16.msra.mxu0 0
    %1085 = vmatprep.subr.bf16.mxu0 0
    %1086 = vmatpush1.bf16.msra.mxu0 0
    %1087 = vmatprep.subr.bf16.mxu0 0
    %1088 = vmatpush1.bf16.msra.mxu0 0
    %1089 = vmatprep.subr.bf16.mxu0 0
    %1090 = vmatpush1.bf16.msra.mxu0 0
    %1091 = vmatprep.mubr.bf16.mxu0 0
    %1092 = vmatmul.mubr.bf16.gmra.mrb[0].mxu0 %v1054
    %v1093 = vpop.f32.mrb[0].mxu0
    %v1094 = vadd.f32 0.0, %v1093
    %v1095 = vpop.f32.mrb[0].mxu0
    %v1096 = vpop.f32.mrb[0].mxu0
    %v1097 = vpop.f32.mrb[0].mxu0
    %1098 = vdwg.mxu0
    %1099 = vrot.lane.b32.xlu0 %v476, 64
    %v1100 = vpop.permute.xlu0 %1099
    %v1102 = vsel %vm570, %v1050, 0
    %v1105 = vsel %vm598, %v1100, 0
    %1107 = vmatprep.subr.bf16.mxu0 0
    %1108 = vmatpush1.bf16.msra.mxu0 %v1105
    %1109 = vmatprep.subr.bf16.mxu0 0
    %1110 = vmatpush1.bf16.msra.mxu0 0
    %1111 = vmatprep.subr.bf16.mxu0 0
    %1112 = vmatpush1.bf16.msra.mxu0 0
    %1113 = vmatprep.subr.bf16.mxu0 0
    %1114 = vmatpush1.bf16.msra.mxu0 0
    %1115 = vmatprep.subr.bf16.mxu0 0
    %1116 = vmatpush1.bf16.msra.mxu0 0
    %1117 = vmatprep.subr.bf16.mxu0 0
    %1118 = vmatpush1.bf16.msra.mxu0 0
    %1119 = vmatprep.subr.bf16.mxu0 0
    %1120 = vmatpush1.bf16.msra.mxu0 0
    %1121 = vmatprep.subr.bf16.mxu0 0
    %1122 = vmatpush1.bf16.msra.mxu0 0
    %1123 = vmatprep.subr.bf16.mxu0 0
    %1124 = vmatpush1.bf16.msra.mxu0 0
    %1125 = vmatprep.subr.bf16.mxu0 0
    %1126 = vmatpush1.bf16.msra.mxu0 0
    %1127 = vmatprep.subr.bf16.mxu0 0
    %1128 = vmatpush1.bf16.msra.mxu0 0
    %1129 = vmatprep.subr.bf16.mxu0 0
    %1130 = vmatpush1.bf16.msra.mxu0 0
    %1131 = vmatprep.subr.bf16.mxu0 0
    %1132 = vmatpush1.bf16.msra.mxu0 0
    %1133 = vmatprep.subr.bf16.mxu0 0
    %1134 = vmatpush1.bf16.msra.mxu0 0
    %1135 = vmatprep.subr.bf16.mxu0 0
    %1136 = vmatpush1.bf16.msra.mxu0 0
    %1137 = vmatprep.subr.bf16.mxu0 0
    %1138 = vmatpush1.bf16.msra.mxu0 0
    %1139 = vmatprep.mubr.bf16.mxu0 0
    %1140 = vmatmul.mubr.bf16.gmra.mrb[0].mxu0 %v1102
    %v1141 = vpop.f32.mrb[0].mxu0
    %v1142 = vadd.f32 0.0, %v1141
    %v1143 = vpop.f32.mrb[0].mxu0
    %v1144 = vpop.f32.mrb[0].mxu0
    %v1145 = vpop.f32.mrb[0].mxu0
    %1146 = vdwg.mxu0
    %1149 = vrot.lane.b32.xlu0 %v1094, 64
    %v1150 = vpop.permute.xlu0 %1149
    %1151 = vrot.lane.b32.xlu0 %v1142, 64
    %v1152 = vpop.permute.xlu0 %1151
    %vm1155 = vcmask 785920
    %1156 = vst.msk [vmem:[#allocation2] sm:$0xff] %vm1155, %v1150
    %1157 = vst.msk [vmem:[#allocation2 + $0x8] sm:$0xff] %vm1155, %v1152
    %1158 = vrot.lane.b32.xlu0 %v471, 32
    %v1159 = vpop.permute.xlu0 %1158
    %1160 = vrot.lane.b32.xlu0 %v473, 32
    %v1161 = vpop.permute.xlu0 %1160
    %v1163 = vsel %vm477, %v1159, 0
    %v1166 = vsel %vm477, %v1161, 0
    %1168 = vmatprep.subr.bf16.mxu0 0
    %1169 = vmatpush1.bf16.xpose.msra.mxu0 %v1166
    %1170 = vmatprep.subr.bf16.mxu0 0
    %1171 = vmatpush1.bf16.xpose.msra.mxu0 0
    %1172 = vmatprep.subr.bf16.mxu0 0
    %1173 = vmatpush1.bf16.xpose.msra.mxu0 0
    %1174 = vmatprep.subr.bf16.mxu0 0
    %1175 = vmatpush1.bf16.xpose.msra.mxu0 0
    %1176 = vmatprep.subr.bf16.mxu0 0
    %1177 = vmatpush1.bf16.xpose.msra.mxu0 0
    %1178 = vmatprep.subr.bf16.mxu0 0
    %1179 = vmatpush1.bf16.xpose.msra.mxu0 0
    %1180 = vmatprep.subr.bf16.mxu0 0
    %1181 = vmatpush1.bf16.xpose.msra.mxu0 0
    %1182 = vmatprep.subr.bf16.mxu0 0
    %1183 = vmatpush1.bf16.xpose.msra.mxu0 0
    %1184 = vmatprep.subr.bf16.mxu0 0
    %1185 = vmatpush1.bf16.xpose.msra.mxu0 0
    %1186 = vmatprep.subr.bf16.mxu0 0
    %1187 = vmatpush1.bf16.xpose.msra.mxu0 0
    %1188 = vmatprep.subr.bf16.mxu0 0
    %1189 = vmatpush1.bf16.xpose.msra.mxu0 0
    %1190 = vmatprep.subr.bf16.mxu0 0
    %1191 = vmatpush1.bf16.xpose.msra.mxu0 0
    %1192 = vmatprep.subr.bf16.mxu0 0
    %1193 = vmatpush1.bf16.xpose.msra.mxu0 0
    %1194 = vmatprep.subr.bf16.mxu0 0
    %1195 = vmatpush1.bf16.xpose.msra.mxu0 0
    %1196 = vmatprep.subr.bf16.mxu0 0
    %1197 = vmatpush1.bf16.xpose.msra.mxu0 0
    %1198 = vmatprep.subr.bf16.mxu0 0
    %1199 = vmatpush1.bf16.xpose.msra.mxu0 0
    %1200 = vmatprep.mubr.bf16.mxu0 0
    %1201 = vmatmul.mubr.bf16.gmra.mrb[0].mxu0 %v1163
    %v1202 = vpop.f32.mrb[0].mxu0
    %v1203 = vadd.f32 %v172, %v1202
    %v1204 = vpop.f32.mrb[0].mxu0
    %v1205 = vpop.f32.mrb[0].mxu0
    %v1206 = vpop.f32.mrb[0].mxu0
    %1207 = vdwg.mxu0
    %1208 = vrot.lane.b32.xlu0 %v472, 32
    %v1209 = vpop.permute.xlu0 %1208
    %1210 = vrot.lane.b32.xlu0 %v474, 32
    %v1211 = vpop.permute.xlu0 %1210
    %v1213 = vsel %vm477, %v1209, 0
    %v1216 = vsel %vm477, %v1211, 0
    %1218 = vmatprep.subr.bf16.mxu0 0
    %1219 = vmatpush1.bf16.xpose.msra.mxu0 %v1216
    %1220 = vmatprep.subr.bf16.mxu0 0
    %1221 = vmatpush1.bf16.xpose.msra.mxu0 0
    %1222 = vmatprep.subr.bf16.mxu0 0
    %1223 = vmatpush1.bf16.xpose.msra.mxu0 0
    %1224 = vmatprep.subr.bf16.mxu0 0
    %1225 = vmatpush1.bf16.xpose.msra.mxu0 0
    %1226 = vmatprep.subr.bf16.mxu0 0
    %1227 = vmatpush1.bf16.xpose.msra.mxu0 0
    %1228 = vmatprep.subr.bf16.mxu0 0
    %1229 = vmatpush1.bf16.xpose.msra.mxu0 0
    %1230 = vmatprep.subr.bf16.mxu0 0
    %1231 = vmatpush1.bf16.xpose.msra.mxu0 0
    %1232 = vmatprep.subr.bf16.mxu0 0
    %1233 = vmatpush1.bf16.xpose.msra.mxu0 0
    %1234 = vmatprep.subr.bf16.mxu0 0
    %1235 = vmatpush1.bf16.xpose.msra.mxu0 0
    %1236 = vmatprep.subr.bf16.mxu0 0
    %1237 = vmatpush1.bf16.xpose.msra.mxu0 0
    %1238 = vmatprep.subr.bf16.mxu0 0
    %1239 = vmatpush1.bf16.xpose.msra.mxu0 0
    %1240 = vmatprep.subr.bf16.mxu0 0
    %1241 = vmatpush1.bf16.xpose.msra.mxu0 0
    %1242 = vmatprep.subr.bf16.mxu0 0
    %1243 = vmatpush1.bf16.xpose.msra.mxu0 0
    %1244 = vmatprep.subr.bf16.mxu0 0
    %1245 = vmatpush1.bf16.xpose.msra.mxu0 0
    %1246 = vmatprep.subr.bf16.mxu0 0
    %1247 = vmatpush1.bf16.xpose.msra.mxu0 0
    %1248 = vmatprep.subr.bf16.mxu0 0
    %1249 = vmatpush1.bf16.xpose.msra.mxu0 0
    %1250 = vmatprep.mubr.bf16.mxu0 0
    %1251 = vmatmul.mubr.bf16.gmra.mrb[0].mxu0 %v1213
    %v1252 = vpop.f32.mrb[0].mxu0
    %v1253 = vadd.f32 %v173, %v1252
    %v1254 = vpop.f32.mrb[0].mxu0
    %v1255 = vpop.f32.mrb[0].mxu0
    %v1256 = vpop.f32.mrb[0].mxu0
    %1257 = vdwg.mxu0
    %v1258 = vsel %vm570, %v1203, -inf
    %1259 = vmax.xlane.f32.xlu0 %v1258
    %v1260 = vpop.xlane.xlu0 %1259
    %v1261 = vsel %vm570, %v1253, -inf
    %1262 = vmax.xlane.f32.xlu0 %v1261
    %v1263 = vpop.xlane.xlu0 %1262
    %v1264 = vsub.f32 %v1203, %v1260
    %v1265 = vsub.f32 %v1253, %v1263
    %v1266 = vmul.f32 %v1264, 1.442695
    %v1267 = vpow.pop %v1266
    %v1268 = vmul.f32 %v1265, 1.442695
    %v1269 = vpow.pop %v1268
    %v1270 = vsel %vm570, %v1267, 0.0
    %1271 = vadd.xlane.f32.xlu0 %v1270
    %v1272 = vpop.xlane.xlu0 %1271
    %v1273 = vsel %vm570, %v1269, 0.0
    %1274 = vadd.xlane.f32.xlu0 %v1273
    %v1275 = vpop.xlane.xlu0 %1274
    %v1276 = vrcp.pop %v1272
    %v1277 = vrcp.pop %v1275
    %v1278 = vmul.f32 %v1267, %v1276
    %v1279 = vmul.f32 %v1269, %v1277
    %v1280 = vpack.c.bf16 %v1278, %v1278
    %v1281 = vpack.c.bf16 %v1279, %v1279
    %1282 = vrot.lane.b32.xlu0 %v475, 32
    %v1283 = vpop.permute.xlu0 %1282
    %v1285 = vsel %vm570, %v1280, 0
    %v1288 = vsel %vm598, %v1283, 0
    %1290 = vmatprep.subr.bf16.mxu0 0
    %1291 = vmatpush1.bf16.msra.mxu0 %v1288
    %1292 = vmatprep.subr.bf16.mxu0 0
    %1293 = vmatpush1.bf16.msra.mxu0 0
    %1294 = vmatprep.subr.bf16.mxu0 0
    %1295 = vmatpush1.bf16.msra.mxu0 0
    %1296 = vmatprep.subr.bf16.mxu0 0
    %1297 = vmatpush1.bf16.msra.mxu0 0
    %1298 = vmatprep.subr.bf16.mxu0 0
    %1299 = vmatpush1.bf16.msra.mxu0 0
    %1300 = vmatprep.subr.bf16.mxu0 0
    %1301 = vmatpush1.bf16.msra.mxu0 0
    %1302 = vmatprep.subr.bf16.mxu0 0
    %1303 = vmatpush1.bf16.msra.mxu0 0
    %1304 = vmatprep.subr.bf16.mxu0 0
    %1305 = vmatpush1.bf16.msra.mxu0 0
    %1306 = vmatprep.subr.bf16.mxu0 0
    %1307 = vmatpush1.bf16.msra.mxu0 0
    %1308 = vmatprep.subr.bf16.mxu0 0
    %1309 = vmatpush1.bf16.msra.mxu0 0
    %1310 = vmatprep.subr.bf16.mxu0 0
    %1311 = vmatpush1.bf16.msra.mxu0 0
    %1312 = vmatprep.subr.bf16.mxu0 0
    %1313 = vmatpush1.bf16.msra.mxu0 0
    %1314 = vmatprep.subr.bf16.mxu0 0
    %1315 = vmatpush1.bf16.msra.mxu0 0
    %1316 = vmatprep.subr.bf16.mxu0 0
    %1317 = vmatpush1.bf16.msra.mxu0 0
    %1318 = vmatprep.subr.bf16.mxu0 0
    %1319 = vmatpush1.bf16.msra.mxu0 0
    %1320 = vmatprep.subr.bf16.mxu0 0
    %1321 = vmatpush1.bf16.msra.mxu0 0
    %1322 = vmatprep.mubr.bf16.mxu0 0
    %1323 = vmatmul.mubr.bf16.gmra.mrb[0].mxu0 %v1285
    %v1324 = vpop.f32.mrb[0].mxu0
    %v1325 = vadd.f32 0.0, %v1324
    %v1326 = vpop.f32.mrb[0].mxu0
    %v1327 = vpop.f32.mrb[0].mxu0
    %v1328 = vpop.f32.mrb[0].mxu0
    %1329 = vdwg.mxu0
    %1330 = vrot.lane.b32.xlu0 %v476, 32
    %v1331 = vpop.permute.xlu0 %1330
    %v1333 = vsel %vm570, %v1281, 0
    %v1336 = vsel %vm598, %v1331, 0
    %1338 = vmatprep.subr.bf16.mxu0 0
    %1339 = vmatpush1.bf16.msra.mxu0 %v1336
    %1340 = vmatprep.subr.bf16.mxu0 0
    %1341 = vmatpush1.bf16.msra.mxu0 0
    %1342 = vmatprep.subr.bf16.mxu0 0
    %1343 = vmatpush1.bf16.msra.mxu0 0
    %1344 = vmatprep.subr.bf16.mxu0 0
    %1345 = vmatpush1.bf16.msra.mxu0 0
    %1346 = vmatprep.subr.bf16.mxu0 0
    %1347 = vmatpush1.bf16.msra.mxu0 0
    %1348 = vmatprep.subr.bf16.mxu0 0
    %1349 = vmatpush1.bf16.msra.mxu0 0
    %1350 = vmatprep.subr.bf16.mxu0 0
    %1351 = vmatpush1.bf16.msra.mxu0 0
    %1352 = vmatprep.subr.bf16.mxu0 0
    %1353 = vmatpush1.bf16.msra.mxu0 0
    %1354 = vmatprep.subr.bf16.mxu0 0
    %1355 = vmatpush1.bf16.msra.mxu0 0
    %1356 = vmatprep.subr.bf16.mxu0 0
    %1357 = vmatpush1.bf16.msra.mxu0 0
    %1358 = vmatprep.subr.bf16.mxu0 0
    %1359 = vmatpush1.bf16.msra.mxu0 0
    %1360 = vmatprep.subr.bf16.mxu0 0
    %1361 = vmatpush1.bf16.msra.mxu0 0
    %1362 = vmatprep.subr.bf16.mxu0 0
    %1363 = vmatpush1.bf16.msra.mxu0 0
    %1364 = vmatprep.subr.bf16.mxu0 0
    %1365 = vmatpush1.bf16.msra.mxu0 0
    %1366 = vmatprep.subr.bf16.mxu0 0
    %1367 = vmatpush1.bf16.msra.mxu0 0
    %1368 = vmatprep.subr.bf16.mxu0 0
    %1369 = vmatpush1.bf16.msra.mxu0 0
    %1370 = vmatprep.mubr.bf16.mxu0 0
    %1371 = vmatmul.mubr.bf16.gmra.mrb[0].mxu0 %v1333
    %v1372 = vpop.f32.mrb[0].mxu0
    %v1373 = vadd.f32 0.0, %v1372
    %v1374 = vpop.f32.mrb[0].mxu0
    %v1375 = vpop.f32.mrb[0].mxu0
    %v1376 = vpop.f32.mrb[0].mxu0
    %1377 = vdwg.mxu0
    %1380 = vrot.lane.b32.xlu0 %v1325, 96
    %v1381 = vpop.permute.xlu0 %1380
    %1382 = vrot.lane.b32.xlu0 %v1373, 96
    %v1383 = vpop.permute.xlu0 %1382
    %vm1386 = vcmask 1048320
    %1387 = vst.msk [vmem:[#allocation2] sm:$0xff] %vm1386, %v1381
    %1388 = vst.msk [vmem:[#allocation2 + $0x8] sm:$0xff] %vm1386, %v1383
    %v1389 = vld [vmem:[#allocation2] sm:$0xff]
    %v1390 = vld [vmem:[#allocation2 + $0x8] sm:$0xff]
    %v1391 = vpack.c.bf16 %v1390, %v1389
    %v1392 = vld [vmem:[#allocation3] sm:$0xf]
    %v1393 = vld [vmem:[#allocation3 + $0x4] sm:$0xf]
    %v1394 = vld [vmem:[#allocation3 + $0x8] sm:$0xf]
    %v1395 = vld [vmem:[#allocation3 + $0xc] sm:$0xf]
    %v1396 = vld [vmem:[#allocation3 + $0x10] sm:$0xf]
    %v1397 = vld [vmem:[#allocation3 + $0x14] sm:$0xf]
    %v1398 = vld [vmem:[#allocation3 + $0x18] sm:$0xf]
    %v1399 = vld [vmem:[#allocation3 + $0x1c] sm:$0xf]
    %v1400 = vld [vmem:[#allocation3 + $0x20] sm:$0xf]
    %v1401 = vld [vmem:[#allocation3 + $0x24] sm:$0xf]
    %v1402 = vld [vmem:[#allocation3 + $0x28] sm:$0xf]
    %v1403 = vld [vmem:[#allocation3 + $0x2c] sm:$0xf]
    %v1404 = vld [vmem:[#allocation3 + $0x30] sm:$0xf]
    %v1405 = vld [vmem:[#allocation3 + $0x34] sm:$0xf]
    %v1406 = vld [vmem:[#allocation3 + $0x38] sm:$0xf]
    %v1407 = vld [vmem:[#allocation3 + $0x3c] sm:$0xf]
    %v1408 = vlaneseq
    %v1409 = vshrl.u32 %v1408, 7
    %v1410 = vsub.s32 1, %v1409
    %v1411 = vrot.slane %v211, %v1410
    %v1428 = vunpack.c.l.b16 %v1392
    %v1429 = vunpack.c.l.b16 %v1393
    %v1430 = vunpack.c.l.b16 %v1394
    %v1431 = vunpack.c.l.b16 %v1395
    %v1432 = vunpack.c.l.b16 %v1396
    %v1433 = vunpack.c.l.b16 %v1397
    %v1434 = vunpack.c.l.b16 %v1398
    %v1435 = vunpack.c.l.b16 %v1399
    %v1436 = vunpack.c.l.b16 %v1400
    %v1437 = vunpack.c.l.b16 %v1401
    %v1438 = vunpack.c.l.b16 %v1402
    %v1439 = vunpack.c.l.b16 %v1403
    %v1440 = vunpack.c.l.b16 %v1404
    %v1441 = vunpack.c.l.b16 %v1405
    %v1442 = vunpack.c.l.b16 %v1406
    %v1443 = vunpack.c.l.b16 %v1407
    %v1444 = vpack.c.b16 %v1429, %v1428
    %v1445 = vpack.c.b16 %v1431, %v1430
    %v1446 = vpack.c.b16 %v1433, %v1432
    %v1447 = vpack.c.b16 %v1435, %v1434
    %v1448 = vpack.c.b16 %v1437, %v1436
    %v1449 = vpack.c.b16 %v1439, %v1438
    %v1450 = vpack.c.b16 %v1441, %v1440
    %v1451 = vpack.c.b16 %v1443, %v1442
    %1460 = vmatprep.subr.bf16.mxu0 0
    %1461 = vmatpush1.bf16.msra.mxu0 %v1444
    %1462 = vmatprep.subr.bf16.mxu0 0
    %1463 = vmatpush1.bf16.msra.mxu0 %v1445
    %1464 = vmatprep.subr.bf16.mxu0 0
    %1465 = vmatpush1.bf16.msra.mxu0 %v1446
    %1466 = vmatprep.subr.bf16.mxu0 0
    %1467 = vmatpush1.bf16.msra.mxu0 %v1447
    %1468 = vmatprep.subr.bf16.mxu0 0
    %1469 = vmatpush1.bf16.msra.mxu0 %v1448
    %1470 = vmatprep.subr.bf16.mxu0 0
    %1471 = vmatpush1.bf16.msra.mxu0 %v1449
    %1472 = vmatprep.subr.bf16.mxu0 0
    %1473 = vmatpush1.bf16.msra.mxu0 %v1450
    %1474 = vmatprep.subr.bf16.mxu0 0
    %1475 = vmatpush1.bf16.msra.mxu0 %v1451
    %1476 = vmatprep.subr.bf16.mxu0 0
    %1477 = vmatpush1.bf16.msra.mxu0 0
    %1478 = vmatprep.subr.bf16.mxu0 0
    %1479 = vmatpush1.bf16.msra.mxu0 0
    %1480 = vmatprep.subr.bf16.mxu0 0
    %1481 = vmatpush1.bf16.msra.mxu0 0
    %1482 = vmatprep.subr.bf16.mxu0 0
    %1483 = vmatpush1.bf16.msra.mxu0 0
    %1484 = vmatprep.subr.bf16.mxu0 0
    %1485 = vmatpush1.bf16.msra.mxu0 0
    %1486 = vmatprep.subr.bf16.mxu0 0
    %1487 = vmatpush1.bf16.msra.mxu0 0
    %1488 = vmatprep.subr.bf16.mxu0 0
    %1489 = vmatpush1.bf16.msra.mxu0 0
    %1490 = vmatprep.subr.bf16.mxu0 0
    %1491 = vmatpush1.bf16.msra.mxu0 0
    %1492 = vmatprep.mubr.bf16.mxu0 0
    %1493 = vmatmul.mubr.bf16.gmra.mrb[0].mxu0 %v1391
    %v1494 = vpop.f32.mrb[0].mxu0
    %v1495 = vadd.f32 %v1411, %v1494
    %v1496 = vpop.f32.mrb[0].mxu0
    %v1497 = vpop.f32.mrb[0].mxu0
    %v1498 = vadd.f32 %v1411, %v1497
    %v1499 = vpop.f32.mrb[0].mxu0
    %1500 = vdwg.mxu0
    %v1501 = vadd.f32 %v1495, %v209
    %v1502 = vadd.f32 %v1498, %v210
    %1503 = vadd.xlane.f32.xlu0 %v1501
    %v1504 = vpop.xlane.xlu0 %1503
    %1505 = vadd.xlane.f32.xlu0 %v1502
    %v1506 = vpop.xlane.xlu0 %1505
    %v1507 = vmul.f32 %v1504, %v180
    %v1508 = vmul.f32 %v1506, %v180
    %v1509 = vsub.f32 %v1501, %v1507
    %v1510 = vsub.f32 %v1502, %v1508
    %v1511 = vmul.f32 %v1509, %v1509
    %v1512 = vmul.f32 %v1510, %v1510
    %1513 = vadd.xlane.f32.xlu0 %v1511
    %v1514 = vpop.xlane.xlu0 %1513
    %1515 = vadd.xlane.f32.xlu0 %v1512
    %v1516 = vpop.xlane.xlu0 %1515
    %v1517 = vmul.f32 %v1514, %v180
    %v1518 = vmul.f32 %v1516, %v180
    %v1519 = vadd.f32 %v1517, 1e-12
    %v1520 = vadd.f32 %v1518, 1e-12
    %v1521 = vrsqrt.pop %v1519
    %v1522 = vrsqrt.pop %v1520
    %v1523 = vmul.f32 %v1509, %v1521
    %v1524 = vmul.f32 %v1510, %v1522
    %v1525 = vlaneseq
    %v1526 = vshrl.u32 %v1525, 7
    %v1527 = vsub.s32 2, %v1526
    %v1528 = vrot.slane %v211, %v1527
    %v1529 = vmul.f32 %v1523, %v1528
    %v1530 = vmul.f32 %v1524, %v1528
    %v1531 = vlaneseq
    %v1532 = vshrl.u32 %v1531, 7
    %v1533 = vsub.s32 3, %v1532
    %v1534 = vrot.slane %v211, %v1533
    %v1535 = vadd.f32 %v1529, %v1534
    %v1536 = vadd.f32 %v1530, %v1534
    %v1537 = vpack.c.bf16 %v1536, %v1535
    %v1538 = vld [vmem:[%s4] sm:$0xff]
    %v1539 = vld [vmem:[%s4 + $0x8] sm:$0xff]
    %v1540 = vld [vmem:[%s4 + $0x10] sm:$0xff]
    %v1541 = vld [vmem:[%s4 + $0x18] sm:$0xff]
    %v1542 = vld [vmem:[%s4 + $0x20] sm:$0xff]
    %v1543 = vld [vmem:[%s4 + $0x28] sm:$0xff]
    %v1544 = vld [vmem:[%s4 + $0x30] sm:$0xff]
    %v1545 = vld [vmem:[%s4 + $0x38] sm:$0xff]
    %v1546 = vld [vmem:[%s4 + $0x40] sm:$0xff]
    %v1547 = vld [vmem:[%s4 + $0x48] sm:$0xff]
    %v1548 = vld [vmem:[%s4 + $0x50] sm:$0xff]
    %v1549 = vld [vmem:[%s4 + $0x58] sm:$0xff]
    %v1550 = vld [vmem:[%s4 + $0x60] sm:$0xff]
    %v1551 = vld [vmem:[%s4 + $0x68] sm:$0xff]
    %v1552 = vld [vmem:[%s4 + $0x70] sm:$0xff]
    %v1553 = vld [vmem:[%s4 + $0x78] sm:$0xff]
    %v1554 = vlaneseq
    %v1555 = vshrl.u32 %v1554, 7
    %v1556 = vsub.s32 4, %v1555
    %v1557 = vrot.slane %v211, %v1556
    %v1558 = vlaneseq
    %v1559 = vshrl.u32 %v1558, 7
    %v1560 = vsub.s32 4, %v1559
    %v1561 = vrot.slane %v212, %v1560
    %v1578 = vunpack.c.l.b16 %v1538
    %v1579 = vunpack.c.h.b16 %v1538
    %v1580 = vunpack.c.l.b16 %v1539
    %v1581 = vunpack.c.h.b16 %v1539
    %v1582 = vunpack.c.l.b16 %v1540
    %v1583 = vunpack.c.h.b16 %v1540
    %v1584 = vunpack.c.l.b16 %v1541
    %v1585 = vunpack.c.h.b16 %v1541
    %v1586 = vunpack.c.l.b16 %v1542
    %v1587 = vunpack.c.h.b16 %v1542
    %v1588 = vunpack.c.l.b16 %v1543
    %v1589 = vunpack.c.h.b16 %v1543
    %v1590 = vunpack.c.l.b16 %v1544
    %v1591 = vunpack.c.h.b16 %v1544
    %v1592 = vunpack.c.l.b16 %v1545
    %v1593 = vunpack.c.h.b16 %v1545
    %v1594 = vunpack.c.l.b16 %v1546
    %v1595 = vunpack.c.h.b16 %v1546
    %v1596 = vunpack.c.l.b16 %v1547
    %v1597 = vunpack.c.h.b16 %v1547
    %v1598 = vunpack.c.l.b16 %v1548
    %v1599 = vunpack.c.h.b16 %v1548
    %v1600 = vunpack.c.l.b16 %v1549
    %v1601 = vunpack.c.h.b16 %v1549
    %v1602 = vunpack.c.l.b16 %v1550
    %v1603 = vunpack.c.h.b16 %v1550
    %v1604 = vunpack.c.l.b16 %v1551
    %v1605 = vunpack.c.h.b16 %v1551
    %v1606 = vunpack.c.l.b16 %v1552
    %v1607 = vunpack.c.h.b16 %v1552
    %v1608 = vunpack.c.l.b16 %v1553
    %v1609 = vunpack.c.h.b16 %v1553
    %v1610 = vpack.c.b16 %v1580, %v1578
    %v1611 = vpack.c.b16 %v1581, %v1579
    %v1612 = vpack.c.b16 %v1584, %v1582
    %v1613 = vpack.c.b16 %v1585, %v1583
    %v1614 = vpack.c.b16 %v1588, %v1586
    %v1615 = vpack.c.b16 %v1589, %v1587
    %v1616 = vpack.c.b16 %v1592, %v1590
    %v1617 = vpack.c.b16 %v1593, %v1591
    %v1618 = vpack.c.b16 %v1596, %v1594
    %v1619 = vpack.c.b16 %v1597, %v1595
    %v1620 = vpack.c.b16 %v1600, %v1598
    %v1621 = vpack.c.b16 %v1601, %v1599
    %v1622 = vpack.c.b16 %v1604, %v1602
    %v1623 = vpack.c.b16 %v1605, %v1603
    %v1624 = vpack.c.b16 %v1608, %v1606
    %v1625 = vpack.c.b16 %v1609, %v1607
    %1642 = vmatprep.subr.bf16.mxu0 %v1611
    %1643 = vmatpush1.bf16.msra.mxu0 %v1610
    %1644 = vmatprep.subr.bf16.mxu0 %v1613
    %1645 = vmatpush1.bf16.msra.mxu0 %v1612
    %1646 = vmatprep.subr.bf16.mxu0 %v1615
    %1647 = vmatpush1.bf16.msra.mxu0 %v1614
    %1648 = vmatprep.subr.bf16.mxu0 %v1617
    %1649 = vmatpush1.bf16.msra.mxu0 %v1616
    %1650 = vmatprep.subr.bf16.mxu0 %v1619
    %1651 = vmatpush1.bf16.msra.mxu0 %v1618
    %1652 = vmatprep.subr.bf16.mxu0 %v1621
    %1653 = vmatpush1.bf16.msra.mxu0 %v1620
    %1654 = vmatprep.subr.bf16.mxu0 %v1623
    %1655 = vmatpush1.bf16.msra.mxu0 %v1622
    %1656 = vmatprep.subr.bf16.mxu0 %v1625
    %1657 = vmatpush1.bf16.msra.mxu0 %v1624
    %1658 = vmatprep.subr.bf16.mxu0 0
    %1659 = vmatpush1.bf16.msra.mxu0 0
    %1660 = vmatprep.subr.bf16.mxu0 0
    %1661 = vmatpush1.bf16.msra.mxu0 0
    %1662 = vmatprep.subr.bf16.mxu0 0
    %1663 = vmatpush1.bf16.msra.mxu0 0
    %1664 = vmatprep.subr.bf16.mxu0 0
    %1665 = vmatpush1.bf16.msra.mxu0 0
    %1666 = vmatprep.subr.bf16.mxu0 0
    %1667 = vmatpush1.bf16.msra.mxu0 0
    %1668 = vmatprep.subr.bf16.mxu0 0
    %1669 = vmatpush1.bf16.msra.mxu0 0
    %1670 = vmatprep.subr.bf16.mxu0 0
    %1671 = vmatpush1.bf16.msra.mxu0 0
    %1672 = vmatprep.subr.bf16.mxu0 0
    %1673 = vmatpush1.bf16.msra.mxu0 0
    %1674 = vmatprep.mubr.bf16.mxu0 0
    %1675 = vmatmul.mubr.bf16.gmra.mrb[0].mxu0 %v1537
    %v1676 = vpop.f32.mrb[0].mxu0
    %v1677 = vadd.f32 %v1557, %v1676
    %v1678 = vpop.f32.mrb[0].mxu0
    %v1679 = vadd.f32 %v1561, %v1678
    %v1680 = vpop.f32.mrb[0].mxu0
    %v1681 = vadd.f32 %v1557, %v1680
    %v1682 = vpop.f32.mrb[0].mxu0
    %v1683 = vadd.f32 %v1561, %v1682
    %1684 = vdwg.mxu0
    %v1685 = vmul.f32 %v1677, 0.5
    %v1686 = vmul.f32 %v1679, 0.5
    %v1687 = vmul.f32 %v1681, 0.5
    %v1688 = vmul.f32 %v1683, 0.5
    %v1689 = vmul.f32 %v1677, 0.044715
    %v1690 = vmul.f32 %v1679, 0.044715
    %v1691 = vmul.f32 %v1681, 0.044715
    %v1692 = vmul.f32 %v1683, 0.044715
    %v1693 = vmul.f32 %v1689, %v1677
    %v1694 = vmul.f32 %v1690, %v1679
    %v1695 = vmul.f32 %v1691, %v1681
    %v1696 = vmul.f32 %v1692, %v1683
    %v1697 = vmul.f32 %v1693, %v1677
    %v1698 = vmul.f32 %v1694, %v1679
    %v1699 = vmul.f32 %v1695, %v1681
    %v1700 = vmul.f32 %v1696, %v1683
    %v1701 = vadd.f32 %v1677, %v1697
    %v1702 = vadd.f32 %v1679, %v1698
    %v1703 = vadd.f32 %v1681, %v1699
    %v1704 = vadd.f32 %v1683, %v1700
    %v1705 = vmul.f32 %v1701, 0.7978846
    %v1706 = vmul.f32 %v1702, 0.7978846
    %v1707 = vmul.f32 %v1703, 0.7978846
    %v1708 = vmul.f32 %v1704, 0.7978846
    %v1709 = vtanh.pop %v1705
    %v1710 = vtanh.pop %v1706
    %v1711 = vtanh.pop %v1707
    %v1712 = vtanh.pop %v1708
    %v1713 = vadd.f32 %v1709, 1.0
    %v1714 = vadd.f32 %v1710, 1.0
    %v1715 = vadd.f32 %v1711, 1.0
    %v1716 = vadd.f32 %v1712, 1.0
    %v1717 = vmul.f32 %v1685, %v1713
    %v1718 = vmul.f32 %v1686, %v1714
    %v1719 = vmul.f32 %v1687, %v1715
    %v1720 = vmul.f32 %v1688, %v1716
    %v1721 = vpack.c.bf16 %v1719, %v1717
    %v1722 = vpack.c.bf16 %v1720, %v1718
    %v1723 = vld [vmem:[#allocation5] sm:$0xf]
    %v1724 = vld [vmem:[#allocation5 + $0x4] sm:$0xf]
    %v1725 = vld [vmem:[#allocation5 + $0x8] sm:$0xf]
    %v1726 = vld [vmem:[#allocation5 + $0xc] sm:$0xf]
    %v1727 = vld [vmem:[#allocation5 + $0x10] sm:$0xf]
    %v1728 = vld [vmem:[#allocation5 + $0x14] sm:$0xf]
    %v1729 = vld [vmem:[#allocation5 + $0x18] sm:$0xf]
    %v1730 = vld [vmem:[#allocation5 + $0x1c] sm:$0xf]
    %v1731 = vld [vmem:[#allocation5 + $0x20] sm:$0xf]
    %v1732 = vld [vmem:[#allocation5 + $0x24] sm:$0xf]
    %v1733 = vld [vmem:[#allocation5 + $0x28] sm:$0xf]
    %v1734 = vld [vmem:[#allocation5 + $0x2c] sm:$0xf]
    %v1735 = vld [vmem:[#allocation5 + $0x30] sm:$0xf]
    %v1736 = vld [vmem:[#allocation5 + $0x34] sm:$0xf]
    %v1737 = vld [vmem:[#allocation5 + $0x38] sm:$0xf]
    %v1738 = vld [vmem:[#allocation5 + $0x3c] sm:$0xf]
    %v1739 = vld [vmem:[#allocation5 + $0x40] sm:$0xf]
    %v1740 = vld [vmem:[#allocation5 + $0x44] sm:$0xf]
    %v1741 = vld [vmem:[#allocation5 + $0x48] sm:$0xf]
    %v1742 = vld [vmem:[#allocation5 + $0x4c] sm:$0xf]
    %v1743 = vld [vmem:[#allocation5 + $0x50] sm:$0xf]
    %v1744 = vld [vmem:[#allocation5 + $0x54] sm:$0xf]
    %v1745 = vld [vmem:[#allocation5 + $0x58] sm:$0xf]
    %v1746 = vld [vmem:[#allocation5 + $0x5c] sm:$0xf]
    %v1747 = vld [vmem:[#allocation5 + $0x60] sm:$0xf]
    %v1748 = vld [vmem:[#allocation5 + $0x64] sm:$0xf]
    %v1749 = vld [vmem:[#allocation5 + $0x68] sm:$0xf]
    %v1750 = vld [vmem:[#allocation5 + $0x6c] sm:$0xf]
    %v1751 = vld [vmem:[#allocation5 + $0x70] sm:$0xf]
    %v1752 = vld [vmem:[#allocation5 + $0x74] sm:$0xf]
    %v1753 = vld [vmem:[#allocation5 + $0x78] sm:$0xf]
    %v1754 = vld [vmem:[#allocation5 + $0x7c] sm:$0xf]
    %v1755 = vlaneseq
    %v1756 = vshrl.u32 %v1755, 7
    %v1757 = vsub.s32 5, %v1756
    %v1758 = vrot.slane %v211, %v1757
    %v1791 = vunpack.c.l.b16 %v1723
    %v1792 = vunpack.c.l.b16 %v1724
    %v1793 = vunpack.c.l.b16 %v1725
    %v1794 = vunpack.c.l.b16 %v1726
    %v1795 = vunpack.c.l.b16 %v1727
    %v1796 = vunpack.c.l.b16 %v1728
    %v1797 = vunpack.c.l.b16 %v1729
    %v1798 = vunpack.c.l.b16 %v1730
    %v1799 = vunpack.c.l.b16 %v1731
    %v1800 = vunpack.c.l.b16 %v1732
    %v1801 = vunpack.c.l.b16 %v1733
    %v1802 = vunpack.c.l.b16 %v1734
    %v1803 = vunpack.c.l.b16 %v1735
    %v1804 = vunpack.c.l.b16 %v1736
    %v1805 = vunpack.c.l.b16 %v1737
    %v1806 = vunpack.c.l.b16 %v1738
    %v1807 = vunpack.c.l.b16 %v1739
    %v1808 = vunpack.c.l.b16 %v1740
    %v1809 = vunpack.c.l.b16 %v1741
    %v1810 = vunpack.c.l.b16 %v1742
    %v1811 = vunpack.c.l.b16 %v1743
    %v1812 = vunpack.c.l.b16 %v1744
    %v1813 = vunpack.c.l.b16 %v1745
    %v1814 = vunpack.c.l.b16 %v1746
    %v1815 = vunpack.c.l.b16 %v1747
    %v1816 = vunpack.c.l.b16 %v1748
    %v1817 = vunpack.c.l.b16 %v1749
    %v1818 = vunpack.c.l.b16 %v1750
    %v1819 = vunpack.c.l.b16 %v1751
    %v1820 = vunpack.c.l.b16 %v1752
    %v1821 = vunpack.c.l.b16 %v1753
    %v1822 = vunpack.c.l.b16 %v1754
    %v1823 = vpack.c.b16 %v1792, %v1791
    %v1824 = vpack.c.b16 %v1794, %v1793
    %v1825 = vpack.c.b16 %v1796, %v1795
    %v1826 = vpack.c.b16 %v1798, %v1797
    %v1827 = vpack.c.b16 %v1800, %v1799
    %v1828 = vpack.c.b16 %v1802, %v1801
    %v1829 = vpack.c.b16 %v1804, %v1803
    %v1830 = vpack.c.b16 %v1806, %v1805
    %v1831 = vpack.c.b16 %v1808, %v1807
    %v1832 = vpack.c.b16 %v1810, %v1809
    %v1833 = vpack.c.b16 %v1812, %v1811
    %v1834 = vpack.c.b16 %v1814, %v1813
    %v1835 = vpack.c.b16 %v1816, %v1815
    %v1836 = vpack.c.b16 %v1818, %v1817
    %v1837 = vpack.c.b16 %v1820, %v1819
    %v1838 = vpack.c.b16 %v1822, %v1821
    %1855 = vmatprep.subr.bf16.mxu0 0
    %1856 = vmatpush1.bf16.msra.mxu0 %v1823
    %1857 = vmatprep.subr.bf16.mxu0 0
    %1858 = vmatpush1.bf16.msra.mxu0 %v1824
    %1859 = vmatprep.subr.bf16.mxu0 0
    %1860 = vmatpush1.bf16.msra.mxu0 %v1825
    %1861 = vmatprep.subr.bf16.mxu0 0
    %1862 = vmatpush1.bf16.msra.mxu0 %v1826
    %1863 = vmatprep.subr.bf16.mxu0 0
    %1864 = vmatpush1.bf16.msra.mxu0 %v1827
    %1865 = vmatprep.subr.bf16.mxu0 0
    %1866 = vmatpush1.bf16.msra.mxu0 %v1828
    %1867 = vmatprep.subr.bf16.mxu0 0
    %1868 = vmatpush1.bf16.msra.mxu0 %v1829
    %1869 = vmatprep.subr.bf16.mxu0 0
    %1870 = vmatpush1.bf16.msra.mxu0 %v1830
    %1871 = vmatprep.subr.bf16.mxu0 0
    %1872 = vmatpush1.bf16.msra.mxu0 %v1831
    %1873 = vmatprep.subr.bf16.mxu0 0
    %1874 = vmatpush1.bf16.msra.mxu0 %v1832
    %1875 = vmatprep.subr.bf16.mxu0 0
    %1876 = vmatpush1.bf16.msra.mxu0 %v1833
    %1877 = vmatprep.subr.bf16.mxu0 0
    %1878 = vmatpush1.bf16.msra.mxu0 %v1834
    %1879 = vmatprep.subr.bf16.mxu0 0
    %1880 = vmatpush1.bf16.msra.mxu0 %v1835
    %1881 = vmatprep.subr.bf16.mxu0 0
    %1882 = vmatpush1.bf16.msra.mxu0 %v1836
    %1883 = vmatprep.subr.bf16.mxu0 0
    %1884 = vmatpush1.bf16.msra.mxu0 %v1837
    %1885 = vmatprep.subr.bf16.mxu0 0
    %1886 = vmatpush1.bf16.msra.mxu0 %v1838
    %1887 = vmatprep.mubr.bf16.mxu0 %v1722
    %1888 = vmatmul.mubr.bf16.gmra.mrb[0].mxu0 %v1721
    %v1889 = vpop.f32.mrb[0].mxu0
    %v1890 = vadd.f32 %v1758, %v1889
    %v1891 = vpop.f32.mrb[0].mxu0
    %v1892 = vpop.f32.mrb[0].mxu0
    %v1893 = vadd.f32 %v1758, %v1892
    %v1894 = vpop.f32.mrb[0].mxu0
    %1895 = vdwg.mxu0
    %v1896 = vadd.f32 %v1890, %v1535
    %v1897 = vadd.f32 %v1893, %v1536
    %1898 = vadd.xlane.f32.xlu0 %v1896
    %v1899 = vpop.xlane.xlu0 %1898
    %1900 = vadd.xlane.f32.xlu0 %v1897
    %v1901 = vpop.xlane.xlu0 %1900
    %v1902 = vmul.f32 %v1899, %v180
    %v1903 = vmul.f32 %v1901, %v180
    %v1904 = vsub.f32 %v1896, %v1902
    %v1905 = vsub.f32 %v1897, %v1903
    %v1906 = vmul.f32 %v1904, %v1904
    %v1907 = vmul.f32 %v1905, %v1905
    %1908 = vadd.xlane.f32.xlu0 %v1906
    %v1909 = vpop.xlane.xlu0 %1908
    %1910 = vadd.xlane.f32.xlu0 %v1907
    %v1911 = vpop.xlane.xlu0 %1910
    %v1912 = vmul.f32 %v1909, %v180
    %v1913 = vmul.f32 %v1911, %v180
    %v1914 = vadd.f32 %v1912, 1e-12
    %v1915 = vadd.f32 %v1913, 1e-12
    %v1916 = vrsqrt.pop %v1914
    %v1917 = vrsqrt.pop %v1915
    %v1918 = vmul.f32 %v1904, %v1916
    %v1919 = vmul.f32 %v1905, %v1917
    %v1920 = vlaneseq
    %v1921 = vshrl.u32 %v1920, 7
    %v1922 = vsub.s32 6, %v1921
    %v1923 = vrot.slane %v211, %v1922
    %v1924 = vmul.f32 %v1918, %v1923
    %v1925 = vmul.f32 %v1919, %v1923
    %v1926 = vlaneseq
    %v1927 = vshrl.u32 %v1926, 7
    %v1928 = vsub.s32 7, %v1927
    %v1929 = vrot.slane %v211, %v1928
    %v1930 = vadd.f32 %v1924, %v1929
    %v1931 = vadd.f32 %v1925, %v1929
    %v1932 = vld [vmem:[#allocation13] sm:$0xff]
    %v1933 = vld [vmem:[#allocation13 + $0x8] sm:$0xff]
    %v1934 = vld [vmem:[#allocation13 + $0x10] sm:$0xff]
    %v1935 = vpack.c.bf16 %v1931, %v1930
    %v1936 = vld [vmem:[#allocation7] sm:$0xff]
    %v1937 = vld [vmem:[#allocation7 + $0x8] sm:$0xf]
    %v1938 = vld [vmem:[#allocation7 + $0xc] sm:$0xff]
    %v1939 = vld [vmem:[#allocation7 + $0x14] sm:$0xf]
    %v1940 = vld [vmem:[#allocation7 + $0x18] sm:$0xff]
    %v1941 = vld [vmem:[#allocation7 + $0x20] sm:$0xf]
    %v1942 = vld [vmem:[#allocation7 + $0x24] sm:$0xff]
    %v1943 = vld [vmem:[#allocation7 + $0x2c] sm:$0xf]
    %v1944 = vld [vmem:[#allocation7 + $0x30] sm:$0xff]
    %v1945 = vld [vmem:[#allocation7 + $0x38] sm:$0xf]
    %v1946 = vld [vmem:[#allocation7 + $0x3c] sm:$0xff]
    %v1947 = vld [vmem:[#allocation7 + $0x44] sm:$0xf]
    %v1948 = vld [vmem:[#allocation7 + $0x48] sm:$0xff]
    %v1949 = vld [vmem:[#allocation7 + $0x50] sm:$0xf]
    %v1950 = vld [vmem:[#allocation7 + $0x54] sm:$0xff]
    %v1951 = vld [vmem:[#allocation7 + $0x5c] sm:$0xf]
    %v1952 = vld [vmem:[#allocation7 + $0x60] sm:$0xff]
    %v1953 = vld [vmem:[#allocation7 + $0x68] sm:$0xf]
    %v1954 = vld [vmem:[#allocation7 + $0x6c] sm:$0xff]
    %v1955 = vld [vmem:[#allocation7 + $0x74] sm:$0xf]
    %v1956 = vld [vmem:[#allocation7 + $0x78] sm:$0xff]
    %v1957 = vld [vmem:[#allocation7 + $0x80] sm:$0xf]
    %v1958 = vld [vmem:[#allocation7 + $0x84] sm:$0xff]
    %v1959 = vld [vmem:[#allocation7 + $0x8c] sm:$0xf]
    %v1960 = vld [vmem:[#allocation7 + $0x90] sm:$0xff]
    %v1961 = vld [vmem:[#allocation7 + $0x98] sm:$0xf]
    %v1962 = vld [vmem:[#allocation7 + $0x9c] sm:$0xff]
    %v1963 = vld [vmem:[#allocation7 + $0xa4] sm:$0xf]
    %v1964 = vld [vmem:[#allocation7 + $0xa8] sm:$0xff]
    %v1965 = vld [vmem:[#allocation7 + $0xb0] sm:$0xf]
    %v1966 = vld [vmem:[#allocation7 + $0xb4] sm:$0xff]
    %v1967 = vld [vmem:[#allocation7 + $0xbc] sm:$0xf]
    %v1968 = vlaneseq
    %v1969 = vshrl.u32 %v1968, 7
    %v1970 = vsub.s32 0, %v1969
    %v1971 = vrot.slane %v1932, %v1970
    %v1972 = vlaneseq
    %v1973 = vshrl.u32 %v1972, 7
    %v1974 = vsub.s32 0, %v1973
    %v1975 = vrot.slane %v1933, %v1974
    %v1976 = vlaneseq
    %v1977 = vshrl.u32 %v1976, 7
    %v1978 = vsub.s32 0, %v1977
    %v1979 = vrot.slane %v1934, %v1978
    %v2012 = vunpack.c.l.b16 %v1936
    %v2013 = vunpack.c.h.b16 %v1936
    %v2014 = vunpack.c.l.b16 %v1937
    %v2015 = vunpack.c.l.b16 %v1938
    %v2016 = vunpack.c.h.b16 %v1938
    %v2017 = vunpack.c.l.b16 %v1939
    %v2018 = vunpack.c.l.b16 %v1940
    %v2019 = vunpack.c.h.b16 %v1940
    %v2020 = vunpack.c.l.b16 %v1941
    %v2021 = vunpack.c.l.b16 %v1942
    %v2022 = vunpack.c.h.b16 %v1942
    %v2023 = vunpack.c.l.b16 %v1943
    %v2024 = vunpack.c.l.b16 %v1944
    %v2025 = vunpack.c.h.b16 %v1944
    %v2026 = vunpack.c.l.b16 %v1945
    %v2027 = vunpack.c.l.b16 %v1946
    %v2028 = vunpack.c.h.b16 %v1946
    %v2029 = vunpack.c.l.b16 %v1947
    %v2030 = vunpack.c.l.b16 %v1948
    %v2031 = vunpack.c.h.b16 %v1948
    %v2032 = vunpack.c.l.b16 %v1949
    %v2033 = vunpack.c.l.b16 %v1950
    %v2034 = vunpack.c.h.b16 %v1950
    %v2035 = vunpack.c.l.b16 %v1951
    %v2036 = vunpack.c.l.b16 %v1952
    %v2037 = vunpack.c.h.b16 %v1952
    %v2038 = vunpack.c.l.b16 %v1953
    %v2039 = vunpack.c.l.b16 %v1954
    %v2040 = vunpack.c.h.b16 %v1954
    %v2041 = vunpack.c.l.b16 %v1955
    %v2042 = vunpack.c.l.b16 %v1956
    %v2043 = vunpack.c.h.b16 %v1956
    %v2044 = vunpack.c.l.b16 %v1957
    %v2045 = vunpack.c.l.b16 %v1958
    %v2046 = vunpack.c.h.b16 %v1958
    %v2047 = vunpack.c.l.b16 %v1959
    %v2048 = vunpack.c.l.b16 %v1960
    %v2049 = vunpack.c.h.b16 %v1960
    %v2050 = vunpack.c.l.b16 %v1961
    %v2051 = vunpack.c.l.b16 %v1962
    %v2052 = vunpack.c.h.b16 %v1962
    %v2053 = vunpack.c.l.b16 %v1963
    %v2054 = vunpack.c.l.b16 %v1964
    %v2055 = vunpack.c.h.b16 %v1964
    %v2056 = vunpack.c.l.b16 %v1965
    %v2057 = vunpack.c.l.b16 %v1966
    %v2058 = vunpack.c.h.b16 %v1966
    %v2059 = vunpack.c.l.b16 %v1967
    %v2060 = vpack.c.b16 %v2015, %v2012
    %v2061 = vpack.c.b16 %v2016, %v2013
    %v2062 = vpack.c.b16 %v2017, %v2014
    %v2063 = vpack.c.b16 %v2021, %v2018
    %v2064 = vpack.c.b16 %v2022, %v2019
    %v2065 = vpack.c.b16 %v2023, %v2020
    %v2066 = vpack.c.b16 %v2027, %v2024
    %v2067 = vpack.c.b16 %v2028, %v2025
    %v2068 = vpack.c.b16 %v2029, %v2026
    %v2069 = vpack.c.b16 %v2033, %v2030
    %v2070 = vpack.c.b16 %v2034, %v2031
    %v2071 = vpack.c.b16 %v2035, %v2032
    %v2072 = vpack.c.b16 %v2039, %v2036
    %v2073 = vpack.c.b16 %v2040, %v2037
    %v2074 = vpack.c.b16 %v2041, %v2038
    %v2075 = vpack.c.b16 %v2045, %v2042
    %v2076 = vpack.c.b16 %v2046, %v2043
    %v2077 = vpack.c.b16 %v2047, %v2044
    %v2078 = vpack.c.b16 %v2051, %v2048
    %v2079 = vpack.c.b16 %v2052, %v2049
    %v2080 = vpack.c.b16 %v2053, %v2050
    %v2081 = vpack.c.b16 %v2057, %v2054
    %v2082 = vpack.c.b16 %v2058, %v2055
    %v2083 = vpack.c.b16 %v2059, %v2056
    %2108 = vmatprep.subr.bf16.mxu0 %v2061
    %2109 = vmatpush1.bf16.msra.mxu0 %v2060
    %2110 = vmatprep.subr.bf16.mxu0 %v2064
    %2111 = vmatpush1.bf16.msra.mxu0 %v2063
    %2112 = vmatprep.subr.bf16.mxu0 %v2067
    %2113 = vmatpush1.bf16.msra.mxu0 %v2066
    %2114 = vmatprep.subr.bf16.mxu0 %v2070
    %2115 = vmatpush1.bf16.msra.mxu0 %v2069
    %2116 = vmatprep.subr.bf16.mxu0 %v2073
    %2117 = vmatpush1.bf16.msra.mxu0 %v2072
    %2118 = vmatprep.subr.bf16.mxu0 %v2076
    %2119 = vmatpush1.bf16.msra.mxu0 %v2075
    %2120 = vmatprep.subr.bf16.mxu0 %v2079
    %2121 = vmatpush1.bf16.msra.mxu0 %v2078
    %2122 = vmatprep.subr.bf16.mxu0 %v2082
    %2123 = vmatpush1.bf16.msra.mxu0 %v2081
    %2124 = vmatprep.subr.bf16.mxu0 0
    %2125 = vmatpush1.bf16.msra.mxu0 0
    %2126 = vmatprep.subr.bf16.mxu0 0
    %2127 = vmatpush1.bf16.msra.mxu0 0
    %2128 = vmatprep.subr.bf16.mxu0 0
    %2129 = vmatpush1.bf16.msra.mxu0 0
    %2130 = vmatprep.subr.bf16.mxu0 0
    %2131 = vmatpush1.bf16.msra.mxu0 0
    %2132 = vmatprep.subr.bf16.mxu0 0
    %2133 = vmatpush1.bf16.msra.mxu0 0
    %2134 = vmatprep.subr.bf16.mxu0 0
    %2135 = vmatpush1.bf16.msra.mxu0 0
    %2136 = vmatprep.subr.bf16.mxu0 0
    %2137 = vmatpush1.bf16.msra.mxu0 0
    %2138 = vmatprep.subr.bf16.mxu0 0
    %2139 = vmatpush1.bf16.msra.mxu0 0
    %2140 = vmatprep.mubr.bf16.mxu0 0
    %2141 = vmatmul.mubr.bf16.gmra.mrb[0].mxu0 %v1935
    %v2142 = vpop.f32.mrb[0].mxu0
    %v2143 = vadd.f32 %v1971, %v2142
    %v2144 = vpop.f32.mrb[0].mxu0
    %v2145 = vadd.f32 %v1975, %v2144
    %v2146 = vpop.f32.mrb[0].mxu0
    %v2147 = vadd.f32 %v1971, %v2146
    %v2148 = vpop.f32.mrb[0].mxu0
    %v2149 = vadd.f32 %v1975, %v2148
    %2150 = vdwg.mxu0
    %2151 = vmatprep.subr.bf16.mxu0 0
    %2152 = vmatpush1.bf16.msra.mxu0 %v2062
    %2153 = vmatprep.subr.bf16.mxu0 0
    %2154 = vmatpush1.bf16.msra.mxu0 %v2065
    %2155 = vmatprep.subr.bf16.mxu0 0
    %2156 = vmatpush1.bf16.msra.mxu0 %v2068
    %2157 = vmatprep.subr.bf16.mxu0 0
    %2158 = vmatpush1.bf16.msra.mxu0 %v2071
    %2159 = vmatprep.subr.bf16.mxu0 0
    %2160 = vmatpush1.bf16.msra.mxu0 %v2074
    %2161 = vmatprep.subr.bf16.mxu0 0
    %2162 = vmatpush1.bf16.msra.mxu0 %v2077
    %2163 = vmatprep.subr.bf16.mxu0 0
    %2164 = vmatpush1.bf16.msra.mxu0 %v2080
    %2165 = vmatprep.subr.bf16.mxu0 0
    %2166 = vmatpush1.bf16.msra.mxu0 %v2083
    %2167 = vmatprep.subr.bf16.mxu0 0
    %2168 = vmatpush1.bf16.msra.mxu0 0
    %2169 = vmatprep.subr.bf16.mxu0 0
    %2170 = vmatpush1.bf16.msra.mxu0 0
    %2171 = vmatprep.subr.bf16.mxu0 0
    %2172 = vmatpush1.bf16.msra.mxu0 0
    %2173 = vmatprep.subr.bf16.mxu0 0
    %2174 = vmatpush1.bf16.msra.mxu0 0
    %2175 = vmatprep.subr.bf16.mxu0 0
    %2176 = vmatpush1.bf16.msra.mxu0 0
    %2177 = vmatprep.subr.bf16.mxu0 0
    %2178 = vmatpush1.bf16.msra.mxu0 0
    %2179 = vmatprep.subr.bf16.mxu0 0
    %2180 = vmatpush1.bf16.msra.mxu0 0
    %2181 = vmatprep.subr.bf16.mxu0 0
    %2182 = vmatpush1.bf16.msra.mxu0 0
    %2183 = vmatprep.mubr.bf16.mxu0 0
    %2184 = vmatmul.mubr.bf16.gmra.mrb[0].mxu0 %v1935
    %v2185 = vpop.f32.mrb[0].mxu0
    %v2186 = vadd.f32 %v1979, %v2185
    %v2187 = vpop.f32.mrb[0].mxu0
    %v2188 = vpop.f32.mrb[0].mxu0
    %v2189 = vadd.f32 %v1979, %v2188
    %v2190 = vpop.f32.mrb[0].mxu0
    %2191 = vdwg.mxu0
    %v2192 = vpack.c.bf16 %v2143, %v2143
    %v2193 = vpack.c.bf16 %v2147, %v2147
    %v2194 = vpack.c.bf16 %v2145, %v2145
    %v2195 = vpack.c.bf16 %v2149, %v2149
    %v2196 = vpack.c.bf16 %v2186, %v2186
    %v2197 = vpack.c.bf16 %v2189, %v2189
    %v2199 = vsel %vm477, %v2192, 0
    %v2202 = vsel %vm477, %v2194, 0
    %2204 = vmatprep.subr.bf16.mxu0 0
    %2205 = vmatpush1.bf16.xpose.msra.mxu0 %v2202
    %2206 = vmatprep.subr.bf16.mxu0 0
    %2207 = vmatpush1.bf16.xpose.msra.mxu0 0
    %2208 = vmatprep.subr.bf16.mxu0 0
    %2209 = vmatpush1.bf16.xpose.msra.mxu0 0
    %2210 = vmatprep.subr.bf16.mxu0 0
    %2211 = vmatpush1.bf16.xpose.msra.mxu0 0
    %2212 = vmatprep.subr.bf16.mxu0 0
    %2213 = vmatpush1.bf16.xpose.msra.mxu0 0
    %2214 = vmatprep.subr.bf16.mxu0 0
    %2215 = vmatpush1.bf16.xpose.msra.mxu0 0
    %2216 = vmatprep.subr.bf16.mxu0 0
    %2217 = vmatpush1.bf16.xpose.msra.mxu0 0
    %2218 = vmatprep.subr.bf16.mxu0 0
    %2219 = vmatpush1.bf16.xpose.msra.mxu0 0
    %2220 = vmatprep.subr.bf16.mxu0 0
    %2221 = vmatpush1.bf16.xpose.msra.mxu0 0
    %2222 = vmatprep.subr.bf16.mxu0 0
    %2223 = vmatpush1.bf16.xpose.msra.mxu0 0
    %2224 = vmatprep.subr.bf16.mxu0 0
    %2225 = vmatpush1.bf16.xpose.msra.mxu0 0
    %2226 = vmatprep.subr.bf16.mxu0 0
    %2227 = vmatpush1.bf16.xpose.msra.mxu0 0
    %2228 = vmatprep.subr.bf16.mxu0 0
    %2229 = vmatpush1.bf16.xpose.msra.mxu0 0
    %2230 = vmatprep.subr.bf16.mxu0 0
    %2231 = vmatpush1.bf16.xpose.msra.mxu0 0
    %2232 = vmatprep.subr.bf16.mxu0 0
    %2233 = vmatpush1.bf16.xpose.msra.mxu0 0
    %2234 = vmatprep.subr.bf16.mxu0 0
    %2235 = vmatpush1.bf16.xpose.msra.mxu0 0
    %2236 = vmatprep.mubr.bf16.mxu0 0
    %2237 = vmatmul.mubr.bf16.gmra.mrb[0].mxu0 %v2199
    %v2238 = vpop.f32.mrb[0].mxu0
    %v2239 = vadd.f32 %v172, %v2238
    %v2240 = vpop.f32.mrb[0].mxu0
    %v2241 = vpop.f32.mrb[0].mxu0
    %v2242 = vpop.f32.mrb[0].mxu0
    %2243 = vdwg.mxu0
    %v2245 = vsel %vm477, %v2193, 0
    %v2248 = vsel %vm477, %v2195, 0
    %2250 = vmatprep.subr.bf16.mxu0 0
    %2251 = vmatpush1.bf16.xpose.msra.mxu0 %v2248
    %2252 = vmatprep.subr.bf16.mxu0 0
    %2253 = vmatpush1.bf16.xpose.msra.mxu0 0
    %2254 = vmatprep.subr.bf16.mxu0 0
    %2255 = vmatpush1.bf16.xpose.msra.mxu0 0
    %2256 = vmatprep.subr.bf16.mxu0 0
    %2257 = vmatpush1.bf16.xpose.msra.mxu0 0
    %2258 = vmatprep.subr.bf16.mxu0 0
    %2259 = vmatpush1.bf16.xpose.msra.mxu0 0
    %2260 = vmatprep.subr.bf16.mxu0 0
    %2261 = vmatpush1.bf16.xpose.msra.mxu0 0
    %2262 = vmatprep.subr.bf16.mxu0 0
    %2263 = vmatpush1.bf16.xpose.msra.mxu0 0
    %2264 = vmatprep.subr.bf16.mxu0 0
    %2265 = vmatpush1.bf16.xpose.msra.mxu0 0
    %2266 = vmatprep.subr.bf16.mxu0 0
    %2267 = vmatpush1.bf16.xpose.msra.mxu0 0
    %2268 = vmatprep.subr.bf16.mxu0 0
    %2269 = vmatpush1.bf16.xpose.msra.mxu0 0
    %2270 = vmatprep.subr.bf16.mxu0 0
    %2271 = vmatpush1.bf16.xpose.msra.mxu0 0
    %2272 = vmatprep.subr.bf16.mxu0 0
    %2273 = vmatpush1.bf16.xpose.msra.mxu0 0
    %2274 = vmatprep.subr.bf16.mxu0 0
    %2275 = vmatpush1.bf16.xpose.msra.mxu0 0
    %2276 = vmatprep.subr.bf16.mxu0 0
    %2277 = vmatpush1.bf16.xpose.msra.mxu0 0
    %2278 = vmatprep.subr.bf16.mxu0 0
    %2279 = vmatpush1.bf16.xpose.msra.mxu0 0
    %2280 = vmatprep.subr.bf16.mxu0 0
    %2281 = vmatpush1.bf16.xpose.msra.mxu0 0
    %2282 = vmatprep.mubr.bf16.mxu0 0
    %2283 = vmatmul.mubr.bf16.gmra.mrb[0].mxu0 %v2245
    %v2284 = vpop.f32.mrb[0].mxu0
    %v2285 = vadd.f32 %v173, %v2284
    %v2286 = vpop.f32.mrb[0].mxu0
    %v2287 = vpop.f32.mrb[0].mxu0
    %v2288 = vpop.f32.mrb[0].mxu0
    %2289 = vdwg.mxu0
    %v2290 = vsel %vm570, %v2239, -inf
    %2291 = vmax.xlane.f32.xlu0 %v2290
    %v2292 = vpop.xlane.xlu0 %2291
    %v2293 = vsel %vm570, %v2285, -inf
    %2294 = vmax.xlane.f32.xlu0 %v2293
    %v2295 = vpop.xlane.xlu0 %2294
    %v2296 = vsub.f32 %v2239, %v2292
    %v2297 = vsub.f32 %v2285, %v2295
    %v2298 = vmul.f32 %v2296, 1.442695
    %v2299 = vpow.pop %v2298
    %v2300 = vmul.f32 %v2297, 1.442695
    %v2301 = vpow.pop %v2300
    %v2302 = vsel %vm570, %v2299, 0.0
    %2303 = vadd.xlane.f32.xlu0 %v2302
    %v2304 = vpop.xlane.xlu0 %2303
    %v2305 = vsel %vm570, %v2301, 0.0
    %2306 = vadd.xlane.f32.xlu0 %v2305
    %v2307 = vpop.xlane.xlu0 %2306
    %v2308 = vrcp.pop %v2304
    %v2309 = vrcp.pop %v2307
    %v2310 = vmul.f32 %v2299, %v2308
    %v2311 = vmul.f32 %v2301, %v2309
    %v2312 = vpack.c.bf16 %v2310, %v2310
    %v2313 = vpack.c.bf16 %v2311, %v2311
    %v2315 = vsel %vm570, %v2312, 0
    %v2318 = vsel %vm598, %v2196, 0
    %2320 = vmatprep.subr.bf16.mxu0 0
    %2321 = vmatpush1.bf16.msra.mxu0 %v2318
    %2322 = vmatprep.subr.bf16.mxu0 0
    %2323 = vmatpush1.bf16.msra.mxu0 0
    %2324 = vmatprep.subr.bf16.mxu0 0
    %2325 = vmatpush1.bf16.msra.mxu0 0
    %2326 = vmatprep.subr.bf16.mxu0 0
    %2327 = vmatpush1.bf16.msra.mxu0 0
    %2328 = vmatprep.subr.bf16.mxu0 0
    %2329 = vmatpush1.bf16.msra.mxu0 0
    %2330 = vmatprep.subr.bf16.mxu0 0
    %2331 = vmatpush1.bf16.msra.mxu0 0
    %2332 = vmatprep.subr.bf16.mxu0 0
    %2333 = vmatpush1.bf16.msra.mxu0 0
    %2334 = vmatprep.subr.bf16.mxu0 0
    %2335 = vmatpush1.bf16.msra.mxu0 0
    %2336 = vmatprep.subr.bf16.mxu0 0
    %2337 = vmatpush1.bf16.msra.mxu0 0
    %2338 = vmatprep.subr.bf16.mxu0 0
    %2339 = vmatpush1.bf16.msra.mxu0 0
    %2340 = vmatprep.subr.bf16.mxu0 0
    %2341 = vmatpush1.bf16.msra.mxu0 0
    %2342 = vmatprep.subr.bf16.mxu0 0
    %2343 = vmatpush1.bf16.msra.mxu0 0
    %2344 = vmatprep.subr.bf16.mxu0 0
    %2345 = vmatpush1.bf16.msra.mxu0 0
    %2346 = vmatprep.subr.bf16.mxu0 0
    %2347 = vmatpush1.bf16.msra.mxu0 0
    %2348 = vmatprep.subr.bf16.mxu0 0
    %2349 = vmatpush1.bf16.msra.mxu0 0
    %2350 = vmatprep.subr.bf16.mxu0 0
    %2351 = vmatpush1.bf16.msra.mxu0 0
    %2352 = vmatprep.mubr.bf16.mxu0 0
    %2353 = vmatmul.mubr.bf16.gmra.mrb[0].mxu0 %v2315
    %v2354 = vpop.f32.mrb[0].mxu0
    %v2355 = vadd.f32 0.0, %v2354
    %v2356 = vpop.f32.mrb[0].mxu0
    %v2357 = vpop.f32.mrb[0].mxu0
    %v2358 = vpop.f32.mrb[0].mxu0
    %2359 = vdwg.mxu0
    %v2361 = vsel %vm570, %v2313, 0
    %v2364 = vsel %vm598, %v2197, 0
    %2366 = vmatprep.subr.bf16.mxu0 0
    %2367 = vmatpush1.bf16.msra.mxu0 %v2364
    %2368 = vmatprep.subr.bf16.mxu0 0
    %2369 = vmatpush1.bf16.msra.mxu0 0
    %2370 = vmatprep.subr.bf16.mxu0 0
    %2371 = vmatpush1.bf16.msra.mxu0 0
    %2372 = vmatprep.subr.bf16.mxu0 0
    %2373 = vmatpush1.bf16.msra.mxu0 0
    %2374 = vmatprep.subr.bf16.mxu0 0
    %2375 = vmatpush1.bf16.msra.mxu0 0
    %2376 = vmatprep.subr.bf16.mxu0 0
    %2377 = vmatpush1.bf16.msra.mxu0 0
    %2378 = vmatprep.subr.bf16.mxu0 0
    %2379 = vmatpush1.bf16.msra.mxu0 0
    %2380 = vmatprep.subr.bf16.mxu0 0
    %2381 = vmatpush1.bf16.msra.mxu0 0
    %2382 = vmatprep.subr.bf16.mxu0 0
    %2383 = vmatpush1.bf16.msra.mxu0 0
    %2384 = vmatprep.subr.bf16.mxu0 0
    %2385 = vmatpush1.bf16.msra.mxu0 0
    %2386 = vmatprep.subr.bf16.mxu0 0
    %2387 = vmatpush1.bf16.msra.mxu0 0
    %2388 = vmatprep.subr.bf16.mxu0 0
    %2389 = vmatpush1.bf16.msra.mxu0 0
    %2390 = vmatprep.subr.bf16.mxu0 0
    %2391 = vmatpush1.bf16.msra.mxu0 0
    %2392 = vmatprep.subr.bf16.mxu0 0
    %2393 = vmatpush1.bf16.msra.mxu0 0
    %2394 = vmatprep.subr.bf16.mxu0 0
    %2395 = vmatpush1.bf16.msra.mxu0 0
    %2396 = vmatprep.subr.bf16.mxu0 0
    %2397 = vmatpush1.bf16.msra.mxu0 0
    %2398 = vmatprep.mubr.bf16.mxu0 0
    %2399 = vmatmul.mubr.bf16.gmra.mrb[0].mxu0 %v2361
    %v2400 = vpop.f32.mrb[0].mxu0
    %v2401 = vadd.f32 0.0, %v2400
    %v2402 = vpop.f32.mrb[0].mxu0
    %v2403 = vpop.f32.mrb[0].mxu0
    %v2404 = vpop.f32.mrb[0].mxu0
    %2405 = vdwg.mxu0
    %2406 = vst.msk [vmem:[#allocation2] sm:$0xff] %vm477, %v2355
    %2407 = vst.msk [vmem:[#allocation2 + $0x8] sm:$0xff] %vm477, %v2401
    %2409 = vrot.lane.b32.xlu0 %v2192, 96
    %v2410 = vpop.permute.xlu0 %2409
    %2412 = vrot.lane.b32.xlu0 %v2194, 96
    %v2413 = vpop.permute.xlu0 %2412
    %v2415 = vsel %vm477, %v2410, 0
    %v2418 = vsel %vm477, %v2413, 0
    %2420 = vmatprep.subr.bf16.mxu0 0
    %2421 = vmatpush1.bf16.xpose.msra.mxu0 %v2418
    %2422 = vmatprep.subr.bf16.mxu0 0
    %2423 = vmatpush1.bf16.xpose.msra.mxu0 0
    %2424 = vmatprep.subr.bf16.mxu0 0
    %2425 = vmatpush1.bf16.xpose.msra.mxu0 0
    %2426 = vmatprep.subr.bf16.mxu0 0
    %2427 = vmatpush1.bf16.xpose.msra.mxu0 0
    %2428 = vmatprep.subr.bf16.mxu0 0
    %2429 = vmatpush1.bf16.xpose.msra.mxu0 0
    %2430 = vmatprep.subr.bf16.mxu0 0
    %2431 = vmatpush1.bf16.xpose.msra.mxu0 0
    %2432 = vmatprep.subr.bf16.mxu0 0
    %2433 = vmatpush1.bf16.xpose.msra.mxu0 0
    %2434 = vmatprep.subr.bf16.mxu0 0
    %2435 = vmatpush1.bf16.xpose.msra.mxu0 0
    %2436 = vmatprep.subr.bf16.mxu0 0
    %2437 = vmatpush1.bf16.xpose.msra.mxu0 0
    %2438 = vmatprep.subr.bf16.mxu0 0
    %2439 = vmatpush1.bf16.xpose.msra.mxu0 0
    %2440 = vmatprep.subr.bf16.mxu0 0
    %2441 = vmatpush1.bf16.xpose.msra.mxu0 0
    %2442 = vmatprep.subr.bf16.mxu0 0
    %2443 = vmatpush1.bf16.xpose.msra.mxu0 0
    %2444 = vmatprep.subr.bf16.mxu0 0
    %2445 = vmatpush1.bf16.xpose.msra.mxu0 0
    %2446 = vmatprep.subr.bf16.mxu0 0
    %2447 = vmatpush1.bf16.xpose.msra.mxu0 0
    %2448 = vmatprep.subr.bf16.mxu0 0
    %2449 = vmatpush1.bf16.xpose.msra.mxu0 0
    %2450 = vmatprep.subr.bf16.mxu0 0
    %2451 = vmatpush1.bf16.xpose.msra.mxu0 0
    %2452 = vmatprep.mubr.bf16.mxu0 0
    %2453 = vmatmul.mubr.bf16.gmra.mrb[0].mxu0 %v2415
    %v2454 = vpop.f32.mrb[0].mxu0
    %v2455 = vadd.f32 %v172, %v2454
    %v2456 = vpop.f32.mrb[0].mxu0
    %v2457 = vpop.f32.mrb[0].mxu0
    %v2458 = vpop.f32.mrb[0].mxu0
    %2459 = vdwg.mxu0
    %2461 = vrot.lane.b32.xlu0 %v2193, 96
    %v2462 = vpop.permute.xlu0 %2461
    %2464 = vrot.lane.b32.xlu0 %v2195, 96
    %v2465 = vpop.permute.xlu0 %2464
    %v2467 = vsel %vm477, %v2462, 0
    %v2470 = vsel %vm477, %v2465, 0
    %2472 = vmatprep.subr.bf16.mxu0 0
    %2473 = vmatpush1.bf16.xpose.msra.mxu0 %v2470
    %2474 = vmatprep.subr.bf16.mxu0 0
    %2475 = vmatpush1.bf16.xpose.msra.mxu0 0
    %2476 = vmatprep.subr.bf16.mxu0 0
    %2477 = vmatpush1.bf16.xpose.msra.mxu0 0
    %2478 = vmatprep.subr.bf16.mxu0 0
    %2479 = vmatpush1.bf16.xpose.msra.mxu0 0
    %2480 = vmatprep.subr.bf16.mxu0 0
    %2481 = vmatpush1.bf16.xpose.msra.mxu0 0
    %2482 = vmatprep.subr.bf16.mxu0 0
    %2483 = vmatpush1.bf16.xpose.msra.mxu0 0
    %2484 = vmatprep.subr.bf16.mxu0 0
    %2485 = vmatpush1.bf16.xpose.msra.mxu0 0
    %2486 = vmatprep.subr.bf16.mxu0 0
    %2487 = vmatpush1.bf16.xpose.msra.mxu0 0
    %2488 = vmatprep.subr.bf16.mxu0 0
    %2489 = vmatpush1.bf16.xpose.msra.mxu0 0
    %2490 = vmatprep.subr.bf16.mxu0 0
    %2491 = vmatpush1.bf16.xpose.msra.mxu0 0
    %2492 = vmatprep.subr.bf16.mxu0 0
    %2493 = vmatpush1.bf16.xpose.msra.mxu0 0
    %2494 = vmatprep.subr.bf16.mxu0 0
    %2495 = vmatpush1.bf16.xpose.msra.mxu0 0
    %2496 = vmatprep.subr.bf16.mxu0 0
    %2497 = vmatpush1.bf16.xpose.msra.mxu0 0
    %2498 = vmatprep.subr.bf16.mxu0 0
    %2499 = vmatpush1.bf16.xpose.msra.mxu0 0
    %2500 = vmatprep.subr.bf16.mxu0 0
    %2501 = vmatpush1.bf16.xpose.msra.mxu0 0
    %2502 = vmatprep.subr.bf16.mxu0 0
    %2503 = vmatpush1.bf16.xpose.msra.mxu0 0
    %2504 = vmatprep.mubr.bf16.mxu0 0
    %2505 = vmatmul.mubr.bf16.gmra.mrb[0].mxu0 %v2467
    %v2506 = vpop.f32.mrb[0].mxu0
    %v2507 = vadd.f32 %v173, %v2506
    %v2508 = vpop.f32.mrb[0].mxu0
    %v2509 = vpop.f32.mrb[0].mxu0
    %v2510 = vpop.f32.mrb[0].mxu0
    %2511 = vdwg.mxu0
    %v2512 = vsel %vm570, %v2455, -inf
    %2513 = vmax.xlane.f32.xlu0 %v2512
    %v2514 = vpop.xlane.xlu0 %2513
    %v2515 = vsel %vm570, %v2507, -inf
    %2516 = vmax.xlane.f32.xlu0 %v2515
    %v2517 = vpop.xlane.xlu0 %2516
    %v2518 = vsub.f32 %v2455, %v2514
    %v2519 = vsub.f32 %v2507, %v2517
    %v2520 = vmul.f32 %v2518, 1.442695
    %v2521 = vpow.pop %v2520
    %v2522 = vmul.f32 %v2519, 1.442695
    %v2523 = vpow.pop %v2522
    %v2524 = vsel %vm570, %v2521, 0.0
    %2525 = vadd.xlane.f32.xlu0 %v2524
    %v2526 = vpop.xlane.xlu0 %2525
    %v2527 = vsel %vm570, %v2523, 0.0
    %2528 = vadd.xlane.f32.xlu0 %v2527
    %v2529 = vpop.xlane.xlu0 %2528
    %v2530 = vrcp.pop %v2526
    %v2531 = vrcp.pop %v2529
    %v2532 = vmul.f32 %v2521, %v2530
    %v2533 = vmul.f32 %v2523, %v2531
    %v2534 = vpack.c.bf16 %v2532, %v2532
    %v2535 = vpack.c.bf16 %v2533, %v2533
    %2537 = vrot.lane.b32.xlu0 %v2196, 96
    %v2538 = vpop.permute.xlu0 %2537
    %v2540 = vsel %vm570, %v2534, 0
    %v2543 = vsel %vm598, %v2538, 0
    %2545 = vmatprep.subr.bf16.mxu0 0
    %2546 = vmatpush1.bf16.msra.mxu0 %v2543
    %2547 = vmatprep.subr.bf16.mxu0 0
    %2548 = vmatpush1.bf16.msra.mxu0 0
    %2549 = vmatprep.subr.bf16.mxu0 0
    %2550 = vmatpush1.bf16.msra.mxu0 0
    %2551 = vmatprep.subr.bf16.mxu0 0
    %2552 = vmatpush1.bf16.msra.mxu0 0
    %2553 = vmatprep.subr.bf16.mxu0 0
    %2554 = vmatpush1.bf16.msra.mxu0 0
    %2555 = vmatprep.subr.bf16.mxu0 0
    %2556 = vmatpush1.bf16.msra.mxu0 0
    %2557 = vmatprep.subr.bf16.mxu0 0
    %2558 = vmatpush1.bf16.msra.mxu0 0
    %2559 = vmatprep.subr.bf16.mxu0 0
    %2560 = vmatpush1.bf16.msra.mxu0 0
    %2561 = vmatprep.subr.bf16.mxu0 0
    %2562 = vmatpush1.bf16.msra.mxu0 0
    %2563 = vmatprep.subr.bf16.mxu0 0
    %2564 = vmatpush1.bf16.msra.mxu0 0
    %2565 = vmatprep.subr.bf16.mxu0 0
    %2566 = vmatpush1.bf16.msra.mxu0 0
    %2567 = vmatprep.subr.bf16.mxu0 0
    %2568 = vmatpush1.bf16.msra.mxu0 0
    %2569 = vmatprep.subr.bf16.mxu0 0
    %2570 = vmatpush1.bf16.msra.mxu0 0
    %2571 = vmatprep.subr.bf16.mxu0 0
    %2572 = vmatpush1.bf16.msra.mxu0 0
    %2573 = vmatprep.subr.bf16.mxu0 0
    %2574 = vmatpush1.bf16.msra.mxu0 0
    %2575 = vmatprep.subr.bf16.mxu0 0
    %2576 = vmatpush1.bf16.msra.mxu0 0
    %2577 = vmatprep.mubr.bf16.mxu0 0
    %2578 = vmatmul.mubr.bf16.gmra.mrb[0].mxu0 %v2540
    %v2579 = vpop.f32.mrb[0].mxu0
    %v2580 = vadd.f32 0.0, %v2579
    %v2581 = vpop.f32.mrb[0].mxu0
    %v2582 = vpop.f32.mrb[0].mxu0
    %v2583 = vpop.f32.mrb[0].mxu0
    %2584 = vdwg.mxu0
    %2586 = vrot.lane.b32.xlu0 %v2197, 96
    %v2587 = vpop.permute.xlu0 %2586
    %v2589 = vsel %vm570, %v2535, 0
    %v2592 = vsel %vm598, %v2587, 0
    %2594 = vmatprep.subr.bf16.mxu0 0
    %2595 = vmatpush1.bf16.msra.mxu0 %v2592
    %2596 = vmatprep.subr.bf16.mxu0 0
    %2597 = vmatpush1.bf16.msra.mxu0 0
    %2598 = vmatprep.subr.bf16.mxu0 0
    %2599 = vmatpush1.bf16.msra.mxu0 0
    %2600 = vmatprep.subr.bf16.mxu0 0
    %2601 = vmatpush1.bf16.msra.mxu0 0
    %2602 = vmatprep.subr.bf16.mxu0 0
    %2603 = vmatpush1.bf16.msra.mxu0 0
    %2604 = vmatprep.subr.bf16.mxu0 0
    %2605 = vmatpush1.bf16.msra.mxu0 0
    %2606 = vmatprep.subr.bf16.mxu0 0
    %2607 = vmatpush1.bf16.msra.mxu0 0
    %2608 = vmatprep.subr.bf16.mxu0 0
    %2609 = vmatpush1.bf16.msra.mxu0 0
    %2610 = vmatprep.subr.bf16.mxu0 0
    %2611 = vmatpush1.bf16.msra.mxu0 0
    %2612 = vmatprep.subr.bf16.mxu0 0
    %2613 = vmatpush1.bf16.msra.mxu0 0
    %2614 = vmatprep.subr.bf16.mxu0 0
    %2615 = vmatpush1.bf16.msra.mxu0 0
    %2616 = vmatprep.subr.bf16.mxu0 0
    %2617 = vmatpush1.bf16.msra.mxu0 0
    %2618 = vmatprep.subr.bf16.mxu0 0
    %2619 = vmatpush1.bf16.msra.mxu0 0
    %2620 = vmatprep.subr.bf16.mxu0 0
    %2621 = vmatpush1.bf16.msra.mxu0 0
    %2622 = vmatprep.subr.bf16.mxu0 0
    %2623 = vmatpush1.bf16.msra.mxu0 0
    %2624 = vmatprep.subr.bf16.mxu0 0
    %2625 = vmatpush1.bf16.msra.mxu0 0
    %2626 = vmatprep.mubr.bf16.mxu0 0
    %2627 = vmatmul.mubr.bf16.gmra.mrb[0].mxu0 %v2589
    %v2628 = vpop.f32.mrb[0].mxu0
    %v2629 = vadd.f32 0.0, %v2628
    %v2630 = vpop.f32.mrb[0].mxu0
    %v2631 = vpop.f32.mrb[0].mxu0
    %v2632 = vpop.f32.mrb[0].mxu0
    %2633 = vdwg.mxu0
    %2636 = vrot.lane.b32.xlu0 %v2580, 32
    %v2637 = vpop.permute.xlu0 %2636
    %2638 = vrot.lane.b32.xlu0 %v2629, 32
    %v2639 = vpop.permute.xlu0 %2638
    %2642 = vst.msk [vmem:[#allocation2] sm:$0xff] %vm924, %v2637
    %2643 = vst.msk [vmem:[#allocation2 + $0x8] sm:$0xff] %vm924, %v2639
    %2644 = vrot.lane.b32.xlu0 %v2192, 64
    %v2645 = vpop.permute.xlu0 %2644
    %2646 = vrot.lane.b32.xlu0 %v2194, 64
    %v2647 = vpop.permute.xlu0 %2646
    %v2649 = vsel %vm477, %v2645, 0
    %v2652 = vsel %vm477, %v2647, 0
    %2654 = vmatprep.subr.bf16.mxu0 0
    %2655 = vmatpush1.bf16.xpose.msra.mxu0 %v2652
    %2656 = vmatprep.subr.bf16.mxu0 0
    %2657 = vmatpush1.bf16.xpose.msra.mxu0 0
    %2658 = vmatprep.subr.bf16.mxu0 0
    %2659 = vmatpush1.bf16.xpose.msra.mxu0 0
    %2660 = vmatprep.subr.bf16.mxu0 0
    %2661 = vmatpush1.bf16.xpose.msra.mxu0 0
    %2662 = vmatprep.subr.bf16.mxu0 0
    %2663 = vmatpush1.bf16.xpose.msra.mxu0 0
    %2664 = vmatprep.subr.bf16.mxu0 0
    %2665 = vmatpush1.bf16.xpose.msra.mxu0 0
    %2666 = vmatprep.subr.bf16.mxu0 0
    %2667 = vmatpush1.bf16.xpose.msra.mxu0 0
    %2668 = vmatprep.subr.bf16.mxu0 0
    %2669 = vmatpush1.bf16.xpose.msra.mxu0 0
    %2670 = vmatprep.subr.bf16.mxu0 0
    %2671 = vmatpush1.bf16.xpose.msra.mxu0 0
    %2672 = vmatprep.subr.bf16.mxu0 0
    %2673 = vmatpush1.bf16.xpose.msra.mxu0 0
    %2674 = vmatprep.subr.bf16.mxu0 0
    %2675 = vmatpush1.bf16.xpose.msra.mxu0 0
    %2676 = vmatprep.subr.bf16.mxu0 0
    %2677 = vmatpush1.bf16.xpose.msra.mxu0 0
    %2678 = vmatprep.subr.bf16.mxu0 0
    %2679 = vmatpush1.bf16.xpose.msra.mxu0 0
    %2680 = vmatprep.subr.bf16.mxu0 0
    %2681 = vmatpush1.bf16.xpose.msra.mxu0 0
    %2682 = vmatprep.subr.bf16.mxu0 0
    %2683 = vmatpush1.bf16.xpose.msra.mxu0 0
    %2684 = vmatprep.subr.bf16.mxu0 0
    %2685 = vmatpush1.bf16.xpose.msra.mxu0 0
    %2686 = vmatprep.mubr.bf16.mxu0 0
    %2687 = vmatmul.mubr.bf16.gmra.mrb[0].mxu0 %v2649
    %v2688 = vpop.f32.mrb[0].mxu0
    %v2689 = vadd.f32 %v172, %v2688
    %v2690 = vpop.f32.mrb[0].mxu0
    %v2691 = vpop.f32.mrb[0].mxu0
    %v2692 = vpop.f32.mrb[0].mxu0
    %2693 = vdwg.mxu0
    %2694 = vrot.lane.b32.xlu0 %v2193, 64
    %v2695 = vpop.permute.xlu0 %2694
    %2696 = vrot.lane.b32.xlu0 %v2195, 64
    %v2697 = vpop.permute.xlu0 %2696
    %v2699 = vsel %vm477, %v2695, 0
    %v2702 = vsel %vm477, %v2697, 0
    %2704 = vmatprep.subr.bf16.mxu0 0
    %2705 = vmatpush1.bf16.xpose.msra.mxu0 %v2702
    %2706 = vmatprep.subr.bf16.mxu0 0
    %2707 = vmatpush1.bf16.xpose.msra.mxu0 0
    %2708 = vmatprep.subr.bf16.mxu0 0
    %2709 = vmatpush1.bf16.xpose.msra.mxu0 0
    %2710 = vmatprep.subr.bf16.mxu0 0
    %2711 = vmatpush1.bf16.xpose.msra.mxu0 0
    %2712 = vmatprep.subr.bf16.mxu0 0
    %2713 = vmatpush1.bf16.xpose.msra.mxu0 0
    %2714 = vmatprep.subr.bf16.mxu0 0
    %2715 = vmatpush1.bf16.xpose.msra.mxu0 0
    %2716 = vmatprep.subr.bf16.mxu0 0
    %2717 = vmatpush1.bf16.xpose.msra.mxu0 0
    %2718 = vmatprep.subr.bf16.mxu0 0
    %2719 = vmatpush1.bf16.xpose.msra.mxu0 0
    %2720 = vmatprep.subr.bf16.mxu0 0
    %2721 = vmatpush1.bf16.xpose.msra.mxu0 0
    %2722 = vmatprep.subr.bf16.mxu0 0
    %2723 = vmatpush1.bf16.xpose.msra.mxu0 0
    %2724 = vmatprep.subr.bf16.mxu0 0
    %2725 = vmatpush1.bf16.xpose.msra.mxu0 0
    %2726 = vmatprep.subr.bf16.mxu0 0
    %2727 = vmatpush1.bf16.xpose.msra.mxu0 0
    %2728 = vmatprep.subr.bf16.mxu0 0
    %2729 = vmatpush1.bf16.xpose.msra.mxu0 0
    %2730 = vmatprep.subr.bf16.mxu0 0
    %2731 = vmatpush1.bf16.xpose.msra.mxu0 0
    %2732 = vmatprep.subr.bf16.mxu0 0
    %2733 = vmatpush1.bf16.xpose.msra.mxu0 0
    %2734 = vmatprep.subr.bf16.mxu0 0
    %2735 = vmatpush1.bf16.xpose.msra.mxu0 0
    %2736 = vmatprep.mubr.bf16.mxu0 0
    %2737 = vmatmul.mubr.bf16.gmra.mrb[0].mxu0 %v2699
    %v2738 = vpop.f32.mrb[0].mxu0
    %v2739 = vadd.f32 %v173, %v2738
    %v2740 = vpop.f32.mrb[0].mxu0
    %v2741 = vpop.f32.mrb[0].mxu0
    %v2742 = vpop.f32.mrb[0].mxu0
    %2743 = vdwg.mxu0
    %v2744 = vsel %vm570, %v2689, -inf
    %2745 = vmax.xlane.f32.xlu0 %v2744
    %v2746 = vpop.xlane.xlu0 %2745
    %v2747 = vsel %vm570, %v2739, -inf
    %2748 = vmax.xlane.f32.xlu0 %v2747
    %v2749 = vpop.xlane.xlu0 %2748
    %v2750 = vsub.f32 %v2689, %v2746
    %v2751 = vsub.f32 %v2739, %v2749
    %v2752 = vmul.f32 %v2750, 1.442695
    %v2753 = vpow.pop %v2752
    %v2754 = vmul.f32 %v2751, 1.442695
    %v2755 = vpow.pop %v2754
    %v2756 = vsel %vm570, %v2753, 0.0
    %2757 = vadd.xlane.f32.xlu0 %v2756
    %v2758 = vpop.xlane.xlu0 %2757
    %v2759 = vsel %vm570, %v2755, 0.0
    %2760 = vadd.xlane.f32.xlu0 %v2759
    %v2761 = vpop.xlane.xlu0 %2760
    %v2762 = vrcp.pop %v2758
    %v2763 = vrcp.pop %v2761
    %v2764 = vmul.f32 %v2753, %v2762
    %v2765 = vmul.f32 %v2755, %v2763
    %v2766 = vpack.c.bf16 %v2764, %v2764
    %v2767 = vpack.c.bf16 %v2765, %v2765
    %2768 = vrot.lane.b32.xlu0 %v2196, 64
    %v2769 = vpop.permute.xlu0 %2768
    %v2771 = vsel %vm570, %v2766, 0
    %v2774 = vsel %vm598, %v2769, 0
    %2776 = vmatprep.subr.bf16.mxu0 0
    %2777 = vmatpush1.bf16.msra.mxu0 %v2774
    %2778 = vmatprep.subr.bf16.mxu0 0
    %2779 = vmatpush1.bf16.msra.mxu0 0
    %2780 = vmatprep.subr.bf16.mxu0 0
    %2781 = vmatpush1.bf16.msra.mxu0 0
    %2782 = vmatprep.subr.bf16.mxu0 0
    %2783 = vmatpush1.bf16.msra.mxu0 0
    %2784 = vmatprep.subr.bf16.mxu0 0
    %2785 = vmatpush1.bf16.msra.mxu0 0
    %2786 = vmatprep.subr.bf16.mxu0 0
    %2787 = vmatpush1.bf16.msra.mxu0 0
    %2788 = vmatprep.subr.bf16.mxu0 0
    %2789 = vmatpush1.bf16.msra.mxu0 0
    %2790 = vmatprep.subr.bf16.mxu0 0
    %2791 = vmatpush1.bf16.msra.mxu0 0
    %2792 = vmatprep.subr.bf16.mxu0 0
    %2793 = vmatpush1.bf16.msra.mxu0 0
    %2794 = vmatprep.subr.bf16.mxu0 0
    %2795 = vmatpush1.bf16.msra.mxu0 0
    %2796 = vmatprep.subr.bf16.mxu0 0
    %2797 = vmatpush1.bf16.msra.mxu0 0
    %2798 = vmatprep.subr.bf16.mxu0 0
    %2799 = vmatpush1.bf16.msra.mxu0 0
    %2800 = vmatprep.subr.bf16.mxu0 0
    %2801 = vmatpush1.bf16.msra.mxu0 0
    %2802 = vmatprep.subr.bf16.mxu0 0
    %2803 = vmatpush1.bf16.msra.mxu0 0
    %2804 = vmatprep.subr.bf16.mxu0 0
    %2805 = vmatpush1.bf16.msra.mxu0 0
    %2806 = vmatprep.subr.bf16.mxu0 0
    %2807 = vmatpush1.bf16.msra.mxu0 0
    %2808 = vmatprep.mubr.bf16.mxu0 0
    %2809 = vmatmul.mubr.bf16.gmra.mrb[0].mxu0 %v2771
    %v2810 = vpop.f32.mrb[0].mxu0
    %v2811 = vadd.f32 0.0, %v2810
    %v2812 = vpop.f32.mrb[0].mxu0
    %v2813 = vpop.f32.mrb[0].mxu0
    %v2814 = vpop.f32.mrb[0].mxu0
    %2815 = vdwg.mxu0
    %2816 = vrot.lane.b32.xlu0 %v2197, 64
    %v2817 = vpop.permute.xlu0 %2816
    %v2819 = vsel %vm570, %v2767, 0
    %v2822 = vsel %vm598, %v2817, 0
    %2824 = vmatprep.subr.bf16.mxu0 0
    %2825 = vmatpush1.bf16.msra.mxu0 %v2822
    %2826 = vmatprep.subr.bf16.mxu0 0
    %2827 = vmatpush1.bf16.msra.mxu0 0
    %2828 = vmatprep.subr.bf16.mxu0 0
    %2829 = vmatpush1.bf16.msra.mxu0 0
    %2830 = vmatprep.subr.bf16.mxu0 0
    %2831 = vmatpush1.bf16.msra.mxu0 0
    %2832 = vmatprep.subr.bf16.mxu0 0
    %2833 = vmatpush1.bf16.msra.mxu0 0
    %2834 = vmatprep.subr.bf16.mxu0 0
    %2835 = vmatpush1.bf16.msra.mxu0 0
    %2836 = vmatprep.subr.bf16.mxu0 0
    %2837 = vmatpush1.bf16.msra.mxu0 0
    %2838 = vmatprep.subr.bf16.mxu0 0
    %2839 = vmatpush1.bf16.msra.mxu0 0
    %2840 = vmatprep.subr.bf16.mxu0 0
    %2841 = vmatpush1.bf16.msra.mxu0 0
    %2842 = vmatprep.subr.bf16.mxu0 0
    %2843 = vmatpush1.bf16.msra.mxu0 0
    %2844 = vmatprep.subr.bf16.mxu0 0
    %2845 = vmatpush1.bf16.msra.mxu0 0
    %2846 = vmatprep.subr.bf16.mxu0 0
    %2847 = vmatpush1.bf16.msra.mxu0 0
    %2848 = vmatprep.subr.bf16.mxu0 0
    %2849 = vmatpush1.bf16.msra.mxu0 0
    %2850 = vmatprep.subr.bf16.mxu0 0
    %2851 = vmatpush1.bf16.msra.mxu0 0
    %2852 = vmatprep.subr.bf16.mxu0 0
    %2853 = vmatpush1.bf16.msra.mxu0 0
    %2854 = vmatprep.subr.bf16.mxu0 0
    %2855 = vmatpush1.bf16.msra.mxu0 0
    %2856 = vmatprep.mubr.bf16.mxu0 0
    %2857 = vmatmul.mubr.bf16.gmra.mrb[0].mxu0 %v2819
    %v2858 = vpop.f32.mrb[0].mxu0
    %v2859 = vadd.f32 0.0, %v2858
    %v2860 = vpop.f32.mrb[0].mxu0
    %v2861 = vpop.f32.mrb[0].mxu0
    %v2862 = vpop.f32.mrb[0].mxu0
    %2863 = vdwg.mxu0
    %2866 = vrot.lane.b32.xlu0 %v2811, 64
    %v2867 = vpop.permute.xlu0 %2866
    %2868 = vrot.lane.b32.xlu0 %v2859, 64
    %v2869 = vpop.permute.xlu0 %2868
    %2872 = vst.msk [vmem:[#allocation2] sm:$0xff] %vm1155, %v2867
    %2873 = vst.msk [vmem:[#allocation2 + $0x8] sm:$0xff] %vm1155, %v2869
    %2874 = vrot.lane.b32.xlu0 %v2192, 32
    %v2875 = vpop.permute.xlu0 %2874
    %2876 = vrot.lane.b32.xlu0 %v2194, 32
    %v2877 = vpop.permute.xlu0 %2876
    %v2879 = vsel %vm477, %v2875, 0
    %v2882 = vsel %vm477, %v2877, 0
    %2884 = vmatprep.subr.bf16.mxu0 0
    %2885 = vmatpush1.bf16.xpose.msra.mxu0 %v2882
    %2886 = vmatprep.subr.bf16.mxu0 0
    %2887 = vmatpush1.bf16.xpose.msra.mxu0 0
    %2888 = vmatprep.subr.bf16.mxu0 0
    %2889 = vmatpush1.bf16.xpose.msra.mxu0 0
    %2890 = vmatprep.subr.bf16.mxu0 0
    %2891 = vmatpush1.bf16.xpose.msra.mxu0 0
    %2892 = vmatprep.subr.bf16.mxu0 0
    %2893 = vmatpush1.bf16.xpose.msra.mxu0 0
    %2894 = vmatprep.subr.bf16.mxu0 0
    %2895 = vmatpush1.bf16.xpose.msra.mxu0 0
    %2896 = vmatprep.subr.bf16.mxu0 0
    %2897 = vmatpush1.bf16.xpose.msra.mxu0 0
    %2898 = vmatprep.subr.bf16.mxu0 0
    %2899 = vmatpush1.bf16.xpose.msra.mxu0 0
    %2900 = vmatprep.subr.bf16.mxu0 0
    %2901 = vmatpush1.bf16.xpose.msra.mxu0 0
    %2902 = vmatprep.subr.bf16.mxu0 0
    %2903 = vmatpush1.bf16.xpose.msra.mxu0 0
    %2904 = vmatprep.subr.bf16.mxu0 0
    %2905 = vmatpush1.bf16.xpose.msra.mxu0 0
    %2906 = vmatprep.subr.bf16.mxu0 0
    %2907 = vmatpush1.bf16.xpose.msra.mxu0 0
    %2908 = vmatprep.subr.bf16.mxu0 0
    %2909 = vmatpush1.bf16.xpose.msra.mxu0 0
    %2910 = vmatprep.subr.bf16.mxu0 0
    %2911 = vmatpush1.bf16.xpose.msra.mxu0 0
    %2912 = vmatprep.subr.bf16.mxu0 0
    %2913 = vmatpush1.bf16.xpose.msra.mxu0 0
    %2914 = vmatprep.subr.bf16.mxu0 0
    %2915 = vmatpush1.bf16.xpose.msra.mxu0 0
    %2916 = vmatprep.mubr.bf16.mxu0 0
    %2917 = vmatmul.mubr.bf16.gmra.mrb[0].mxu0 %v2879
    %v2918 = vpop.f32.mrb[0].mxu0
    %v2919 = vadd.f32 %v172, %v2918
    %v2920 = vpop.f32.mrb[0].mxu0
    %v2921 = vpop.f32.mrb[0].mxu0
    %v2922 = vpop.f32.mrb[0].mxu0
    %2923 = vdwg.mxu0
    %2924 = vrot.lane.b32.xlu0 %v2193, 32
    %v2925 = vpop.permute.xlu0 %2924
    %2926 = vrot.lane.b32.xlu0 %v2195, 32
    %v2927 = vpop.permute.xlu0 %2926
    %v2929 = vsel %vm477, %v2925, 0
    %v2932 = vsel %vm477, %v2927, 0
    %2934 = vmatprep.subr.bf16.mxu0 0
    %2935 = vmatpush1.bf16.xpose.msra.mxu0 %v2932
    %2936 = vmatprep.subr.bf16.mxu0 0
    %2937 = vmatpush1.bf16.xpose.msra.mxu0 0
    %2938 = vmatprep.subr.bf16.mxu0 0
    %2939 = vmatpush1.bf16.xpose.msra.mxu0 0
    %2940 = vmatprep.subr.bf16.mxu0 0
    %2941 = vmatpush1.bf16.xpose.msra.mxu0 0
    %2942 = vmatprep.subr.bf16.mxu0 0
    %2943 = vmatpush1.bf16.xpose.msra.mxu0 0
    %2944 = vmatprep.subr.bf16.mxu0 0
    %2945 = vmatpush1.bf16.xpose.msra.mxu0 0
    %2946 = vmatprep.subr.bf16.mxu0 0
    %2947 = vmatpush1.bf16.xpose.msra.mxu0 0
    %2948 = vmatprep.subr.bf16.mxu0 0
    %2949 = vmatpush1.bf16.xpose.msra.mxu0 0
    %2950 = vmatprep.subr.bf16.mxu0 0
    %2951 = vmatpush1.bf16.xpose.msra.mxu0 0
    %2952 = vmatprep.subr.bf16.mxu0 0
    %2953 = vmatpush1.bf16.xpose.msra.mxu0 0
    %2954 = vmatprep.subr.bf16.mxu0 0
    %2955 = vmatpush1.bf16.xpose.msra.mxu0 0
    %2956 = vmatprep.subr.bf16.mxu0 0
    %2957 = vmatpush1.bf16.xpose.msra.mxu0 0
    %2958 = vmatprep.subr.bf16.mxu0 0
    %2959 = vmatpush1.bf16.xpose.msra.mxu0 0
    %2960 = vmatprep.subr.bf16.mxu0 0
    %2961 = vmatpush1.bf16.xpose.msra.mxu0 0
    %2962 = vmatprep.subr.bf16.mxu0 0
    %2963 = vmatpush1.bf16.xpose.msra.mxu0 0
    %2964 = vmatprep.subr.bf16.mxu0 0
    %2965 = vmatpush1.bf16.xpose.msra.mxu0 0
    %2966 = vmatprep.mubr.bf16.mxu0 0
    %2967 = vmatmul.mubr.bf16.gmra.mrb[0].mxu0 %v2929
    %v2968 = vpop.f32.mrb[0].mxu0
    %v2969 = vadd.f32 %v173, %v2968
    %v2970 = vpop.f32.mrb[0].mxu0
    %v2971 = vpop.f32.mrb[0].mxu0
    %v2972 = vpop.f32.mrb[0].mxu0
    %2973 = vdwg.mxu0
    %v2974 = vsel %vm570, %v2919, -inf
    %2975 = vmax.xlane.f32.xlu0 %v2974
    %v2976 = vpop.xlane.xlu0 %2975
    %v2977 = vsel %vm570, %v2969, -inf
    %2978 = vmax.xlane.f32.xlu0 %v2977
    %v2979 = vpop.xlane.xlu0 %2978
    %v2980 = vsub.f32 %v2919, %v2976
    %v2981 = vsub.f32 %v2969, %v2979
    %v2982 = vmul.f32 %v2980, 1.442695
    %v2983 = vpow.pop %v2982
    %v2984 = vmul.f32 %v2981, 1.442695
    %v2985 = vpow.pop %v2984
    %v2986 = vsel %vm570, %v2983, 0.0
    %2987 = vadd.xlane.f32.xlu0 %v2986
    %v2988 = vpop.xlane.xlu0 %2987
    %v2989 = vsel %vm570, %v2985, 0.0
    %2990 = vadd.xlane.f32.xlu0 %v2989
    %v2991 = vpop.xlane.xlu0 %2990
    %v2992 = vrcp.pop %v2988
    %v2993 = vrcp.pop %v2991
    %v2994 = vmul.f32 %v2983, %v2992
    %v2995 = vmul.f32 %v2985, %v2993
    %v2996 = vpack.c.bf16 %v2994, %v2994
    %v2997 = vpack.c.bf16 %v2995, %v2995
    %2998 = vrot.lane.b32.xlu0 %v2196, 32
    %v2999 = vpop.permute.xlu0 %2998
    %v3001 = vsel %vm570, %v2996, 0
    %v3004 = vsel %vm598, %v2999, 0
    %3006 = vmatprep.subr.bf16.mxu0 0
    %3007 = vmatpush1.bf16.msra.mxu0 %v3004
    %3008 = vmatprep.subr.bf16.mxu0 0
    %3009 = vmatpush1.bf16.msra.mxu0 0
    %3010 = vmatprep.subr.bf16.mxu0 0
    %3011 = vmatpush1.bf16.msra.mxu0 0
    %3012 = vmatprep.subr.bf16.mxu0 0
    %3013 = vmatpush1.bf16.msra.mxu0 0
    %3014 = vmatprep.subr.bf16.mxu0 0
    %3015 = vmatpush1.bf16.msra.mxu0 0
    %3016 = vmatprep.subr.bf16.mxu0 0
    %3017 = vmatpush1.bf16.msra.mxu0 0
    %3018 = vmatprep.subr.bf16.mxu0 0
    %3019 = vmatpush1.bf16.msra.mxu0 0
    %3020 = vmatprep.subr.bf16.mxu0 0
    %3021 = vmatpush1.bf16.msra.mxu0 0
    %3022 = vmatprep.subr.bf16.mxu0 0
    %3023 = vmatpush1.bf16.msra.mxu0 0
    %3024 = vmatprep.subr.bf16.mxu0 0
    %3025 = vmatpush1.bf16.msra.mxu0 0
    %3026 = vmatprep.subr.bf16.mxu0 0
    %3027 = vmatpush1.bf16.msra.mxu0 0
    %3028 = vmatprep.subr.bf16.mxu0 0
    %3029 = vmatpush1.bf16.msra.mxu0 0
    %3030 = vmatprep.subr.bf16.mxu0 0
    %3031 = vmatpush1.bf16.msra.mxu0 0
    %3032 = vmatprep.subr.bf16.mxu0 0
    %3033 = vmatpush1.bf16.msra.mxu0 0
    %3034 = vmatprep.subr.bf16.mxu0 0
    %3035 = vmatpush1.bf16.msra.mxu0 0
    %3036 = vmatprep.subr.bf16.mxu0 0
    %3037 = vmatpush1.bf16.msra.mxu0 0
    %3038 = vmatprep.mubr.bf16.mxu0 0
    %3039 = vmatmul.mubr.bf16.gmra.mrb[0].mxu0 %v3001
    %v3040 = vpop.f32.mrb[0].mxu0
    %v3041 = vadd.f32 0.0, %v3040
    %v3042 = vpop.f32.mrb[0].mxu0
    %v3043 = vpop.f32.mrb[0].mxu0
    %v3044 = vpop.f32.mrb[0].mxu0
    %3045 = vdwg.mxu0
    %3046 = vrot.lane.b32.xlu0 %v2197, 32
    %v3047 = vpop.permute.xlu0 %3046
    %v3049 = vsel %vm570, %v2997, 0
    %v3052 = vsel %vm598, %v3047, 0
    %3054 = vmatprep.subr.bf16.mxu0 0
    %3055 = vmatpush1.bf16.msra.mxu0 %v3052
    %3056 = vmatprep.subr.bf16.mxu0 0
    %3057 = vmatpush1.bf16.msra.mxu0 0
    %3058 = vmatprep.subr.bf16.mxu0 0
    %3059 = vmatpush1.bf16.msra.mxu0 0
    %3060 = vmatprep.subr.bf16.mxu0 0
    %3061 = vmatpush1.bf16.msra.mxu0 0
    %3062 = vmatprep.subr.bf16.mxu0 0
    %3063 = vmatpush1.bf16.msra.mxu0 0
    %3064 = vmatprep.subr.bf16.mxu0 0
    %3065 = vmatpush1.bf16.msra.mxu0 0
    %3066 = vmatprep.subr.bf16.mxu0 0
    %3067 = vmatpush1.bf16.msra.mxu0 0
    %3068 = vmatprep.subr.bf16.mxu0 0
    %3069 = vmatpush1.bf16.msra.mxu0 0
    %3070 = vmatprep.subr.bf16.mxu0 0
    %3071 = vmatpush1.bf16.msra.mxu0 0
    %3072 = vmatprep.subr.bf16.mxu0 0
    %3073 = vmatpush1.bf16.msra.mxu0 0
    %3074 = vmatprep.subr.bf16.mxu0 0
    %3075 = vmatpush1.bf16.msra.mxu0 0
    %3076 = vmatprep.subr.bf16.mxu0 0
    %3077 = vmatpush1.bf16.msra.mxu0 0
    %3078 = vmatprep.subr.bf16.mxu0 0
    %3079 = vmatpush1.bf16.msra.mxu0 0
    %3080 = vmatprep.subr.bf16.mxu0 0
    %3081 = vmatpush1.bf16.msra.mxu0 0
    %3082 = vmatprep.subr.bf16.mxu0 0
    %3083 = vmatpush1.bf16.msra.mxu0 0
    %3084 = vmatprep.subr.bf16.mxu0 0
    %3085 = vmatpush1.bf16.msra.mxu0 0
    %3086 = vmatprep.mubr.bf16.mxu0 0
    %3087 = vmatmul.mubr.bf16.gmra.mrb[0].mxu0 %v3049
    %v3088 = vpop.f32.mrb[0].mxu0
    %v3089 = vadd.f32 0.0, %v3088
    %v3090 = vpop.f32.mrb[0].mxu0
    %v3091 = vpop.f32.mrb[0].mxu0
    %v3092 = vpop.f32.mrb[0].mxu0
    %3093 = vdwg.mxu0
    %3096 = vrot.lane.b32.xlu0 %v3041, 96
    %v3097 = vpop.permute.xlu0 %3096
    %3098 = vrot.lane.b32.xlu0 %v3089, 96
    %v3099 = vpop.permute.xlu0 %3098
    %3102 = vst.msk [vmem:[#allocation2] sm:$0xff] %vm1386, %v3097
    %3103 = vst.msk [vmem:[#allocation2 + $0x8] sm:$0xff] %vm1386, %v3099
    %v3104 = vld [vmem:[#allocation2] sm:$0xff]
    %v3105 = vld [vmem:[#allocation2 + $0x8] sm:$0xff]
    %v3106 = vpack.c.bf16 %v3105, %v3104
    %v3107 = vld [vmem:[#allocation8] sm:$0xf]
    %v3108 = vld [vmem:[#allocation8 + $0x4] sm:$0xf]
    %v3109 = vld [vmem:[#allocation8 + $0x8] sm:$0xf]
    %v3110 = vld [vmem:[#allocation8 + $0xc] sm:$0xf]
    %v3111 = vld [vmem:[#allocation8 + $0x10] sm:$0xf]
    %v3112 = vld [vmem:[#allocation8 + $0x14] sm:$0xf]
    %v3113 = vld [vmem:[#allocation8 + $0x18] sm:$0xf]
    %v3114 = vld [vmem:[#allocation8 + $0x1c] sm:$0xf]
    %v3115 = vld [vmem:[#allocation8 + $0x20] sm:$0xf]
    %v3116 = vld [vmem:[#allocation8 + $0x24] sm:$0xf]
    %v3117 = vld [vmem:[#allocation8 + $0x28] sm:$0xf]
    %v3118 = vld [vmem:[#allocation8 + $0x2c] sm:$0xf]
    %v3119 = vld [vmem:[#allocation8 + $0x30] sm:$0xf]
    %v3120 = vld [vmem:[#allocation8 + $0x34] sm:$0xf]
    %v3121 = vld [vmem:[#allocation8 + $0x38] sm:$0xf]
    %v3122 = vld [vmem:[#allocation8 + $0x3c] sm:$0xf]
    %v3123 = vlaneseq
    %v3124 = vshrl.u32 %v3123, 7
    %v3125 = vsub.s32 1, %v3124
    %v3126 = vrot.slane %v1932, %v3125
    %v3143 = vunpack.c.l.b16 %v3107
    %v3144 = vunpack.c.l.b16 %v3108
    %v3145 = vunpack.c.l.b16 %v3109
    %v3146 = vunpack.c.l.b16 %v3110
    %v3147 = vunpack.c.l.b16 %v3111
    %v3148 = vunpack.c.l.b16 %v3112
    %v3149 = vunpack.c.l.b16 %v3113
    %v3150 = vunpack.c.l.b16 %v3114
    %v3151 = vunpack.c.l.b16 %v3115
    %v3152 = vunpack.c.l.b16 %v3116
    %v3153 = vunpack.c.l.b16 %v3117
    %v3154 = vunpack.c.l.b16 %v3118
    %v3155 = vunpack.c.l.b16 %v3119
    %v3156 = vunpack.c.l.b16 %v3120
    %v3157 = vunpack.c.l.b16 %v3121
    %v3158 = vunpack.c.l.b16 %v3122
    %v3159 = vpack.c.b16 %v3144, %v3143
    %v3160 = vpack.c.b16 %v3146, %v3145
    %v3161 = vpack.c.b16 %v3148, %v3147
    %v3162 = vpack.c.b16 %v3150, %v3149
    %v3163 = vpack.c.b16 %v3152, %v3151
    %v3164 = vpack.c.b16 %v3154, %v3153
    %v3165 = vpack.c.b16 %v3156, %v3155
    %v3166 = vpack.c.b16 %v3158, %v3157
    %3175 = vmatprep.subr.bf16.mxu0 0
    %3176 = vmatpush1.bf16.msra.mxu0 %v3159
    %3177 = vmatprep.subr.bf16.mxu0 0
    %3178 = vmatpush1.bf16.msra.mxu0 %v3160
    %3179 = vmatprep.subr.bf16.mxu0 0
    %3180 = vmatpush1.bf16.msra.mxu0 %v3161
    %3181 = vmatprep.subr.bf16.mxu0 0
    %3182 = vmatpush1.bf16.msra.mxu0 %v3162
    %3183 = vmatprep.subr.bf16.mxu0 0
    %3184 = vmatpush1.bf16.msra.mxu0 %v3163
    %3185 = vmatprep.subr.bf16.mxu0 0
    %3186 = vmatpush1.bf16.msra.mxu0 %v3164
    %3187 = vmatprep.subr.bf16.mxu0 0
    %3188 = vmatpush1.bf16.msra.mxu0 %v3165
    %3189 = vmatprep.subr.bf16.mxu0 0
    %3190 = vmatpush1.bf16.msra.mxu0 %v3166
    %3191 = vmatprep.subr.bf16.mxu0 0
    %3192 = vmatpush1.bf16.msra.mxu0 0
    %3193 = vmatprep.subr.bf16.mxu0 0
    %3194 = vmatpush1.bf16.msra.mxu0 0
    %3195 = vmatprep.subr.bf16.mxu0 0
    %3196 = vmatpush1.bf16.msra.mxu0 0
    %3197 = vmatprep.subr.bf16.mxu0 0
    %3198 = vmatpush1.bf16.msra.mxu0 0
    %3199 = vmatprep.subr.bf16.mxu0 0
    %3200 = vmatpush1.bf16.msra.mxu0 0
    %3201 = vmatprep.subr.bf16.mxu0 0
    %3202 = vmatpush1.bf16.msra.mxu0 0
    %3203 = vmatprep.subr.bf16.mxu0 0
    %3204 = vmatpush1.bf16.msra.mxu0 0
    %3205 = vmatprep.subr.bf16.mxu0 0
    %3206 = vmatpush1.bf16.msra.mxu0 0
    %3207 = vmatprep.mubr.bf16.mxu0 0
    %3208 = vmatmul.mubr.bf16.gmra.mrb[0].mxu0 %v3106
    %v3209 = vpop.f32.mrb[0].mxu0
    %v3210 = vadd.f32 %v3126, %v3209
    %v3211 = vpop.f32.mrb[0].mxu0
    %v3212 = vpop.f32.mrb[0].mxu0
    %v3213 = vadd.f32 %v3126, %v3212
    %v3214 = vpop.f32.mrb[0].mxu0
    %3215 = vdwg.mxu0
    %v3216 = vadd.f32 %v3210, %v1930
    %v3217 = vadd.f32 %v3213, %v1931
    %3218 = vadd.xlane.f32.xlu0 %v3216
    %v3219 = vpop.xlane.xlu0 %3218
    %3220 = vadd.xlane.f32.xlu0 %v3217
    %v3221 = vpop.xlane.xlu0 %3220
    %v3222 = vmul.f32 %v3219, %v180
    %v3223 = vmul.f32 %v3221, %v180
    %v3224 = vsub.f32 %v3216, %v3222
    %v3225 = vsub.f32 %v3217, %v3223
    %v3226 = vmul.f32 %v3224, %v3224
    %v3227 = vmul.f32 %v3225, %v3225
    %3228 = vadd.xlane.f32.xlu0 %v3226
    %v3229 = vpop.xlane.xlu0 %3228
    %3230 = vadd.xlane.f32.xlu0 %v3227
    %v3231 = vpop.xlane.xlu0 %3230
    %v3232 = vmul.f32 %v3229, %v180
    %v3233 = vmul.f32 %v3231, %v180
    %v3234 = vadd.f32 %v3232, 1e-12
    %v3235 = vadd.f32 %v3233, 1e-12
    %v3236 = vrsqrt.pop %v3234
    %v3237 = vrsqrt.pop %v3235
    %v3238 = vmul.f32 %v3224, %v3236
    %v3239 = vmul.f32 %v3225, %v3237
    %v3240 = vlaneseq
    %v3241 = vshrl.u32 %v3240, 7
    %v3242 = vsub.s32 2, %v3241
    %v3243 = vrot.slane %v1932, %v3242
    %v3244 = vmul.f32 %v3238, %v3243
    %v3245 = vmul.f32 %v3239, %v3243
    %v3246 = vlaneseq
    %v3247 = vshrl.u32 %v3246, 7
    %v3248 = vsub.s32 3, %v3247
    %v3249 = vrot.slane %v1932, %v3248
    %v3250 = vadd.f32 %v3244, %v3249
    %v3251 = vadd.f32 %v3245, %v3249
    %v3252 = vpack.c.bf16 %v3251, %v3250
    %v3253 = vld [vmem:[#allocation10] sm:$0xff]
    %v3254 = vld [vmem:[#allocation10 + $0x8] sm:$0xff]
    %v3255 = vld [vmem:[#allocation10 + $0x10] sm:$0xff]
    %v3256 = vld [vmem:[#allocation10 + $0x18] sm:$0xff]
    %v3257 = vld [vmem:[#allocation10 + $0x20] sm:$0xff]
    %v3258 = vld [vmem:[#allocation10 + $0x28] sm:$0xff]
    %v3259 = vld [vmem:[#allocation10 + $0x30] sm:$0xff]
    %v3260 = vld [vmem:[#allocation10 + $0x38] sm:$0xff]
    %v3261 = vld [vmem:[#allocation10 + $0x40] sm:$0xff]
    %v3262 = vld [vmem:[#allocation10 + $0x48] sm:$0xff]
    %v3263 = vld [vmem:[#allocation10 + $0x50] sm:$0xff]
    %v3264 = vld [vmem:[#allocation10 + $0x58] sm:$0xff]
    %v3265 = vld [vmem:[#allocation10 + $0x60] sm:$0xff]
    %v3266 = vld [vmem:[#allocation10 + $0x68] sm:$0xff]
    %v3267 = vld [vmem:[#allocation10 + $0x70] sm:$0xff]
    %v3268 = vld [vmem:[#allocation10 + $0x78] sm:$0xff]
    %v3269 = vlaneseq
    %v3270 = vshrl.u32 %v3269, 7
    %v3271 = vsub.s32 4, %v3270
    %v3272 = vrot.slane %v1932, %v3271
    %v3273 = vlaneseq
    %v3274 = vshrl.u32 %v3273, 7
    %v3275 = vsub.s32 4, %v3274
    %v3276 = vrot.slane %v1933, %v3275
    %v3293 = vunpack.c.l.b16 %v3253
    %v3294 = vunpack.c.h.b16 %v3253
    %v3295 = vunpack.c.l.b16 %v3254
    %v3296 = vunpack.c.h.b16 %v3254
    %v3297 = vunpack.c.l.b16 %v3255
    %v3298 = vunpack.c.h.b16 %v3255
    %v3299 = vunpack.c.l.b16 %v3256
    %v3300 = vunpack.c.h.b16 %v3256
    %v3301 = vunpack.c.l.b16 %v3257
    %v3302 = vunpack.c.h.b16 %v3257
    %v3303 = vunpack.c.l.b16 %v3258
    %v3304 = vunpack.c.h.b16 %v3258
    %v3305 = vunpack.c.l.b16 %v3259
    %v3306 = vunpack.c.h.b16 %v3259
    %v3307 = vunpack.c.l.b16 %v3260
    %v3308 = vunpack.c.h.b16 %v3260
    %v3309 = vunpack.c.l.b16 %v3261
    %v3310 = vunpack.c.h.b16 %v3261
    %v3311 = vunpack.c.l.b16 %v3262
    %v3312 = vunpack.c.h.b16 %v3262
    %v3313 = vunpack.c.l.b16 %v3263
    %v3314 = vunpack.c.h.b16 %v3263
    %v3315 = vunpack.c.l.b16 %v3264
    %v3316 = vunpack.c.h.b16 %v3264
    %v3317 = vunpack.c.l.b16 %v3265
    %v3318 = vunpack.c.h.b16 %v3265
    %v3319 = vunpack.c.l.b16 %v3266
    %v3320 = vunpack.c.h.b16 %v3266
    %v3321 = vunpack.c.l.b16 %v3267
    %v3322 = vunpack.c.h.b16 %v3267
    %v3323 = vunpack.c.l.b16 %v3268
    %v3324 = vunpack.c.h.b16 %v3268
    %v3325 = vpack.c.b16 %v3295, %v3293
    %v3326 = vpack.c.b16 %v3296, %v3294
    %v3327 = vpack.c.b16 %v3299, %v3297
    %v3328 = vpack.c.b16 %v3300, %v3298
    %v3329 = vpack.c.b16 %v3303, %v3301
    %v3330 = vpack.c.b16 %v3304, %v3302
    %v3331 = vpack.c.b16 %v3307, %v3305
    %v3332 = vpack.c.b16 %v3308, %v3306
    %v3333 = vpack.c.b16 %v3311, %v3309
    %v3334 = vpack.c.b16 %v3312, %v3310
    %v3335 = vpack.c.b16 %v3315, %v3313
    %v3336 = vpack.c.b16 %v3316, %v3314
    %v3337 = vpack.c.b16 %v3319, %v3317
    %v3338 = vpack.c.b16 %v3320, %v3318
    %v3339 = vpack.c.b16 %v3323, %v3321
    %v3340 = vpack.c.b16 %v3324, %v3322
    %3357 = vmatprep.subr.bf16.mxu0 %v3326
    %3358 = vmatpush1.bf16.msra.mxu0 %v3325
    %3359 = vmatprep.subr.bf16.mxu0 %v3328
    %3360 = vmatpush1.bf16.msra.mxu0 %v3327
    %3361 = vmatprep.subr.bf16.mxu0 %v3330
    %3362 = vmatpush1.bf16.msra.mxu0 %v3329
    %3363 = vmatprep.subr.bf16.mxu0 %v3332
    %3364 = vmatpush1.bf16.msra.mxu0 %v3331
    %3365 = vmatprep.subr.bf16.mxu0 %v3334
    %3366 = vmatpush1.bf16.msra.mxu0 %v3333
    %3367 = vmatprep.subr.bf16.mxu0 %v3336
    %3368 = vmatpush1.bf16.msra.mxu0 %v3335
    %3369 = vmatprep.subr.bf16.mxu0 %v3338
    %3370 = vmatpush1.bf16.msra.mxu0 %v3337
    %3371 = vmatprep.subr.bf16.mxu0 %v3340
    %3372 = vmatpush1.bf16.msra.mxu0 %v3339
    %3373 = vmatprep.subr.bf16.mxu0 0
    %3374 = vmatpush1.bf16.msra.mxu0 0
    %3375 = vmatprep.subr.bf16.mxu0 0
    %3376 = vmatpush1.bf16.msra.mxu0 0
    %3377 = vmatprep.subr.bf16.mxu0 0
    %3378 = vmatpush1.bf16.msra.mxu0 0
    %3379 = vmatprep.subr.bf16.mxu0 0
    %3380 = vmatpush1.bf16.msra.mxu0 0
    %3381 = vmatprep.subr.bf16.mxu0 0
    %3382 = vmatpush1.bf16.msra.mxu0 0
    %3383 = vmatprep.subr.bf16.mxu0 0
    %3384 = vmatpush1.bf16.msra.mxu0 0
    %3385 = vmatprep.subr.bf16.mxu0 0
    %3386 = vmatpush1.bf16.msra.mxu0 0
    %3387 = vmatprep.subr.bf16.mxu0 0
    %3388 = vmatpush1.bf16.msra.mxu0 0
    %3389 = vmatprep.mubr.bf16.mxu0 0
    %3390 = vmatmul.mubr.bf16.gmra.mrb[0].mxu0 %v3252
    %v3391 = vpop.f32.mrb[0].mxu0
    %v3392 = vadd.f32 %v3272, %v3391
    %v3393 = vpop.f32.mrb[0].mxu0
    %v3394 = vadd.f32 %v3276, %v3393
    %v3395 = vpop.f32.mrb[0].mxu0
    %v3396 = vadd.f32 %v3272, %v3395
    %v3397 = vpop.f32.mrb[0].mxu0
    %v3398 = vadd.f32 %v3276, %v3397
    %3399 = vdwg.mxu0
    %v3400 = vmul.f32 %v3392, 0.5
    %v3401 = vmul.f32 %v3394, 0.5
    %v3402 = vmul.f32 %v3396, 0.5
    %v3403 = vmul.f32 %v3398, 0.5
    %v3404 = vmul.f32 %v3392, 0.044715
    %v3405 = vmul.f32 %v3394, 0.044715
    %v3406 = vmul.f32 %v3396, 0.044715
    %v3407 = vmul.f32 %v3398, 0.044715
    %v3408 = vmul.f32 %v3404, %v3392
    %v3409 = vmul.f32 %v3405, %v3394
    %v3410 = vmul.f32 %v3406, %v3396
    %v3411 = vmul.f32 %v3407, %v3398
    %v3412 = vmul.f32 %v3408, %v3392
    %v3413 = vmul.f32 %v3409, %v3394
    %v3414 = vmul.f32 %v3410, %v3396
    %v3415 = vmul.f32 %v3411, %v3398
    %v3416 = vadd.f32 %v3392, %v3412
    %v3417 = vadd.f32 %v3394, %v3413
    %v3418 = vadd.f32 %v3396, %v3414
    %v3419 = vadd.f32 %v3398, %v3415
    %v3420 = vmul.f32 %v3416, 0.7978846
    %v3421 = vmul.f32 %v3417, 0.7978846
    %v3422 = vmul.f32 %v3418, 0.7978846
    %v3423 = vmul.f32 %v3419, 0.7978846
    %v3424 = vtanh.pop %v3420
    %v3425 = vtanh.pop %v3421
    %v3426 = vtanh.pop %v3422
    %v3427 = vtanh.pop %v3423
    %v3428 = vadd.f32 %v3424, 1.0
    %v3429 = vadd.f32 %v3425, 1.0
    %v3430 = vadd.f32 %v3426, 1.0
    %v3431 = vadd.f32 %v3427, 1.0
    %v3432 = vmul.f32 %v3400, %v3428
    %v3433 = vmul.f32 %v3401, %v3429
    %v3434 = vmul.f32 %v3402, %v3430
    %v3435 = vmul.f32 %v3403, %v3431
    %v3436 = vpack.c.bf16 %v3434, %v3432
    %v3437 = vpack.c.bf16 %v3435, %v3433
    %v3438 = vld [vmem:[#allocation11] sm:$0xf]
    %v3439 = vld [vmem:[#allocation11 + $0x4] sm:$0xf]
    %v3440 = vld [vmem:[#allocation11 + $0x8] sm:$0xf]
    %v3441 = vld [vmem:[#allocation11 + $0xc] sm:$0xf]
    %v3442 = vld [vmem:[#allocation11 + $0x10] sm:$0xf]
    %v3443 = vld [vmem:[#allocation11 + $0x14] sm:$0xf]
    %v3444 = vld [vmem:[#allocation11 + $0x18] sm:$0xf]
    %v3445 = vld [vmem:[#allocation11 + $0x1c] sm:$0xf]
    %v3446 = vld [vmem:[#allocation11 + $0x20] sm:$0xf]
    %v3447 = vld [vmem:[#allocation11 + $0x24] sm:$0xf]
    %v3448 = vld [vmem:[#allocation11 + $0x28] sm:$0xf]
    %v3449 = vld [vmem:[#allocation11 + $0x2c] sm:$0xf]
    %v3450 = vld [vmem:[#allocation11 + $0x30] sm:$0xf]
    %v3451 = vld [vmem:[#allocation11 + $0x34] sm:$0xf]
    %v3452 = vld [vmem:[#allocation11 + $0x38] sm:$0xf]
    %v3453 = vld [vmem:[#allocation11 + $0x3c] sm:$0xf]
    %v3454 = vld [vmem:[#allocation11 + $0x40] sm:$0xf]
    %v3455 = vld [vmem:[#allocation11 + $0x44] sm:$0xf]
    %v3456 = vld [vmem:[#allocation11 + $0x48] sm:$0xf]
    %v3457 = vld [vmem:[#allocation11 + $0x4c] sm:$0xf]
    %v3458 = vld [vmem:[#allocation11 + $0x50] sm:$0xf]
    %v3459 = vld [vmem:[#allocation11 + $0x54] sm:$0xf]
    %v3460 = vld [vmem:[#allocation11 + $0x58] sm:$0xf]
    %v3461 = vld [vmem:[#allocation11 + $0x5c] sm:$0xf]
    %v3462 = vld [vmem:[#allocation11 + $0x60] sm:$0xf]
    %v3463 = vld [vmem:[#allocation11 + $0x64] sm:$0xf]
    %v3464 = vld [vmem:[#allocation11 + $0x68] sm:$0xf]
    %v3465 = vld [vmem:[#allocation11 + $0x6c] sm:$0xf]
    %v3466 = vld [vmem:[#allocation11 + $0x70] sm:$0xf]
    %v3467 = vld [vmem:[#allocation11 + $0x74] sm:$0xf]
    %v3468 = vld [vmem:[#allocation11 + $0x78] sm:$0xf]
    %v3469 = vld [vmem:[#allocation11 + $0x7c] sm:$0xf]
    %v3470 = vlaneseq
    %v3471 = vshrl.u32 %v3470, 7
    %v3472 = vsub.s32 5, %v3471
    %v3473 = vrot.slane %v1932, %v3472
    %v3506 = vunpack.c.l.b16 %v3438
    %v3507 = vunpack.c.l.b16 %v3439
    %v3508 = vunpack.c.l.b16 %v3440
    %v3509 = vunpack.c.l.b16 %v3441
    %v3510 = vunpack.c.l.b16 %v3442
    %v3511 = vunpack.c.l.b16 %v3443
    %v3512 = vunpack.c.l.b16 %v3444
    %v3513 = vunpack.c.l.b16 %v3445
    %v3514 = vunpack.c.l.b16 %v3446
    %v3515 = vunpack.c.l.b16 %v3447
    %v3516 = vunpack.c.l.b16 %v3448
    %v3517 = vunpack.c.l.b16 %v3449
    %v3518 = vunpack.c.l.b16 %v3450
    %v3519 = vunpack.c.l.b16 %v3451
    %v3520 = vunpack.c.l.b16 %v3452
    %v3521 = vunpack.c.l.b16 %v3453
    %v3522 = vunpack.c.l.b16 %v3454
    %v3523 = vunpack.c.l.b16 %v3455
    %v3524 = vunpack.c.l.b16 %v3456
    %v3525 = vunpack.c.l.b16 %v3457
    %v3526 = vunpack.c.l.b16 %v3458
    %v3527 = vunpack.c.l.b16 %v3459
    %v3528 = vunpack.c.l.b16 %v3460
    %v3529 = vunpack.c.l.b16 %v3461
    %v3530 = vunpack.c.l.b16 %v3462
    %v3531 = vunpack.c.l.b16 %v3463
    %v3532 = vunpack.c.l.b16 %v3464
    %v3533 = vunpack.c.l.b16 %v3465
    %v3534 = vunpack.c.l.b16 %v3466
    %v3535 = vunpack.c.l.b16 %v3467
    %v3536 = vunpack.c.l.b16 %v3468
    %v3537 = vunpack.c.l.b16 %v3469
    %v3538 = vpack.c.b16 %v3507, %v3506
    %v3539 = vpack.c.b16 %v3509, %v3508
    %v3540 = vpack.c.b16 %v3511, %v3510
    %v3541 = vpack.c.b16 %v3513, %v3512
    %v3542 = vpack.c.b16 %v3515, %v3514
    %v3543 = vpack.c.b16 %v3517, %v3516
    %v3544 = vpack.c.b16 %v3519, %v3518
    %v3545 = vpack.c.b16 %v3521, %v3520
    %v3546 = vpack.c.b16 %v3523, %v3522
    %v3547 = vpack.c.b16 %v3525, %v3524
    %v3548 = vpack.c.b16 %v3527, %v3526
    %v3549 = vpack.c.b16 %v3529, %v3528
    %v3550 = vpack.c.b16 %v3531, %v3530
    %v3551 = vpack.c.b16 %v3533, %v3532
    %v3552 = vpack.c.b16 %v3535, %v3534
    %v3553 = vpack.c.b16 %v3537, %v3536
    %3570 = vmatprep.subr.bf16.mxu0 0
    %3571 = vmatpush1.bf16.msra.mxu0 %v3538
    %3572 = vmatprep.subr.bf16.mxu0 0
    %3573 = vmatpush1.bf16.msra.mxu0 %v3539
    %3574 = vmatprep.subr.bf16.mxu0 0
    %3575 = vmatpush1.bf16.msra.mxu0 %v3540
    %3576 = vmatprep.subr.bf16.mxu0 0
    %3577 = vmatpush1.bf16.msra.mxu0 %v3541
    %3578 = vmatprep.subr.bf16.mxu0 0
    %3579 = vmatpush1.bf16.msra.mxu0 %v3542
    %3580 = vmatprep.subr.bf16.mxu0 0
    %3581 = vmatpush1.bf16.msra.mxu0 %v3543
    %3582 = vmatprep.subr.bf16.mxu0 0
    %3583 = vmatpush1.bf16.msra.mxu0 %v3544
    %3584 = vmatprep.subr.bf16.mxu0 0
    %3585 = vmatpush1.bf16.msra.mxu0 %v3545
    %3586 = vmatprep.subr.bf16.mxu0 0
    %3587 = vmatpush1.bf16.msra.mxu0 %v3546
    %3588 = vmatprep.subr.bf16.mxu0 0
    %3589 = vmatpush1.bf16.msra.mxu0 %v3547
    %3590 = vmatprep.subr.bf16.mxu0 0
    %3591 = vmatpush1.bf16.msra.mxu0 %v3548
    %3592 = vmatprep.subr.bf16.mxu0 0
    %3593 = vmatpush1.bf16.msra.mxu0 %v3549
    %3594 = vmatprep.subr.bf16.mxu0 0
    %3595 = vmatpush1.bf16.msra.mxu0 %v3550
    %3596 = vmatprep.subr.bf16.mxu0 0
    %3597 = vmatpush1.bf16.msra.mxu0 %v3551
    %3598 = vmatprep.subr.bf16.mxu0 0
    %3599 = vmatpush1.bf16.msra.mxu0 %v3552
    %3600 = vmatprep.subr.bf16.mxu0 0
    %3601 = vmatpush1.bf16.msra.mxu0 %v3553
    %3602 = vmatprep.mubr.bf16.mxu0 %v3437
    %3603 = vmatmul.mubr.bf16.gmra.mrb[0].mxu0 %v3436
    %v3604 = vpop.f32.mrb[0].mxu0
    %v3605 = vadd.f32 %v3473, %v3604
    %v3606 = vpop.f32.mrb[0].mxu0
    %v3607 = vpop.f32.mrb[0].mxu0
    %v3608 = vadd.f32 %v3473, %v3607
    %v3609 = vpop.f32.mrb[0].mxu0
    %3610 = vdwg.mxu0
    %v3611 = vadd.f32 %v3605, %v3250
    %v3612 = vadd.f32 %v3608, %v3251
    %3613 = vadd.xlane.f32.xlu0 %v3611
    %v3614 = vpop.xlane.xlu0 %3613
    %3615 = vadd.xlane.f32.xlu0 %v3612
    %v3616 = vpop.xlane.xlu0 %3615
    %v3617 = vmul.f32 %v3614, %v180
    %v3618 = vmul.f32 %v3616, %v180
    %v3619 = vsub.f32 %v3611, %v3617
    %v3620 = vsub.f32 %v3612, %v3618
    %v3621 = vmul.f32 %v3619, %v3619
    %v3622 = vmul.f32 %v3620, %v3620
    %3623 = vadd.xlane.f32.xlu0 %v3621
    %v3624 = vpop.xlane.xlu0 %3623
    %3625 = vadd.xlane.f32.xlu0 %v3622
    %v3626 = vpop.xlane.xlu0 %3625
    %v3627 = vmul.f32 %v3624, %v180
    %v3628 = vmul.f32 %v3626, %v180
    %v3629 = vadd.f32 %v3627, 1e-12
    %v3630 = vadd.f32 %v3628, 1e-12
    %v3631 = vrsqrt.pop %v3629
    %v3632 = vrsqrt.pop %v3630
    %v3633 = vmul.f32 %v3619, %v3631
    %v3634 = vmul.f32 %v3620, %v3632
    %v3635 = vlaneseq
    %v3636 = vshrl.u32 %v3635, 7
    %v3637 = vsub.s32 6, %v3636
    %v3638 = vrot.slane %v1932, %v3637
    %v3639 = vmul.f32 %v3633, %v3638
    %v3640 = vmul.f32 %v3634, %v3638
    %v3641 = vlaneseq
    %v3642 = vshrl.u32 %v3641, 7
    %v3643 = vsub.s32 7, %v3642
    %v3644 = vrot.slane %v1932, %v3643
    %v3645 = vadd.f32 %v3639, %v3644
    %v3646 = vadd.f32 %v3640, %v3644
    %v3647 = vpack.c.bf16 %v3645, %v3645
    %v3648 = vpack.c.bf16 %v3646, %v3646
    %v3649 = vld [vmem:[#allocation14] sm:$0xf]
    %v3650 = vld [vmem:[#allocation14 + $0x4] sm:$0xf]
    %v3651 = vld [vmem:[#allocation14 + $0x8] sm:$0xf]
    %v3652 = vld [vmem:[#allocation14 + $0xc] sm:$0xf]
    %v3653 = vld [vmem:[#allocation14 + $0x10] sm:$0xf]
    %v3654 = vld [vmem:[#allocation14 + $0x14] sm:$0xf]
    %v3655 = vld [vmem:[#allocation14 + $0x18] sm:$0xf]
    %v3656 = vld [vmem:[#allocation14 + $0x1c] sm:$0xf]
    %v3657 = vld [vmem:[#allocation14 + $0x20] sm:$0xf]
    %v3658 = vld [vmem:[#allocation14 + $0x24] sm:$0xf]
    %v3659 = vld [vmem:[#allocation14 + $0x28] sm:$0xf]
    %v3660 = vld [vmem:[#allocation14 + $0x2c] sm:$0xf]
    %v3661 = vld [vmem:[#allocation14 + $0x30] sm:$0xf]
    %v3662 = vld [vmem:[#allocation14 + $0x34] sm:$0xf]
    %v3663 = vld [vmem:[#allocation14 + $0x38] sm:$0xf]
    %v3664 = vld [vmem:[#allocation14 + $0x3c] sm:$0xf]
    %v3665 = vlaneseq
    %v3666 = vshrl.u32 %v3665, 7
    %v3667 = vsub.s32 2, %v3666
    %v3668 = vrot.slane %v171, %v3667
    %v3671 = vunpack.c.l.b16 %v3647
    %v3672 = vunpack.c.l.b16 %v3648
    %v3673 = vrot.slane %v3672, 7
    %vm3674 = vcmask 1041409
    %v3675 = vsel %vm3674, %v3673, %v3671
    %v3676 = vpack.c.b16 %v3675, %v3675
    %v3694 = vunpack.c.l.b16 %v3649
    %v3695 = vunpack.c.l.b16 %v3650
    %v3696 = vunpack.c.l.b16 %v3651
    %v3697 = vunpack.c.l.b16 %v3652
    %v3698 = vunpack.c.l.b16 %v3653
    %v3699 = vunpack.c.l.b16 %v3654
    %v3700 = vunpack.c.l.b16 %v3655
    %v3701 = vunpack.c.l.b16 %v3656
    %v3702 = vunpack.c.l.b16 %v3657
    %v3703 = vunpack.c.l.b16 %v3658
    %v3704 = vunpack.c.l.b16 %v3659
    %v3705 = vunpack.c.l.b16 %v3660
    %v3706 = vunpack.c.l.b16 %v3661
    %v3707 = vunpack.c.l.b16 %v3662
    %v3708 = vunpack.c.l.b16 %v3663
    %v3709 = vunpack.c.l.b16 %v3664
    %v3710 = vpack.c.b16 %v3695, %v3694
    %v3711 = vpack.c.b16 %v3697, %v3696
    %v3712 = vpack.c.b16 %v3699, %v3698
    %v3713 = vpack.c.b16 %v3701, %v3700
    %v3714 = vpack.c.b16 %v3703, %v3702
    %v3715 = vpack.c.b16 %v3705, %v3704
    %v3716 = vpack.c.b16 %v3707, %v3706
    %v3717 = vpack.c.b16 %v3709, %v3708
    %3726 = vmatprep.subr.bf16.mxu0 0
    %3727 = vmatpush1.bf16.msra.mxu0 %v3710
    %3728 = vmatprep.subr.bf16.mxu0 0
    %3729 = vmatpush1.bf16.msra.mxu0 %v3711
    %3730 = vmatprep.subr.bf16.mxu0 0
    %3731 = vmatpush1.bf16.msra.mxu0 %v3712
    %3732 = vmatprep.subr.bf16.mxu0 0
    %3733 = vmatpush1.bf16.msra.mxu0 %v3713
    %3734 = vmatprep.subr.bf16.mxu0 0
    %3735 = vmatpush1.bf16.msra.mxu0 %v3714
    %3736 = vmatprep.subr.bf16.mxu0 0
    %3737 = vmatpush1.bf16.msra.mxu0 %v3715
    %3738 = vmatprep.subr.bf16.mxu0 0
    %3739 = vmatpush1.bf16.msra.mxu0 %v3716
    %3740 = vmatprep.subr.bf16.mxu0 0
    %3741 = vmatpush1.bf16.msra.mxu0 %v3717
    %3742 = vmatprep.subr.bf16.mxu0 0
    %3743 = vmatpush1.bf16.msra.mxu0 0
    %3744 = vmatprep.subr.bf16.mxu0 0
    %3745 = vmatpush1.bf16.msra.mxu0 0
    %3746 = vmatprep.subr.bf16.mxu0 0
    %3747 = vmatpush1.bf16.msra.mxu0 0
    %3748 = vmatprep.subr.bf16.mxu0 0
    %3749 = vmatpush1.bf16.msra.mxu0 0
    %3750 = vmatprep.subr.bf16.mxu0 0
    %3751 = vmatpush1.bf16.msra.mxu0 0
    %3752 = vmatprep.subr.bf16.mxu0 0
    %3753 = vmatpush1.bf16.msra.mxu0 0
    %3754 = vmatprep.subr.bf16.mxu0 0
    %3755 = vmatpush1.bf16.msra.mxu0 0
    %3756 = vmatprep.subr.bf16.mxu0 0
    %3757 = vmatpush1.bf16.msra.mxu0 0
    %3758 = vmatprep.mubr.bf16.mxu0 0
    %3759 = vmatmul.mubr.bf16.gmra.mrb[0].mxu0 %v3676
    %v3760 = vpop.f32.mrb[0].mxu0
    %v3761 = vadd.f32 %v3668, %v3760
    %v3762 = vpop.f32.mrb[0].mxu0
    %v3763 = vpop.f32.mrb[0].mxu0
    %v3764 = vpop.f32.mrb[0].mxu0
    %3765 = vdwg.mxu0
    %v3766 = vtanh.pop %v3761
    %v3767 = vpack.c.bf16 %v3766, %v3766
    %v3768 = vld [vmem:[#allocation16] sm:$0xf]
    %v3769 = vld [vmem:[#allocation16 + $0x4] sm:$0xf]
    %v3770 = vld [vmem:[#allocation16 + $0x8] sm:$0xf]
    %v3771 = vld [vmem:[#allocation16 + $0xc] sm:$0xf]
    %v3772 = vld [vmem:[#allocation16 + $0x10] sm:$0xf]
    %v3773 = vld [vmem:[#allocation16 + $0x14] sm:$0xf]
    %v3774 = vld [vmem:[#allocation16 + $0x18] sm:$0xf]
    %v3775 = vld [vmem:[#allocation16 + $0x1c] sm:$0xf]
    %v3776 = vld [vmem:[#allocation16 + $0x20] sm:$0xf]
    %v3777 = vld [vmem:[#allocation16 + $0x24] sm:$0xf]
    %v3778 = vld [vmem:[#allocation16 + $0x28] sm:$0xf]
    %v3779 = vld [vmem:[#allocation16 + $0x2c] sm:$0xf]
    %v3780 = vld [vmem:[#allocation16 + $0x30] sm:$0xf]
    %v3781 = vld [vmem:[#allocation16 + $0x34] sm:$0xf]
    %v3782 = vld [vmem:[#allocation16 + $0x38] sm:$0xf]
    %v3783 = vld [vmem:[#allocation16 + $0x3c] sm:$0xf]
    %v3784 = vlaneseq
    %v3785 = vshrl.u32 %v3784, 7
    %v3786 = vsub.s32 3, %v3785
    %v3787 = vrot.slane %v171, %v3786
    %v3804 = vunpack.c.l.b16 %v3768
    %v3805 = vunpack.c.l.b16 %v3769
    %v3806 = vunpack.c.l.b16 %v3770
    %v3807 = vunpack.c.l.b16 %v3771
    %v3808 = vunpack.c.l.b16 %v3772
    %v3809 = vunpack.c.l.b16 %v3773
    %v3810 = vunpack.c.l.b16 %v3774
    %v3811 = vunpack.c.l.b16 %v3775
    %v3812 = vunpack.c.l.b16 %v3776
    %v3813 = vunpack.c.l.b16 %v3777
    %v3814 = vunpack.c.l.b16 %v3778
    %v3815 = vunpack.c.l.b16 %v3779
    %v3816 = vunpack.c.l.b16 %v3780
    %v3817 = vunpack.c.l.b16 %v3781
    %v3818 = vunpack.c.l.b16 %v3782
    %v3819 = vunpack.c.l.b16 %v3783
    %v3820 = vpack.c.b16 %v3805, %v3804
    %v3821 = vpack.c.b16 %v3807, %v3806
    %v3822 = vpack.c.b16 %v3809, %v3808
    %v3823 = vpack.c.b16 %v3811, %v3810
    %v3824 = vpack.c.b16 %v3813, %v3812
    %v3825 = vpack.c.b16 %v3815, %v3814
    %v3826 = vpack.c.b16 %v3817, %v3816
    %v3827 = vpack.c.b16 %v3819, %v3818
    %3836 = vmatprep.subr.bf16.mxu0 0
    %3837 = vmatpush1.bf16.msra.mxu0 %v3820
    %3838 = vmatprep.subr.bf16.mxu0 0
    %3839 = vmatpush1.bf16.msra.mxu0 %v3821
    %3840 = vmatprep.subr.bf16.mxu0 0
    %3841 = vmatpush1.bf16.msra.mxu0 %v3822
    %3842 = vmatprep.subr.bf16.mxu0 0
    %3843 = vmatpush1.bf16.msra.mxu0 %v3823
    %3844 = vmatprep.subr.bf16.mxu0 0
    %3845 = vmatpush1.bf16.msra.mxu0 %v3824
    %3846 = vmatprep.subr.bf16.mxu0 0
    %3847 = vmatpush1.bf16.msra.mxu0 %v3825
    %3848 = vmatprep.subr.bf16.mxu0 0
    %3849 = vmatpush1.bf16.msra.mxu0 %v3826
    %3850 = vmatprep.subr.bf16.mxu0 0
    %3851 = vmatpush1.bf16.msra.mxu0 %v3827
    %3852 = vmatprep.subr.bf16.mxu0 0
    %3853 = vmatpush1.bf16.msra.mxu0 0
    %3854 = vmatprep.subr.bf16.mxu0 0
    %3855 = vmatpush1.bf16.msra.mxu0 0
    %3856 = vmatprep.subr.bf16.mxu0 0
    %3857 = vmatpush1.bf16.msra.mxu0 0
    %3858 = vmatprep.subr.bf16.mxu0 0
    %3859 = vmatpush1.bf16.msra.mxu0 0
    %3860 = vmatprep.subr.bf16.mxu0 0
    %3861 = vmatpush1.bf16.msra.mxu0 0
    %3862 = vmatprep.subr.bf16.mxu0 0
    %3863 = vmatpush1.bf16.msra.mxu0 0
    %3864 = vmatprep.subr.bf16.mxu0 0
    %3865 = vmatpush1.bf16.msra.mxu0 0
    %3866 = vmatprep.subr.bf16.mxu0 0
    %3867 = vmatpush1.bf16.msra.mxu0 0
    %3868 = vmatprep.mubr.bf16.mxu0 0
    %3869 = vmatmul.mubr.bf16.gmra.mrb[0].mxu0 %v3767
    %v3870 = vpop.f32.mrb[0].mxu0
    %v3871 = vadd.f32 %v3787, %v3870
    %v3872 = vpop.f32.mrb[0].mxu0
    %v3873 = vpop.f32.mrb[0].mxu0
    %v3874 = vpop.f32.mrb[0].mxu0
    %3875 = vdwg.mxu0
    %3876 = vst [vmem:[%s15] sm:$0x3] %v3871
    // Predicated region
    $region98: #{bert_forward.1} parent=1 // pred_check
      _
    $region99: #{bert_forward.1} parent=1 // pred_check_branch
      %3878 = sbr.rel (0) target = $region101
    $region100: #{bert_forward.1} parent=1 // pred_region
      _
    $region101: #{bert_forward.1} parent=1 // pred_fallthru
      _
    // Predicated region
    $region102: #{bert_forward.1} parent=1 // pred_check
      _
    $region103: #{bert_forward.1} parent=1 // pred_check_branch
      %3880 = sbr.rel (0) target = $region105
    $region104: #{bert_forward.1} parent=1 // pred_region
      _
    $region105: #{bert_forward.1} parent=1 // pred_fallthru
      _
    %3881 = vsyncpa [#allocation4], 1
    %3882 = vsyncpa [#allocation6], 1
    %3883 = vsyncpa [#allocation9], 1
    %3884 = vsyncpa [#allocation12], 1
    %3885 = vsyncpa [#allocation15], 1

</llo_original>
